<compile_context>
chip_gen: v7x
topology: tpu7x:2x2x1
jax: 0.10.0
libtpu: 0.0.40
codegen_flags: <defaults>
</compile_context>

<pallas_src>
import jax
import jax.numpy as jnp
import numpy as np
from jax.experimental import pallas as pl
from jax.experimental.pallas import tpu as pltpu

# ----------------------- config (small, TPU-tile friendly) -----------------------
VOCAB = 128        # word-embedding vocab (bert-base: 30522)
MAX_POS = 32       # max_sequence_length=32 in the module
D = 128            # embedding width (bert-base: 768)
H = 128            # GRU hidden size (module uses 300 -> would pad to 384)
NUM_CLASS = 8
FC_PAD = 128       # lane-padded classifier output width
B = 2              # batch
S = 16             # sequence length actually fed
LN_EPS = 1e-12     # BERT LayerNorm eps


# --------------------------- fused kernel ---------------------------
def fused_bert_gru_kernel(ids_ref, wtab_ref, posty_ref, g_ref, b_ref,
                          wih_ref, bih_ref, whh_ref, bhh_ref,
                          wfc_ref, bfc_ref, o_ref, gx_ref):
    SB = ids_ref.shape[0]          # S*B rows, time-major
    Bq = o_ref.shape[0]            # batch
    Sq = SB // Bq                  # timesteps

    # --- word embedding gather as one-hot bf16 MXU matmul: (SB, VOCAB) @ (VOCAB, D) ---
    ids = ids_ref[...]                                                  # (SB, 1) int32
    one_hot = (ids == jax.lax.broadcasted_iota(jnp.int32, (SB, VOCAB), 1)
               ).astype(jnp.bfloat16)
    word = jnp.dot(one_hot, wtab_ref[...], preferred_element_type=jnp.float32)

    # --- add precomputed (position + token-type) slab (static positions, no MXU) ---
    x = word + posty_ref[...]                                           # (SB, D) f32

    # --- BERT LayerNorm (f32 elementwise) ---
    mean = jnp.mean(x, axis=-1, keepdims=True)
    var = jnp.mean(jnp.square(x - mean), axis=-1, keepdims=True)
    y = (x - mean) * jax.lax.rsqrt(var + LN_EPS) * g_ref[...] + b_ref[...]
    # TODO(synk): BertEmbeddings applies dropout after LayerNorm; identity in eval mode.

    # --- hoisted input projection for ALL timesteps: gx = y @ W_ih + b_ih -> (SB, 3H) ---
    gx_ref[...] = (jnp.dot(y.astype(jnp.bfloat16), wih_ref[...],
                           preferred_element_type=jnp.float32) + bih_ref[...])

    # --- GRU recurrence: statically unrolled, hidden state in vregs, static gx slices ---
    whh = whh_ref[...]                                                  # (H, 3H) bf16
    bhh = bhh_ref[...]                                                  # (1, 3H) f32
    h = jnp.zeros((Bq, H), jnp.float32)
    for t in range(Sq):                                                 # static unroll
        gx_t = gx_ref[pl.ds(t * Bq, Bq), :]                             # (B, 3H) f32
        gh = jnp.dot(h.astype(jnp.bfloat16), whh,
                     preferred_element_type=jnp.float32) + bhh
        # PyTorch GRU gate order: r | z | n (H=128 -> slices on lane-tile boundaries)
        r = jax.nn.sigmoid(gx_t[:, :H] + gh[:, :H])
        z = jax.nn.sigmoid(gx_t[:, H:2 * H] + gh[:, H:2 * H])
        n = jnp.tanh(gx_t[:, 2 * H:] + r * gh[:, 2 * H:])
        h = (1.0 - z) * n + z * h

    # --- final classifier: lane-padded (H, 128) weight -> single lane-dense store ---
    o_ref[...] = (jnp.dot(h.astype(jnp.bfloat16), wfc_ref[...],
                          preferred_element_type=jnp.float32) + bfc_ref[...])


def bert_emb_gru_forward(token_ids, word_emb_bf16, pos_type_slab, gamma, beta,
                         w_ih_bf16, b_ih, w_hh_bf16, b_hh, w_fc_pad_bf16, b_fc_pad):
    Bb, Ss = token_ids.shape
    SB = Ss * Bb
    # Tiny (B,S) int32 transpose so kernel rows come out time-major; no activation-sized
    # transposes anywhere.
    ids_tm = jnp.transpose(token_ids, (1, 0)).reshape(SB, 1).astype(jnp.int32)
    out = pl.pallas_call(
        fused_bert_gru_kernel,
        out_shape=jax.ShapeDtypeStruct((Bb, FC_PAD), jnp.float32),
        grid=(1,),
        in_specs=[
            pl.BlockSpec((SB, 1), lambda i: (0, 0)),          # token ids (time-major)
            pl.BlockSpec((VOCAB, D), lambda i: (0, 0)),       # word table (bf16)
            pl.BlockSpec((SB, D), lambda i: (0, 0)),          # pos+type slab (f32)
            pl.BlockSpec((1, D), lambda i: (0, 0)),           # LN gamma
            pl.BlockSpec((1, D), lambda i: (0, 0)),           # LN beta
            pl.BlockSpec((D, 3 * H), lambda i: (0, 0)),       # W_ih (bf16)
            pl.BlockSpec((1, 3 * H), lambda i: (0, 0)),       # b_ih
            pl.BlockSpec((H, 3 * H), lambda i: (0, 0)),       # W_hh (bf16)
            pl.BlockSpec((1, 3 * H), lambda i: (0, 0)),       # b_hh
            pl.BlockSpec((H, FC_PAD), lambda i: (0, 0)),      # lane-padded W_fc (bf16)
            pl.BlockSpec((1, FC_PAD), lambda i: (0, 0)),      # lane-padded b_fc
        ],
        out_specs=pl.BlockSpec((Bb, FC_PAD), lambda i: (0, 0)),
        scratch_shapes=[pltpu.VMEM((SB, 3 * H), jnp.float32)],  # resident gx slab
        compiler_params=pltpu.CompilerParams(dimension_semantics=("arbitrary",)),
    )(ids_tm, word_emb_bf16, pos_type_slab, gamma, beta,
      w_ih_bf16, b_ih, w_hh_bf16, b_hh, w_fc_pad_bf16, b_fc_pad)
    return out[:, :NUM_CLASS]


# ----------------------- pure-JAX f32 reference for validation -----------------------
def reference(token_ids, word_emb, pos_emb, type_emb, gamma, beta,
              w_ih, w_hh, b_ih, b_hh, w_fc, b_fc):
    x = (word_emb[token_ids]
         + pos_emb[jnp.arange(token_ids.shape[1])][None, :, :]
         + type_emb[0][None, None, :])
    mean = x.mean(-1, keepdims=True)
    var = jnp.square(x - mean).mean(-1, keepdims=True)
    x = (x - mean) / jnp.sqrt(var + LN_EPS) * gamma[0] + beta[0]
    h = jnp.zeros((token_ids.shape[0], H), jnp.float32)
    for t in range(token_ids.shape[1]):
        xt = x[:, t, :]
        gx = xt @ w_ih + b_ih
        gh = h @ w_hh + b_hh
        r = jax.nn.sigmoid(gx[:, :H] + gh[:, :H])
        z = jax.nn.sigmoid(gx[:, H:2 * H] + gh[:, H:2 * H])
        n = jnp.tanh(gx[:, 2 * H:] + r * gh[:, 2 * H:])
        h = (1.0 - z) * n + z * h
    return h @ w_fc + b_fc


# ----------------------- main -----------------------
if __name__ == "__main__":
    key = jax.random.PRNGKey(0)
    ks = jax.random.split(key, 10)

    # deterministic synthetic parameters (shapes follow BertEmbeddings / GRU / Linear)
    # TODO(synk): real module loads pretrained bert-base-uncased embedding weights.
    word_emb = jax.random.normal(ks[0], (VOCAB, D), jnp.float32) * 0.02
    pos_emb = jax.random.normal(ks[1], (MAX_POS, D), jnp.float32) * 0.02
    type_emb = jax.random.normal(ks[2], (2, D), jnp.float32) * 0.02
    gamma = jnp.ones((1, D), jnp.float32)
    beta = jnp.zeros((1, D), jnp.float32)

    w_ih = jax.random.normal(ks[3], (D, 3 * H), jnp.float32) * 0.05
    w_hh = jax.random.normal(ks[4], (H, 3 * H), jnp.float32) * 0.05
    b_ih = jax.random.normal(ks[5], (1, 3 * H), jnp.float32) * 0.05
    b_hh = jax.random.normal(ks[6], (1, 3 * H), jnp.float32) * 0.05
    w_fc = jax.random.normal(ks[7], (H, NUM_CLASS), jnp.float32) * 0.05
    b_fc = jnp.zeros((1, NUM_CLASS), jnp.float32)

    token_ids = jax.random.randint(ks[8], (B, S), 0, VOCAB, dtype=jnp.int32)

    # Precomputed time-major (S*B, D) position + token-type slab (segment ids all zero);
    # time-major row i has position i // B — compile-time-constant indices, no in-kernel
    # one-hot matmul needed.
    pos_type_slab = (jnp.repeat(pos_emb[:S], B, axis=0) + type_emb[0][None, :]
                     ).astype(jnp.float32)

    # bf16 MXU operands (f32 accumulation in-kernel); biases / LN params stay f32.
    word_emb_bf16 = word_emb.astype(jnp.bfloat16)
    w_ih_bf16 = w_ih.astype(jnp.bfloat16)
    w_hh_bf16 = w_hh.astype(jnp.bfloat16)
    # lane-padded classifier weights for a dense (B, 128) output store
    w_fc_pad_bf16 = (jnp.zeros((H, FC_PAD), jnp.float32).at[:, :NUM_CLASS].set(w_fc)
                     ).astype(jnp.bfloat16)
    b_fc_pad = jnp.zeros((1, FC_PAD), jnp.float32).at[:, :NUM_CLASS].set(b_fc)

    logits = bert_emb_gru_forward(token_ids, word_emb_bf16, pos_type_slab, gamma, beta,
                                  w_ih_bf16, b_ih, w_hh_bf16, b_hh,
                                  w_fc_pad_bf16, b_fc_pad)
    logits = jax.block_until_ready(logits)

    ref = reference(token_ids, word_emb, pos_emb, type_emb, gamma, beta,
                    w_ih, w_hh, b_ih, b_hh, w_fc, b_fc)
    assert logits.shape == (B, NUM_CLASS)
    # bf16 MXU operands set the error floor (~few e-3 abs through the 16-step recurrence).
    assert np.allclose(np.asarray(logits), np.asarray(ref), rtol=2e-2, atol=2e-2), \
        f"mismatch: {np.max(np.abs(np.asarray(logits) - np.asarray(ref)))}"

    print("KERNEL_OK")
</pallas_src>

<mosaic_0001>
module attributes {stable_mosaic.version = 11 : i64} {
  func.func @fused_bert_gru_kernel(%arg0: i32, %arg1: memref<32x1xi32, #tpu.memory_space<vmem>>, %arg2: memref<128x128xbf16, #tpu.memory_space<vmem>>, %arg3: memref<32x128xf32, #tpu.memory_space<vmem>>, %arg4: memref<1x128xf32, #tpu.memory_space<vmem>>, %arg5: memref<1x128xf32, #tpu.memory_space<vmem>>, %arg6: memref<128x384xbf16, #tpu.memory_space<vmem>>, %arg7: memref<1x384xf32, #tpu.memory_space<vmem>>, %arg8: memref<128x384xbf16, #tpu.memory_space<vmem>>, %arg9: memref<1x384xf32, #tpu.memory_space<vmem>>, %arg10: memref<128x128xbf16, #tpu.memory_space<vmem>>, %arg11: memref<1x128xf32, #tpu.memory_space<vmem>>, %arg12: memref<2x128xf32, #tpu.memory_space<vmem>>, %arg13: memref<32x384xf32, #tpu.memory_space<vmem>>) attributes {dimension_semantics = [#tpu.dimension_semantics<arbitrary>], iteration_bounds = array<i64: 1>, scalar_prefetch = 0 : i64, scratch_operands = 1 : i64, tpu.core_type = #tpu.core_type<tc>, window_params = [{pipeline_mode = #tpu.pipeline_mode<synchronous>, transform_indices = @transform_0, window_bounds = array<i64: 32, 1>}, {pipeline_mode = #tpu.pipeline_mode<synchronous>, transform_indices = @transform_1, window_bounds = array<i64: 128, 128>}, {pipeline_mode = #tpu.pipeline_mode<synchronous>, transform_indices = @transform_2, window_bounds = array<i64: 32, 128>}, {pipeline_mode = #tpu.pipeline_mode<synchronous>, transform_indices = @transform_3, window_bounds = array<i64: 1, 128>}, {pipeline_mode = #tpu.pipeline_mode<synchronous>, transform_indices = @transform_4, window_bounds = array<i64: 1, 128>}, {pipeline_mode = #tpu.pipeline_mode<synchronous>, transform_indices = @transform_5, window_bounds = array<i64: 128, 384>}, {pipeline_mode = #tpu.pipeline_mode<synchronous>, transform_indices = @transform_6, window_bounds = array<i64: 1, 384>}, {pipeline_mode = #tpu.pipeline_mode<synchronous>, transform_indices = @transform_7, window_bounds = array<i64: 128, 384>}, {pipeline_mode = #tpu.pipeline_mode<synchronous>, transform_indices = @transform_8, window_bounds = array<i64: 1, 384>}, {pipeline_mode = #tpu.pipeline_mode<synchronous>, transform_indices = @transform_9, window_bounds = array<i64: 128, 128>}, {pipeline_mode = #tpu.pipeline_mode<synchronous>, transform_indices = @transform_10, window_bounds = array<i64: 1, 128>}, {pipeline_mode = #tpu.pipeline_mode<synchronous>, transform_indices = @transform_11, window_bounds = array<i64: 2, 128>}]} {
    %c0 = arith.constant 0 : index
    %c0_0 = arith.constant 0 : index
    %0 = vector.load %arg1[%c0, %c0_0] : memref<32x1xi32, #tpu.memory_space<vmem>>, vector<32x1xi32>
    %1 = tpu.iota {dimensions = array<i32: 1>} : vector<32x128xi32>
    %2 = vector.broadcast %0 : vector<32x1xi32> to vector<32x128xi32>
    %3 = arith.cmpi eq, %2, %1 : vector<32x128xi32>
    %4 = arith.extui %3 : vector<32x128xi1> to vector<32x128xi32>
    %5 = arith.sitofp %4 : vector<32x128xi32> to vector<32x128xf32>
    %6 = arith.truncf %5 : vector<32x128xf32> to vector<32x128xbf16>
    %c0_1 = arith.constant 0 : index
    %c0_2 = arith.constant 0 : index
    %7 = vector.load %arg2[%c0_1, %c0_2] : memref<128x128xbf16, #tpu.memory_space<vmem>>, vector<128x128xbf16>
    %cst = arith.constant dense<0.000000e+00> : vector<32x128xf32>
    %8 = tpu.matmul %6, %7, %cst {dimension_numbers = #tpu.dot_dimension_numbers<[1], [0], [0], [1], [0, 0, 1, 1], [], []>} : vector<32x128xbf16>, vector<128x128xbf16>, vector<32x128xf32> -> vector<32x128xf32>
    %c0_3 = arith.constant 0 : index
    %c0_4 = arith.constant 0 : index
    %9 = vector.load %arg3[%c0_3, %c0_4] : memref<32x128xf32, #tpu.memory_space<vmem>>, vector<32x128xf32>
    %10 = arith.addf %8, %9 : vector<32x128xf32>
    %cst_5 = arith.constant dense<0.000000e+00> : vector<32xf32>
    %11 = vector.multi_reduction <add>, %10, %cst_5 [1] : vector<32x128xf32> to vector<32xf32>
    %12 = vector.shape_cast %11 : vector<32xf32> to vector<32x1xf32>
    %cst_6 = arith.constant 1.280000e+02 : f32
    %13 = vector.broadcast %cst_6 : f32 to vector<32x1xf32>
    %14 = arith.divf %12, %13 : vector<32x1xf32>
    %15 = vector.broadcast %14 : vector<32x1xf32> to vector<32x128xf32>
    %16 = arith.subf %10, %15 : vector<32x128xf32>
    %17 = arith.mulf %16, %16 : vector<32x128xf32>
    %cst_7 = arith.constant dense<0.000000e+00> : vector<32xf32>
    %18 = vector.multi_reduction <add>, %17, %cst_7 [1] : vector<32x128xf32> to vector<32xf32>
    %19 = vector.shape_cast %18 : vector<32xf32> to vector<32x1xf32>
    %cst_8 = arith.constant 1.280000e+02 : f32
    %20 = vector.broadcast %cst_8 : f32 to vector<32x1xf32>
    %21 = arith.divf %19, %20 : vector<32x1xf32>
    %22 = vector.broadcast %14 : vector<32x1xf32> to vector<32x128xf32>
    %23 = arith.subf %10, %22 : vector<32x128xf32>
    %cst_9 = arith.constant 9.99999996E-13 : f32
    %24 = vector.broadcast %cst_9 : f32 to vector<32x1xf32>
    %25 = arith.addf %21, %24 : vector<32x1xf32>
    %26 = math.rsqrt %25 : vector<32x1xf32>
    %27 = vector.broadcast %26 : vector<32x1xf32> to vector<32x128xf32>
    %28 = arith.mulf %23, %27 : vector<32x128xf32>
    %c0_10 = arith.constant 0 : index
    %c0_11 = arith.constant 0 : index
    %29 = vector.load %arg4[%c0_10, %c0_11] : memref<1x128xf32, #tpu.memory_space<vmem>>, vector<1x128xf32>
    %30 = vector.broadcast %29 : vector<1x128xf32> to vector<32x128xf32>
    %31 = arith.mulf %28, %30 : vector<32x128xf32>
    %c0_12 = arith.constant 0 : index
    %c0_13 = arith.constant 0 : index
    %32 = vector.load %arg5[%c0_12, %c0_13] : memref<1x128xf32, #tpu.memory_space<vmem>>, vector<1x128xf32>
    %33 = vector.broadcast %32 : vector<1x128xf32> to vector<32x128xf32>
    %34 = arith.addf %31, %33 : vector<32x128xf32>
    %35 = arith.truncf %34 : vector<32x128xf32> to vector<32x128xbf16>
    %c0_14 = arith.constant 0 : index
    %c0_15 = arith.constant 0 : index
    %36 = vector.load %arg6[%c0_14, %c0_15] : memref<128x384xbf16, #tpu.memory_space<vmem>>, vector<128x384xbf16>
    %cst_16 = arith.constant dense<0.000000e+00> : vector<32x384xf32>
    %37 = tpu.matmul %35, %36, %cst_16 {dimension_numbers = #tpu.dot_dimension_numbers<[1], [0], [0], [1], [0, 0, 1, 1], [], []>} : vector<32x128xbf16>, vector<128x384xbf16>, vector<32x384xf32> -> vector<32x384xf32>
    %c0_17 = arith.constant 0 : index
    %c0_18 = arith.constant 0 : index
    %38 = vector.load %arg7[%c0_17, %c0_18] : memref<1x384xf32, #tpu.memory_space<vmem>>, vector<1x384xf32>
    %39 = vector.broadcast %38 : vector<1x384xf32> to vector<32x384xf32>
    %40 = arith.addf %37, %39 : vector<32x384xf32>
    %c0_19 = arith.constant 0 : index
    %c0_20 = arith.constant 0 : index
    %41 = vector.load %arg13[%c0_19, %c0_20] : memref<32x384xf32, #tpu.memory_space<vmem>>, vector<32x384xf32>
    tpu.vector_store %arg13[%c0_19, %c0_20], %40 {strides = array<i32>} : memref<32x384xf32, #tpu.memory_space<vmem>>, vector<32x384xf32>,
    %c0_21 = arith.constant 0 : index
    %c0_22 = arith.constant 0 : index
    %42 = vector.load %arg8[%c0_21, %c0_22] : memref<128x384xbf16, #tpu.memory_space<vmem>>, vector<128x384xbf16>
    %c0_23 = arith.constant 0 : index
    %c0_24 = arith.constant 0 : index
    %43 = vector.load %arg9[%c0_23, %c0_24] : memref<1x384xf32, #tpu.memory_space<vmem>>, vector<1x384xf32>
    %cst_25 = arith.constant 0.000000e+00 : f32
    %44 = vector.broadcast %cst_25 : f32 to vector<2x128xf32>
    %c0_26 = arith.constant 0 : index
    %c0_27 = arith.constant 0 : index
    %45 = vector.load %arg13[%c0_26, %c0_27] : memref<32x384xf32, #tpu.memory_space<vmem>>, vector<2x384xf32>
    %46 = arith.truncf %44 : vector<2x128xf32> to vector<2x128xbf16>
    %cst_28 = arith.constant dense<0.000000e+00> : vector<2x384xf32>
    %47 = tpu.matmul %46, %42, %cst_28 {dimension_numbers = #tpu.dot_dimension_numbers<[1], [0], [0], [1], [0, 0, 1, 1], [], []>} : vector<2x128xbf16>, vector<128x384xbf16>, vector<2x384xf32> -> vector<2x384xf32>
    %48 = vector.broadcast %43 : vector<1x384xf32> to vector<2x384xf32>
    %49 = arith.addf %47, %48 : vector<2x384xf32>
    %50 = vector.extract_strided_slice %45 {offsets = [0, 0], sizes = [2, 128], strides = [1, 1]} : vector<2x384xf32> to vector<2x128xf32>
    %51 = vector.extract_strided_slice %49 {offsets = [0, 0], sizes = [2, 128], strides = [1, 1]} : vector<2x384xf32> to vector<2x128xf32>
    %52 = arith.addf %50, %51 : vector<2x128xf32>
    %53 = arith.negf %52 : vector<2x128xf32>
    %54 = math.exp %53 : vector<2x128xf32>
    %cst_29 = arith.constant 1.000000e+00 : f32
    %55 = vector.broadcast %cst_29 : f32 to vector<2x128xf32>
    %56 = arith.addf %55, %54 : vector<2x128xf32>
    %57 = arith.divf %55, %56 : vector<2x128xf32>
    %58 = vector.extract_strided_slice %45 {offsets = [0, 128], sizes = [2, 128], strides = [1, 1]} : vector<2x384xf32> to vector<2x128xf32>
    %59 = vector.extract_strided_slice %49 {offsets = [0, 128], sizes = [2, 128], strides = [1, 1]} : vector<2x384xf32> to vector<2x128xf32>
    %60 = arith.addf %58, %59 : vector<2x128xf32>
    %61 = arith.negf %60 : vector<2x128xf32>
    %62 = math.exp %61 : vector<2x128xf32>
    %cst_30 = arith.constant 1.000000e+00 : f32
    %63 = vector.broadcast %cst_30 : f32 to vector<2x128xf32>
    %64 = arith.addf %63, %62 : vector<2x128xf32>
    %65 = arith.divf %63, %64 : vector<2x128xf32>
    %66 = vector.extract_strided_slice %45 {offsets = [0, 256], sizes = [2, 128], strides = [1, 1]} : vector<2x384xf32> to vector<2x128xf32>
    %67 = vector.extract_strided_slice %49 {offsets = [0, 256], sizes = [2, 128], strides = [1, 1]} : vector<2x384xf32> to vector<2x128xf32>
    %68 = arith.mulf %57, %67 : vector<2x128xf32>
    %69 = arith.addf %66, %68 : vector<2x128xf32>
    %70 = math.tanh %69 : vector<2x128xf32>
    %cst_31 = arith.constant 1.000000e+00 : f32
    %71 = vector.broadcast %cst_31 : f32 to vector<2x128xf32>
    %72 = arith.subf %71, %65 : vector<2x128xf32>
    %73 = arith.mulf %72, %70 : vector<2x128xf32>
    %74 = arith.mulf %65, %44 : vector<2x128xf32>
    %75 = arith.addf %73, %74 : vector<2x128xf32>
    %c2 = arith.constant 2 : index
    %c0_32 = arith.constant 0 : index
    %76 = vector.load %arg13[%c2, %c0_32] : memref<32x384xf32, #tpu.memory_space<vmem>>, vector<2x384xf32>
    %77 = arith.truncf %75 : vector<2x128xf32> to vector<2x128xbf16>
    %cst_33 = arith.constant dense<0.000000e+00> : vector<2x384xf32>
    %78 = tpu.matmul %77, %42, %cst_33 {dimension_numbers = #tpu.dot_dimension_numbers<[1], [0], [0], [1], [0, 0, 1, 1], [], []>} : vector<2x128xbf16>, vector<128x384xbf16>, vector<2x384xf32> -> vector<2x384xf32>
    %79 = vector.broadcast %43 : vector<1x384xf32> to vector<2x384xf32>
    %80 = arith.addf %78, %79 : vector<2x384xf32>
    %81 = vector.extract_strided_slice %76 {offsets = [0, 0], sizes = [2, 128], strides = [1, 1]} : vector<2x384xf32> to vector<2x128xf32>
    %82 = vector.extract_strided_slice %80 {offsets = [0, 0], sizes = [2, 128], strides = [1, 1]} : vector<2x384xf32> to vector<2x128xf32>
    %83 = arith.addf %81, %82 : vector<2x128xf32>
    %84 = arith.negf %83 : vector<2x128xf32>
    %85 = math.exp %84 : vector<2x128xf32>
    %cst_34 = arith.constant 1.000000e+00 : f32
    %86 = vector.broadcast %cst_34 : f32 to vector<2x128xf32>
    %87 = arith.addf %86, %85 : vector<2x128xf32>
    %88 = arith.divf %86, %87 : vector<2x128xf32>
    %89 = vector.extract_strided_slice %76 {offsets = [0, 128], sizes = [2, 128], strides = [1, 1]} : vector<2x384xf32> to vector<2x128xf32>
    %90 = vector.extract_strided_slice %80 {offsets = [0, 128], sizes = [2, 128], strides = [1, 1]} : vector<2x384xf32> to vector<2x128xf32>
    %91 = arith.addf %89, %90 : vector<2x128xf32>
    %92 = arith.negf %91 : vector<2x128xf32>
    %93 = math.exp %92 : vector<2x128xf32>
    %cst_35 = arith.constant 1.000000e+00 : f32
    %94 = vector.broadcast %cst_35 : f32 to vector<2x128xf32>
    %95 = arith.addf %94, %93 : vector<2x128xf32>
    %96 = arith.divf %94, %95 : vector<2x128xf32>
    %97 = vector.extract_strided_slice %76 {offsets = [0, 256], sizes = [2, 128], strides = [1, 1]} : vector<2x384xf32> to vector<2x128xf32>
    %98 = vector.extract_strided_slice %80 {offsets = [0, 256], sizes = [2, 128], strides = [1, 1]} : vector<2x384xf32> to vector<2x128xf32>
    %99 = arith.mulf %88, %98 : vector<2x128xf32>
    %100 = arith.addf %97, %99 : vector<2x128xf32>
    %101 = math.tanh %100 : vector<2x128xf32>
    %cst_36 = arith.constant 1.000000e+00 : f32
    %102 = vector.broadcast %cst_36 : f32 to vector<2x128xf32>
    %103 = arith.subf %102, %96 : vector<2x128xf32>
    %104 = arith.mulf %103, %101 : vector<2x128xf32>
    %105 = arith.mulf %96, %75 : vector<2x128xf32>
    %106 = arith.addf %104, %105 : vector<2x128xf32>
    %c4 = arith.constant 4 : index
    %c0_37 = arith.constant 0 : index
    %107 = vector.load %arg13[%c4, %c0_37] : memref<32x384xf32, #tpu.memory_space<vmem>>, vector<2x384xf32>
    %108 = arith.truncf %106 : vector<2x128xf32> to vector<2x128xbf16>
    %cst_38 = arith.constant dense<0.000000e+00> : vector<2x384xf32>
    %109 = tpu.matmul %108, %42, %cst_38 {dimension_numbers = #tpu.dot_dimension_numbers<[1], [0], [0], [1], [0, 0, 1, 1], [], []>} : vector<2x128xbf16>, vector<128x384xbf16>, vector<2x384xf32> -> vector<2x384xf32>
    %110 = vector.broadcast %43 : vector<1x384xf32> to vector<2x384xf32>
    %111 = arith.addf %109, %110 : vector<2x384xf32>
    %112 = vector.extract_strided_slice %107 {offsets = [0, 0], sizes = [2, 128], strides = [1, 1]} : vector<2x384xf32> to vector<2x128xf32>
    %113 = vector.extract_strided_slice %111 {offsets = [0, 0], sizes = [2, 128], strides = [1, 1]} : vector<2x384xf32> to vector<2x128xf32>
    %114 = arith.addf %112, %113 : vector<2x128xf32>
    %115 = arith.negf %114 : vector<2x128xf32>
    %116 = math.exp %115 : vector<2x128xf32>
    %cst_39 = arith.constant 1.000000e+00 : f32
    %117 = vector.broadcast %cst_39 : f32 to vector<2x128xf32>
    %118 = arith.addf %117, %116 : vector<2x128xf32>
    %119 = arith.divf %117, %118 : vector<2x128xf32>
    %120 = vector.extract_strided_slice %107 {offsets = [0, 128], sizes = [2, 128], strides = [1, 1]} : vector<2x384xf32> to vector<2x128xf32>
    %121 = vector.extract_strided_slice %111 {offsets = [0, 128], sizes = [2, 128], strides = [1, 1]} : vector<2x384xf32> to vector<2x128xf32>
    %122 = arith.addf %120, %121 : vector<2x128xf32>
    %123 = arith.negf %122 : vector<2x128xf32>
    %124 = math.exp %123 : vector<2x128xf32>
    %cst_40 = arith.constant 1.000000e+00 : f32
    %125 = vector.broadcast %cst_40 : f32 to vector<2x128xf32>
    %126 = arith.addf %125, %124 : vector<2x128xf32>
    %127 = arith.divf %125, %126 : vector<2x128xf32>
    %128 = vector.extract_strided_slice %107 {offsets = [0, 256], sizes = [2, 128], strides = [1, 1]} : vector<2x384xf32> to vector<2x128xf32>
    %129 = vector.extract_strided_slice %111 {offsets = [0, 256], sizes = [2, 128], strides = [1, 1]} : vector<2x384xf32> to vector<2x128xf32>
    %130 = arith.mulf %119, %129 : vector<2x128xf32>
    %131 = arith.addf %128, %130 : vector<2x128xf32>
    %132 = math.tanh %131 : vector<2x128xf32>
    %cst_41 = arith.constant 1.000000e+00 : f32
    %133 = vector.broadcast %cst_41 : f32 to vector<2x128xf32>
    %134 = arith.subf %133, %127 : vector<2x128xf32>
    %135 = arith.mulf %134, %132 : vector<2x128xf32>
    %136 = arith.mulf %127, %106 : vector<2x128xf32>
    %137 = arith.addf %135, %136 : vector<2x128xf32>
    %c6 = arith.constant 6 : index
    %c0_42 = arith.constant 0 : index
    %138 = vector.load %arg13[%c6, %c0_42] : memref<32x384xf32, #tpu.memory_space<vmem>>, vector<2x384xf32>
    %139 = arith.truncf %137 : vector<2x128xf32> to vector<2x128xbf16>
    %cst_43 = arith.constant dense<0.000000e+00> : vector<2x384xf32>
    %140 = tpu.matmul %139, %42, %cst_43 {dimension_numbers = #tpu.dot_dimension_numbers<[1], [0], [0], [1], [0, 0, 1, 1], [], []>} : vector<2x128xbf16>, vector<128x384xbf16>, vector<2x384xf32> -> vector<2x384xf32>
    %141 = vector.broadcast %43 : vector<1x384xf32> to vector<2x384xf32>
    %142 = arith.addf %140, %141 : vector<2x384xf32>
    %143 = vector.extract_strided_slice %138 {offsets = [0, 0], sizes = [2, 128], strides = [1, 1]} : vector<2x384xf32> to vector<2x128xf32>
    %144 = vector.extract_strided_slice %142 {offsets = [0, 0], sizes = [2, 128], strides = [1, 1]} : vector<2x384xf32> to vector<2x128xf32>
    %145 = arith.addf %143, %144 : vector<2x128xf32>
    %146 = arith.negf %145 : vector<2x128xf32>
    %147 = math.exp %146 : vector<2x128xf32>
    %cst_44 = arith.constant 1.000000e+00 : f32
    %148 = vector.broadcast %cst_44 : f32 to vector<2x128xf32>
    %149 = arith.addf %148, %147 : vector<2x128xf32>
    %150 = arith.divf %148, %149 : vector<2x128xf32>
    %151 = vector.extract_strided_slice %138 {offsets = [0, 128], sizes = [2, 128], strides = [1, 1]} : vector<2x384xf32> to vector<2x128xf32>
    %152 = vector.extract_strided_slice %142 {offsets = [0, 128], sizes = [2, 128], strides = [1, 1]} : vector<2x384xf32> to vector<2x128xf32>
    %153 = arith.addf %151, %152 : vector<2x128xf32>
    %154 = arith.negf %153 : vector<2x128xf32>
    %155 = math.exp %154 : vector<2x128xf32>
    %cst_45 = arith.constant 1.000000e+00 : f32
    %156 = vector.broadcast %cst_45 : f32 to vector<2x128xf32>
    %157 = arith.addf %156, %155 : vector<2x128xf32>
    %158 = arith.divf %156, %157 : vector<2x128xf32>
    %159 = vector.extract_strided_slice %138 {offsets = [0, 256], sizes = [2, 128], strides = [1, 1]} : vector<2x384xf32> to vector<2x128xf32>
    %160 = vector.extract_strided_slice %142 {offsets = [0, 256], sizes = [2, 128], strides = [1, 1]} : vector<2x384xf32> to vector<2x128xf32>
    %161 = arith.mulf %150, %160 : vector<2x128xf32>
    %162 = arith.addf %159, %161 : vector<2x128xf32>
    %163 = math.tanh %162 : vector<2x128xf32>
    %cst_46 = arith.constant 1.000000e+00 : f32
    %164 = vector.broadcast %cst_46 : f32 to vector<2x128xf32>
    %165 = arith.subf %164, %158 : vector<2x128xf32>
    %166 = arith.mulf %165, %163 : vector<2x128xf32>
    %167 = arith.mulf %158, %137 : vector<2x128xf32>
    %168 = arith.addf %166, %167 : vector<2x128xf32>
    %c8 = arith.constant 8 : index
    %c0_47 = arith.constant 0 : index
    %169 = vector.load %arg13[%c8, %c0_47] : memref<32x384xf32, #tpu.memory_space<vmem>>, vector<2x384xf32>
    %170 = arith.truncf %168 : vector<2x128xf32> to vector<2x128xbf16>
    %cst_48 = arith.constant dense<0.000000e+00> : vector<2x384xf32>
    %171 = tpu.matmul %170, %42, %cst_48 {dimension_numbers = #tpu.dot_dimension_numbers<[1], [0], [0], [1], [0, 0, 1, 1], [], []>} : vector<2x128xbf16>, vector<128x384xbf16>, vector<2x384xf32> -> vector<2x384xf32>
    %172 = vector.broadcast %43 : vector<1x384xf32> to vector<2x384xf32>
    %173 = arith.addf %171, %172 : vector<2x384xf32>
    %174 = vector.extract_strided_slice %169 {offsets = [0, 0], sizes = [2, 128], strides = [1, 1]} : vector<2x384xf32> to vector<2x128xf32>
    %175 = vector.extract_strided_slice %173 {offsets = [0, 0], sizes = [2, 128], strides = [1, 1]} : vector<2x384xf32> to vector<2x128xf32>
    %176 = arith.addf %174, %175 : vector<2x128xf32>
    %177 = arith.negf %176 : vector<2x128xf32>
    %178 = math.exp %177 : vector<2x128xf32>
    %cst_49 = arith.constant 1.000000e+00 : f32
    %179 = vector.broadcast %cst_49 : f32 to vector<2x128xf32>
    %180 = arith.addf %179, %178 : vector<2x128xf32>
    %181 = arith.divf %179, %180 : vector<2x128xf32>
    %182 = vector.extract_strided_slice %169 {offsets = [0, 128], sizes = [2, 128], strides = [1, 1]} : vector<2x384xf32> to vector<2x128xf32>
    %183 = vector.extract_strided_slice %173 {offsets = [0, 128], sizes = [2, 128], strides = [1, 1]} : vector<2x384xf32> to vector<2x128xf32>
    %184 = arith.addf %182, %183 : vector<2x128xf32>
    %185 = arith.negf %184 : vector<2x128xf32>
    %186 = math.exp %185 : vector<2x128xf32>
    %cst_50 = arith.constant 1.000000e+00 : f32
    %187 = vector.broadcast %cst_50 : f32 to vector<2x128xf32>
    %188 = arith.addf %187, %186 : vector<2x128xf32>
    %189 = arith.divf %187, %188 : vector<2x128xf32>
    %190 = vector.extract_strided_slice %169 {offsets = [0, 256], sizes = [2, 128], strides = [1, 1]} : vector<2x384xf32> to vector<2x128xf32>
    %191 = vector.extract_strided_slice %173 {offsets = [0, 256], sizes = [2, 128], strides = [1, 1]} : vector<2x384xf32> to vector<2x128xf32>
    %192 = arith.mulf %181, %191 : vector<2x128xf32>
    %193 = arith.addf %190, %192 : vector<2x128xf32>
    %194 = math.tanh %193 : vector<2x128xf32>
    %cst_51 = arith.constant 1.000000e+00 : f32
    %195 = vector.broadcast %cst_51 : f32 to vector<2x128xf32>
    %196 = arith.subf %195, %189 : vector<2x128xf32>
    %197 = arith.mulf %196, %194 : vector<2x128xf32>
    %198 = arith.mulf %189, %168 : vector<2x128xf32>
    %199 = arith.addf %197, %198 : vector<2x128xf32>
    %c10 = arith.constant 10 : index
    %c0_52 = arith.constant 0 : index
    %200 = vector.load %arg13[%c10, %c0_52] : memref<32x384xf32, #tpu.memory_space<vmem>>, vector<2x384xf32>
    %201 = arith.truncf %199 : vector<2x128xf32> to vector<2x128xbf16>
    %cst_53 = arith.constant dense<0.000000e+00> : vector<2x384xf32>
    %202 = tpu.matmul %201, %42, %cst_53 {dimension_numbers = #tpu.dot_dimension_numbers<[1], [0], [0], [1], [0, 0, 1, 1], [], []>} : vector<2x128xbf16>, vector<128x384xbf16>, vector<2x384xf32> -> vector<2x384xf32>
    %203 = vector.broadcast %43 : vector<1x384xf32> to vector<2x384xf32>
    %204 = arith.addf %202, %203 : vector<2x384xf32>
    %205 = vector.extract_strided_slice %200 {offsets = [0, 0], sizes = [2, 128], strides = [1, 1]} : vector<2x384xf32> to vector<2x128xf32>
    %206 = vector.extract_strided_slice %204 {offsets = [0, 0], sizes = [2, 128], strides = [1, 1]} : vector<2x384xf32> to vector<2x128xf32>
    %207 = arith.addf %205, %206 : vector<2x128xf32>
    %208 = arith.negf %207 : vector<2x128xf32>
    %209 = math.exp %208 : vector<2x128xf32>
    %cst_54 = arith.constant 1.000000e+00 : f32
    %210 = vector.broadcast %cst_54 : f32 to vector<2x128xf32>
    %211 = arith.addf %210, %209 : vector<2x128xf32>
    %212 = arith.divf %210, %211 : vector<2x128xf32>
    %213 = vector.extract_strided_slice %200 {offsets = [0, 128], sizes = [2, 128], strides = [1, 1]} : vector<2x384xf32> to vector<2x128xf32>
    %214 = vector.extract_strided_slice %204 {offsets = [0, 128], sizes = [2, 128], strides = [1, 1]} : vector<2x384xf32> to vector<2x128xf32>
    %215 = arith.addf %213, %214 : vector<2x128xf32>
    %216 = arith.negf %215 : vector<2x128xf32>
    %217 = math.exp %216 : vector<2x128xf32>
    %cst_55 = arith.constant 1.000000e+00 : f32
    %218 = vector.broadcast %cst_55 : f32 to vector<2x128xf32>
    %219 = arith.addf %218, %217 : vector<2x128xf32>
    %220 = arith.divf %218, %219 : vector<2x128xf32>
    %221 = vector.extract_strided_slice %200 {offsets = [0, 256], sizes = [2, 128], strides = [1, 1]} : vector<2x384xf32> to vector<2x128xf32>
    %222 = vector.extract_strided_slice %204 {offsets = [0, 256], sizes = [2, 128], strides = [1, 1]} : vector<2x384xf32> to vector<2x128xf32>
    %223 = arith.mulf %212, %222 : vector<2x128xf32>
    %224 = arith.addf %221, %223 : vector<2x128xf32>
    %225 = math.tanh %224 : vector<2x128xf32>
    %cst_56 = arith.constant 1.000000e+00 : f32
    %226 = vector.broadcast %cst_56 : f32 to vector<2x128xf32>
    %227 = arith.subf %226, %220 : vector<2x128xf32>
    %228 = arith.mulf %227, %225 : vector<2x128xf32>
    %229 = arith.mulf %220, %199 : vector<2x128xf32>
    %230 = arith.addf %228, %229 : vector<2x128xf32>
    %c12 = arith.constant 12 : index
    %c0_57 = arith.constant 0 : index
    %231 = vector.load %arg13[%c12, %c0_57] : memref<32x384xf32, #tpu.memory_space<vmem>>, vector<2x384xf32>
    %232 = arith.truncf %230 : vector<2x128xf32> to vector<2x128xbf16>
    %cst_58 = arith.constant dense<0.000000e+00> : vector<2x384xf32>
    %233 = tpu.matmul %232, %42, %cst_58 {dimension_numbers = #tpu.dot_dimension_numbers<[1], [0], [0], [1], [0, 0, 1, 1], [], []>} : vector<2x128xbf16>, vector<128x384xbf16>, vector<2x384xf32> -> vector<2x384xf32>
    %234 = vector.broadcast %43 : vector<1x384xf32> to vector<2x384xf32>
    %235 = arith.addf %233, %234 : vector<2x384xf32>
    %236 = vector.extract_strided_slice %231 {offsets = [0, 0], sizes = [2, 128], strides = [1, 1]} : vector<2x384xf32> to vector<2x128xf32>
    %237 = vector.extract_strided_slice %235 {offsets = [0, 0], sizes = [2, 128], strides = [1, 1]} : vector<2x384xf32> to vector<2x128xf32>
    %238 = arith.addf %236, %237 : vector<2x128xf32>
    %239 = arith.negf %238 : vector<2x128xf32>
    %240 = math.exp %239 : vector<2x128xf32>
    %cst_59 = arith.constant 1.000000e+00 : f32
    %241 = vector.broadcast %cst_59 : f32 to vector<2x128xf32>
    %242 = arith.addf %241, %240 : vector<2x128xf32>
    %243 = arith.divf %241, %242 : vector<2x128xf32>
    %244 = vector.extract_strided_slice %231 {offsets = [0, 128], sizes = [2, 128], strides = [1, 1]} : vector<2x384xf32> to vector<2x128xf32>
    %245 = vector.extract_strided_slice %235 {offsets = [0, 128], sizes = [2, 128], strides = [1, 1]} : vector<2x384xf32> to vector<2x128xf32>
    %246 = arith.addf %244, %245 : vector<2x128xf32>
    %247 = arith.negf %246 : vector<2x128xf32>
    %248 = math.exp %247 : vector<2x128xf32>
    %cst_60 = arith.constant 1.000000e+00 : f32
    %249 = vector.broadcast %cst_60 : f32 to vector<2x128xf32>
    %250 = arith.addf %249, %248 : vector<2x128xf32>
    %251 = arith.divf %249, %250 : vector<2x128xf32>
    %252 = vector.extract_strided_slice %231 {offsets = [0, 256], sizes = [2, 128], strides = [1, 1]} : vector<2x384xf32> to vector<2x128xf32>
    %253 = vector.extract_strided_slice %235 {offsets = [0, 256], sizes = [2, 128], strides = [1, 1]} : vector<2x384xf32> to vector<2x128xf32>
    %254 = arith.mulf %243, %253 : vector<2x128xf32>
    %255 = arith.addf %252, %254 : vector<2x128xf32>
    %256 = math.tanh %255 : vector<2x128xf32>
    %cst_61 = arith.constant 1.000000e+00 : f32
    %257 = vector.broadcast %cst_61 : f32 to vector<2x128xf32>
    %258 = arith.subf %257, %251 : vector<2x128xf32>
    %259 = arith.mulf %258, %256 : vector<2x128xf32>
    %260 = arith.mulf %251, %230 : vector<2x128xf32>
    %261 = arith.addf %259, %260 : vector<2x128xf32>
    %c14 = arith.constant 14 : index
    %c0_62 = arith.constant 0 : index
    %262 = vector.load %arg13[%c14, %c0_62] : memref<32x384xf32, #tpu.memory_space<vmem>>, vector<2x384xf32>
    %263 = arith.truncf %261 : vector<2x128xf32> to vector<2x128xbf16>
    %cst_63 = arith.constant dense<0.000000e+00> : vector<2x384xf32>
    %264 = tpu.matmul %263, %42, %cst_63 {dimension_numbers = #tpu.dot_dimension_numbers<[1], [0], [0], [1], [0, 0, 1, 1], [], []>} : vector<2x128xbf16>, vector<128x384xbf16>, vector<2x384xf32> -> vector<2x384xf32>
    %265 = vector.broadcast %43 : vector<1x384xf32> to vector<2x384xf32>
    %266 = arith.addf %264, %265 : vector<2x384xf32>
    %267 = vector.extract_strided_slice %262 {offsets = [0, 0], sizes = [2, 128], strides = [1, 1]} : vector<2x384xf32> to vector<2x128xf32>
    %268 = vector.extract_strided_slice %266 {offsets = [0, 0], sizes = [2, 128], strides = [1, 1]} : vector<2x384xf32> to vector<2x128xf32>
    %269 = arith.addf %267, %268 : vector<2x128xf32>
    %270 = arith.negf %269 : vector<2x128xf32>
    %271 = math.exp %270 : vector<2x128xf32>
    %cst_64 = arith.constant 1.000000e+00 : f32
    %272 = vector.broadcast %cst_64 : f32 to vector<2x128xf32>
    %273 = arith.addf %272, %271 : vector<2x128xf32>
    %274 = arith.divf %272, %273 : vector<2x128xf32>
    %275 = vector.extract_strided_slice %262 {offsets = [0, 128], sizes = [2, 128], strides = [1, 1]} : vector<2x384xf32> to vector<2x128xf32>
    %276 = vector.extract_strided_slice %266 {offsets = [0, 128], sizes = [2, 128], strides = [1, 1]} : vector<2x384xf32> to vector<2x128xf32>
    %277 = arith.addf %275, %276 : vector<2x128xf32>
    %278 = arith.negf %277 : vector<2x128xf32>
    %279 = math.exp %278 : vector<2x128xf32>
    %cst_65 = arith.constant 1.000000e+00 : f32
    %280 = vector.broadcast %cst_65 : f32 to vector<2x128xf32>
    %281 = arith.addf %280, %279 : vector<2x128xf32>
    %282 = arith.divf %280, %281 : vector<2x128xf32>
    %283 = vector.extract_strided_slice %262 {offsets = [0, 256], sizes = [2, 128], strides = [1, 1]} : vector<2x384xf32> to vector<2x128xf32>
    %284 = vector.extract_strided_slice %266 {offsets = [0, 256], sizes = [2, 128], strides = [1, 1]} : vector<2x384xf32> to vector<2x128xf32>
    %285 = arith.mulf %274, %284 : vector<2x128xf32>
    %286 = arith.addf %283, %285 : vector<2x128xf32>
    %287 = math.tanh %286 : vector<2x128xf32>
    %cst_66 = arith.constant 1.000000e+00 : f32
    %288 = vector.broadcast %cst_66 : f32 to vector<2x128xf32>
    %289 = arith.subf %288, %282 : vector<2x128xf32>
    %290 = arith.mulf %289, %287 : vector<2x128xf32>
    %291 = arith.mulf %282, %261 : vector<2x128xf32>
    %292 = arith.addf %290, %291 : vector<2x128xf32>
    %c16 = arith.constant 16 : index
    %c0_67 = arith.constant 0 : index
    %293 = vector.load %arg13[%c16, %c0_67] : memref<32x384xf32, #tpu.memory_space<vmem>>, vector<2x384xf32>
    %294 = arith.truncf %292 : vector<2x128xf32> to vector<2x128xbf16>
    %cst_68 = arith.constant dense<0.000000e+00> : vector<2x384xf32>
    %295 = tpu.matmul %294, %42, %cst_68 {dimension_numbers = #tpu.dot_dimension_numbers<[1], [0], [0], [1], [0, 0, 1, 1], [], []>} : vector<2x128xbf16>, vector<128x384xbf16>, vector<2x384xf32> -> vector<2x384xf32>
    %296 = vector.broadcast %43 : vector<1x384xf32> to vector<2x384xf32>
    %297 = arith.addf %295, %296 : vector<2x384xf32>
    %298 = vector.extract_strided_slice %293 {offsets = [0, 0], sizes = [2, 128], strides = [1, 1]} : vector<2x384xf32> to vector<2x128xf32>
    %299 = vector.extract_strided_slice %297 {offsets = [0, 0], sizes = [2, 128], strides = [1, 1]} : vector<2x384xf32> to vector<2x128xf32>
    %300 = arith.addf %298, %299 : vector<2x128xf32>
    %301 = arith.negf %300 : vector<2x128xf32>
    %302 = math.exp %301 : vector<2x128xf32>
    %cst_69 = arith.constant 1.000000e+00 : f32
    %303 = vector.broadcast %cst_69 : f32 to vector<2x128xf32>
    %304 = arith.addf %303, %302 : vector<2x128xf32>
    %305 = arith.divf %303, %304 : vector<2x128xf32>
    %306 = vector.extract_strided_slice %293 {offsets = [0, 128], sizes = [2, 128], strides = [1, 1]} : vector<2x384xf32> to vector<2x128xf32>
    %307 = vector.extract_strided_slice %297 {offsets = [0, 128], sizes = [2, 128], strides = [1, 1]} : vector<2x384xf32> to vector<2x128xf32>
    %308 = arith.addf %306, %307 : vector<2x128xf32>
    %309 = arith.negf %308 : vector<2x128xf32>
    %310 = math.exp %309 : vector<2x128xf32>
    %cst_70 = arith.constant 1.000000e+00 : f32
    %311 = vector.broadcast %cst_70 : f32 to vector<2x128xf32>
    %312 = arith.addf %311, %310 : vector<2x128xf32>
    %313 = arith.divf %311, %312 : vector<2x128xf32>
    %314 = vector.extract_strided_slice %293 {offsets = [0, 256], sizes = [2, 128], strides = [1, 1]} : vector<2x384xf32> to vector<2x128xf32>
    %315 = vector.extract_strided_slice %297 {offsets = [0, 256], sizes = [2, 128], strides = [1, 1]} : vector<2x384xf32> to vector<2x128xf32>
    %316 = arith.mulf %305, %315 : vector<2x128xf32>
    %317 = arith.addf %314, %316 : vector<2x128xf32>
    %318 = math.tanh %317 : vector<2x128xf32>
    %cst_71 = arith.constant 1.000000e+00 : f32
    %319 = vector.broadcast %cst_71 : f32 to vector<2x128xf32>
    %320 = arith.subf %319, %313 : vector<2x128xf32>
    %321 = arith.mulf %320, %318 : vector<2x128xf32>
    %322 = arith.mulf %313, %292 : vector<2x128xf32>
    %323 = arith.addf %321, %322 : vector<2x128xf32>
    %c18 = arith.constant 18 : index
    %c0_72 = arith.constant 0 : index
    %324 = vector.load %arg13[%c18, %c0_72] : memref<32x384xf32, #tpu.memory_space<vmem>>, vector<2x384xf32>
    %325 = arith.truncf %323 : vector<2x128xf32> to vector<2x128xbf16>
    %cst_73 = arith.constant dense<0.000000e+00> : vector<2x384xf32>
    %326 = tpu.matmul %325, %42, %cst_73 {dimension_numbers = #tpu.dot_dimension_numbers<[1], [0], [0], [1], [0, 0, 1, 1], [], []>} : vector<2x128xbf16>, vector<128x384xbf16>, vector<2x384xf32> -> vector<2x384xf32>
    %327 = vector.broadcast %43 : vector<1x384xf32> to vector<2x384xf32>
    %328 = arith.addf %326, %327 : vector<2x384xf32>
    %329 = vector.extract_strided_slice %324 {offsets = [0, 0], sizes = [2, 128], strides = [1, 1]} : vector<2x384xf32> to vector<2x128xf32>
    %330 = vector.extract_strided_slice %328 {offsets = [0, 0], sizes = [2, 128], strides = [1, 1]} : vector<2x384xf32> to vector<2x128xf32>
    %331 = arith.addf %329, %330 : vector<2x128xf32>
    %332 = arith.negf %331 : vector<2x128xf32>
    %333 = math.exp %332 : vector<2x128xf32>
    %cst_74 = arith.constant 1.000000e+00 : f32
    %334 = vector.broadcast %cst_74 : f32 to vector<2x128xf32>
    %335 = arith.addf %334, %333 : vector<2x128xf32>
    %336 = arith.divf %334, %335 : vector<2x128xf32>
    %337 = vector.extract_strided_slice %324 {offsets = [0, 128], sizes = [2, 128], strides = [1, 1]} : vector<2x384xf32> to vector<2x128xf32>
    %338 = vector.extract_strided_slice %328 {offsets = [0, 128], sizes = [2, 128], strides = [1, 1]} : vector<2x384xf32> to vector<2x128xf32>
    %339 = arith.addf %337, %338 : vector<2x128xf32>
    %340 = arith.negf %339 : vector<2x128xf32>
    %341 = math.exp %340 : vector<2x128xf32>
    %cst_75 = arith.constant 1.000000e+00 : f32
    %342 = vector.broadcast %cst_75 : f32 to vector<2x128xf32>
    %343 = arith.addf %342, %341 : vector<2x128xf32>
    %344 = arith.divf %342, %343 : vector<2x128xf32>
    %345 = vector.extract_strided_slice %324 {offsets = [0, 256], sizes = [2, 128], strides = [1, 1]} : vector<2x384xf32> to vector<2x128xf32>
    %346 = vector.extract_strided_slice %328 {offsets = [0, 256], sizes = [2, 128], strides = [1, 1]} : vector<2x384xf32> to vector<2x128xf32>
    %347 = arith.mulf %336, %346 : vector<2x128xf32>
    %348 = arith.addf %345, %347 : vector<2x128xf32>
    %349 = math.tanh %348 : vector<2x128xf32>
    %cst_76 = arith.constant 1.000000e+00 : f32
    %350 = vector.broadcast %cst_76 : f32 to vector<2x128xf32>
    %351 = arith.subf %350, %344 : vector<2x128xf32>
    %352 = arith.mulf %351, %349 : vector<2x128xf32>
    %353 = arith.mulf %344, %323 : vector<2x128xf32>
    %354 = arith.addf %352, %353 : vector<2x128xf32>
    %c20 = arith.constant 20 : index
    %c0_77 = arith.constant 0 : index
    %355 = vector.load %arg13[%c20, %c0_77] : memref<32x384xf32, #tpu.memory_space<vmem>>, vector<2x384xf32>
    %356 = arith.truncf %354 : vector<2x128xf32> to vector<2x128xbf16>
    %cst_78 = arith.constant dense<0.000000e+00> : vector<2x384xf32>
    %357 = tpu.matmul %356, %42, %cst_78 {dimension_numbers = #tpu.dot_dimension_numbers<[1], [0], [0], [1], [0, 0, 1, 1], [], []>} : vector<2x128xbf16>, vector<128x384xbf16>, vector<2x384xf32> -> vector<2x384xf32>
    %358 = vector.broadcast %43 : vector<1x384xf32> to vector<2x384xf32>
    %359 = arith.addf %357, %358 : vector<2x384xf32>
    %360 = vector.extract_strided_slice %355 {offsets = [0, 0], sizes = [2, 128], strides = [1, 1]} : vector<2x384xf32> to vector<2x128xf32>
    %361 = vector.extract_strided_slice %359 {offsets = [0, 0], sizes = [2, 128], strides = [1, 1]} : vector<2x384xf32> to vector<2x128xf32>
    %362 = arith.addf %360, %361 : vector<2x128xf32>
    %363 = arith.negf %362 : vector<2x128xf32>
    %364 = math.exp %363 : vector<2x128xf32>
    %cst_79 = arith.constant 1.000000e+00 : f32
    %365 = vector.broadcast %cst_79 : f32 to vector<2x128xf32>
    %366 = arith.addf %365, %364 : vector<2x128xf32>
    %367 = arith.divf %365, %366 : vector<2x128xf32>
    %368 = vector.extract_strided_slice %355 {offsets = [0, 128], sizes = [2, 128], strides = [1, 1]} : vector<2x384xf32> to vector<2x128xf32>
    %369 = vector.extract_strided_slice %359 {offsets = [0, 128], sizes = [2, 128], strides = [1, 1]} : vector<2x384xf32> to vector<2x128xf32>
    %370 = arith.addf %368, %369 : vector<2x128xf32>
    %371 = arith.negf %370 : vector<2x128xf32>
    %372 = math.exp %371 : vector<2x128xf32>
    %cst_80 = arith.constant 1.000000e+00 : f32
    %373 = vector.broadcast %cst_80 : f32 to vector<2x128xf32>
    %374 = arith.addf %373, %372 : vector<2x128xf32>
    %375 = arith.divf %373, %374 : vector<2x128xf32>
    %376 = vector.extract_strided_slice %355 {offsets = [0, 256], sizes = [2, 128], strides = [1, 1]} : vector<2x384xf32> to vector<2x128xf32>
    %377 = vector.extract_strided_slice %359 {offsets = [0, 256], sizes = [2, 128], strides = [1, 1]} : vector<2x384xf32> to vector<2x128xf32>
    %378 = arith.mulf %367, %377 : vector<2x128xf32>
    %379 = arith.addf %376, %378 : vector<2x128xf32>
    %380 = math.tanh %379 : vector<2x128xf32>
    %cst_81 = arith.constant 1.000000e+00 : f32
    %381 = vector.broadcast %cst_81 : f32 to vector<2x128xf32>
    %382 = arith.subf %381, %375 : vector<2x128xf32>
    %383 = arith.mulf %382, %380 : vector<2x128xf32>
    %384 = arith.mulf %375, %354 : vector<2x128xf32>
    %385 = arith.addf %383, %384 : vector<2x128xf32>
    %c22 = arith.constant 22 : index
    %c0_82 = arith.constant 0 : index
    %386 = vector.load %arg13[%c22, %c0_82] : memref<32x384xf32, #tpu.memory_space<vmem>>, vector<2x384xf32>
    %387 = arith.truncf %385 : vector<2x128xf32> to vector<2x128xbf16>
    %cst_83 = arith.constant dense<0.000000e+00> : vector<2x384xf32>
    %388 = tpu.matmul %387, %42, %cst_83 {dimension_numbers = #tpu.dot_dimension_numbers<[1], [0], [0], [1], [0, 0, 1, 1], [], []>} : vector<2x128xbf16>, vector<128x384xbf16>, vector<2x384xf32> -> vector<2x384xf32>
    %389 = vector.broadcast %43 : vector<1x384xf32> to vector<2x384xf32>
    %390 = arith.addf %388, %389 : vector<2x384xf32>
    %391 = vector.extract_strided_slice %386 {offsets = [0, 0], sizes = [2, 128], strides = [1, 1]} : vector<2x384xf32> to vector<2x128xf32>
    %392 = vector.extract_strided_slice %390 {offsets = [0, 0], sizes = [2, 128], strides = [1, 1]} : vector<2x384xf32> to vector<2x128xf32>
    %393 = arith.addf %391, %392 : vector<2x128xf32>
    %394 = arith.negf %393 : vector<2x128xf32>
    %395 = math.exp %394 : vector<2x128xf32>
    %cst_84 = arith.constant 1.000000e+00 : f32
    %396 = vector.broadcast %cst_84 : f32 to vector<2x128xf32>
    %397 = arith.addf %396, %395 : vector<2x128xf32>
    %398 = arith.divf %396, %397 : vector<2x128xf32>
    %399 = vector.extract_strided_slice %386 {offsets = [0, 128], sizes = [2, 128], strides = [1, 1]} : vector<2x384xf32> to vector<2x128xf32>
    %400 = vector.extract_strided_slice %390 {offsets = [0, 128], sizes = [2, 128], strides = [1, 1]} : vector<2x384xf32> to vector<2x128xf32>
    %401 = arith.addf %399, %400 : vector<2x128xf32>
    %402 = arith.negf %401 : vector<2x128xf32>
    %403 = math.exp %402 : vector<2x128xf32>
    %cst_85 = arith.constant 1.000000e+00 : f32
    %404 = vector.broadcast %cst_85 : f32 to vector<2x128xf32>
    %405 = arith.addf %404, %403 : vector<2x128xf32>
    %406 = arith.divf %404, %405 : vector<2x128xf32>
    %407 = vector.extract_strided_slice %386 {offsets = [0, 256], sizes = [2, 128], strides = [1, 1]} : vector<2x384xf32> to vector<2x128xf32>
    %408 = vector.extract_strided_slice %390 {offsets = [0, 256], sizes = [2, 128], strides = [1, 1]} : vector<2x384xf32> to vector<2x128xf32>
    %409 = arith.mulf %398, %408 : vector<2x128xf32>
    %410 = arith.addf %407, %409 : vector<2x128xf32>
    %411 = math.tanh %410 : vector<2x128xf32>
    %cst_86 = arith.constant 1.000000e+00 : f32
    %412 = vector.broadcast %cst_86 : f32 to vector<2x128xf32>
    %413 = arith.subf %412, %406 : vector<2x128xf32>
    %414 = arith.mulf %413, %411 : vector<2x128xf32>
    %415 = arith.mulf %406, %385 : vector<2x128xf32>
    %416 = arith.addf %414, %415 : vector<2x128xf32>
    %c24 = arith.constant 24 : index
    %c0_87 = arith.constant 0 : index
    %417 = vector.load %arg13[%c24, %c0_87] : memref<32x384xf32, #tpu.memory_space<vmem>>, vector<2x384xf32>
    %418 = arith.truncf %416 : vector<2x128xf32> to vector<2x128xbf16>
    %cst_88 = arith.constant dense<0.000000e+00> : vector<2x384xf32>
    %419 = tpu.matmul %418, %42, %cst_88 {dimension_numbers = #tpu.dot_dimension_numbers<[1], [0], [0], [1], [0, 0, 1, 1], [], []>} : vector<2x128xbf16>, vector<128x384xbf16>, vector<2x384xf32> -> vector<2x384xf32>
    %420 = vector.broadcast %43 : vector<1x384xf32> to vector<2x384xf32>
    %421 = arith.addf %419, %420 : vector<2x384xf32>
    %422 = vector.extract_strided_slice %417 {offsets = [0, 0], sizes = [2, 128], strides = [1, 1]} : vector<2x384xf32> to vector<2x128xf32>
    %423 = vector.extract_strided_slice %421 {offsets = [0, 0], sizes = [2, 128], strides = [1, 1]} : vector<2x384xf32> to vector<2x128xf32>
    %424 = arith.addf %422, %423 : vector<2x128xf32>
    %425 = arith.negf %424 : vector<2x128xf32>
    %426 = math.exp %425 : vector<2x128xf32>
    %cst_89 = arith.constant 1.000000e+00 : f32
    %427 = vector.broadcast %cst_89 : f32 to vector<2x128xf32>
    %428 = arith.addf %427, %426 : vector<2x128xf32>
    %429 = arith.divf %427, %428 : vector<2x128xf32>
    %430 = vector.extract_strided_slice %417 {offsets = [0, 128], sizes = [2, 128], strides = [1, 1]} : vector<2x384xf32> to vector<2x128xf32>
    %431 = vector.extract_strided_slice %421 {offsets = [0, 128], sizes = [2, 128], strides = [1, 1]} : vector<2x384xf32> to vector<2x128xf32>
    %432 = arith.addf %430, %431 : vector<2x128xf32>
    %433 = arith.negf %432 : vector<2x128xf32>
    %434 = math.exp %433 : vector<2x128xf32>
    %cst_90 = arith.constant 1.000000e+00 : f32
    %435 = vector.broadcast %cst_90 : f32 to vector<2x128xf32>
    %436 = arith.addf %435, %434 : vector<2x128xf32>
    %437 = arith.divf %435, %436 : vector<2x128xf32>
    %438 = vector.extract_strided_slice %417 {offsets = [0, 256], sizes = [2, 128], strides = [1, 1]} : vector<2x384xf32> to vector<2x128xf32>
    %439 = vector.extract_strided_slice %421 {offsets = [0, 256], sizes = [2, 128], strides = [1, 1]} : vector<2x384xf32> to vector<2x128xf32>
    %440 = arith.mulf %429, %439 : vector<2x128xf32>
    %441 = arith.addf %438, %440 : vector<2x128xf32>
    %442 = math.tanh %441 : vector<2x128xf32>
    %cst_91 = arith.constant 1.000000e+00 : f32
    %443 = vector.broadcast %cst_91 : f32 to vector<2x128xf32>
    %444 = arith.subf %443, %437 : vector<2x128xf32>
    %445 = arith.mulf %444, %442 : vector<2x128xf32>
    %446 = arith.mulf %437, %416 : vector<2x128xf32>
    %447 = arith.addf %445, %446 : vector<2x128xf32>
    %c26 = arith.constant 26 : index
    %c0_92 = arith.constant 0 : index
    %448 = vector.load %arg13[%c26, %c0_92] : memref<32x384xf32, #tpu.memory_space<vmem>>, vector<2x384xf32>
    %449 = arith.truncf %447 : vector<2x128xf32> to vector<2x128xbf16>
    %cst_93 = arith.constant dense<0.000000e+00> : vector<2x384xf32>
    %450 = tpu.matmul %449, %42, %cst_93 {dimension_numbers = #tpu.dot_dimension_numbers<[1], [0], [0], [1], [0, 0, 1, 1], [], []>} : vector<2x128xbf16>, vector<128x384xbf16>, vector<2x384xf32> -> vector<2x384xf32>
    %451 = vector.broadcast %43 : vector<1x384xf32> to vector<2x384xf32>
    %452 = arith.addf %450, %451 : vector<2x384xf32>
    %453 = vector.extract_strided_slice %448 {offsets = [0, 0], sizes = [2, 128], strides = [1, 1]} : vector<2x384xf32> to vector<2x128xf32>
    %454 = vector.extract_strided_slice %452 {offsets = [0, 0], sizes = [2, 128], strides = [1, 1]} : vector<2x384xf32> to vector<2x128xf32>
    %455 = arith.addf %453, %454 : vector<2x128xf32>
    %456 = arith.negf %455 : vector<2x128xf32>
    %457 = math.exp %456 : vector<2x128xf32>
    %cst_94 = arith.constant 1.000000e+00 : f32
    %458 = vector.broadcast %cst_94 : f32 to vector<2x128xf32>
    %459 = arith.addf %458, %457 : vector<2x128xf32>
    %460 = arith.divf %458, %459 : vector<2x128xf32>
    %461 = vector.extract_strided_slice %448 {offsets = [0, 128], sizes = [2, 128], strides = [1, 1]} : vector<2x384xf32> to vector<2x128xf32>
    %462 = vector.extract_strided_slice %452 {offsets = [0, 128], sizes = [2, 128], strides = [1, 1]} : vector<2x384xf32> to vector<2x128xf32>
    %463 = arith.addf %461, %462 : vector<2x128xf32>
    %464 = arith.negf %463 : vector<2x128xf32>
    %465 = math.exp %464 : vector<2x128xf32>
    %cst_95 = arith.constant 1.000000e+00 : f32
    %466 = vector.broadcast %cst_95 : f32 to vector<2x128xf32>
    %467 = arith.addf %466, %465 : vector<2x128xf32>
    %468 = arith.divf %466, %467 : vector<2x128xf32>
    %469 = vector.extract_strided_slice %448 {offsets = [0, 256], sizes = [2, 128], strides = [1, 1]} : vector<2x384xf32> to vector<2x128xf32>
    %470 = vector.extract_strided_slice %452 {offsets = [0, 256], sizes = [2, 128], strides = [1, 1]} : vector<2x384xf32> to vector<2x128xf32>
    %471 = arith.mulf %460, %470 : vector<2x128xf32>
    %472 = arith.addf %469, %471 : vector<2x128xf32>
    %473 = math.tanh %472 : vector<2x128xf32>
    %cst_96 = arith.constant 1.000000e+00 : f32
    %474 = vector.broadcast %cst_96 : f32 to vector<2x128xf32>
    %475 = arith.subf %474, %468 : vector<2x128xf32>
    %476 = arith.mulf %475, %473 : vector<2x128xf32>
    %477 = arith.mulf %468, %447 : vector<2x128xf32>
    %478 = arith.addf %476, %477 : vector<2x128xf32>
    %c28 = arith.constant 28 : index
    %c0_97 = arith.constant 0 : index
    %479 = vector.load %arg13[%c28, %c0_97] : memref<32x384xf32, #tpu.memory_space<vmem>>, vector<2x384xf32>
    %480 = arith.truncf %478 : vector<2x128xf32> to vector<2x128xbf16>
    %cst_98 = arith.constant dense<0.000000e+00> : vector<2x384xf32>
    %481 = tpu.matmul %480, %42, %cst_98 {dimension_numbers = #tpu.dot_dimension_numbers<[1], [0], [0], [1], [0, 0, 1, 1], [], []>} : vector<2x128xbf16>, vector<128x384xbf16>, vector<2x384xf32> -> vector<2x384xf32>
    %482 = vector.broadcast %43 : vector<1x384xf32> to vector<2x384xf32>
    %483 = arith.addf %481, %482 : vector<2x384xf32>
    %484 = vector.extract_strided_slice %479 {offsets = [0, 0], sizes = [2, 128], strides = [1, 1]} : vector<2x384xf32> to vector<2x128xf32>
    %485 = vector.extract_strided_slice %483 {offsets = [0, 0], sizes = [2, 128], strides = [1, 1]} : vector<2x384xf32> to vector<2x128xf32>
    %486 = arith.addf %484, %485 : vector<2x128xf32>
    %487 = arith.negf %486 : vector<2x128xf32>
    %488 = math.exp %487 : vector<2x128xf32>
    %cst_99 = arith.constant 1.000000e+00 : f32
    %489 = vector.broadcast %cst_99 : f32 to vector<2x128xf32>
    %490 = arith.addf %489, %488 : vector<2x128xf32>
    %491 = arith.divf %489, %490 : vector<2x128xf32>
    %492 = vector.extract_strided_slice %479 {offsets = [0, 128], sizes = [2, 128], strides = [1, 1]} : vector<2x384xf32> to vector<2x128xf32>
    %493 = vector.extract_strided_slice %483 {offsets = [0, 128], sizes = [2, 128], strides = [1, 1]} : vector<2x384xf32> to vector<2x128xf32>
    %494 = arith.addf %492, %493 : vector<2x128xf32>
    %495 = arith.negf %494 : vector<2x128xf32>
    %496 = math.exp %495 : vector<2x128xf32>
    %cst_100 = arith.constant 1.000000e+00 : f32
    %497 = vector.broadcast %cst_100 : f32 to vector<2x128xf32>
    %498 = arith.addf %497, %496 : vector<2x128xf32>
    %499 = arith.divf %497, %498 : vector<2x128xf32>
    %500 = vector.extract_strided_slice %479 {offsets = [0, 256], sizes = [2, 128], strides = [1, 1]} : vector<2x384xf32> to vector<2x128xf32>
    %501 = vector.extract_strided_slice %483 {offsets = [0, 256], sizes = [2, 128], strides = [1, 1]} : vector<2x384xf32> to vector<2x128xf32>
    %502 = arith.mulf %491, %501 : vector<2x128xf32>
    %503 = arith.addf %500, %502 : vector<2x128xf32>
    %504 = math.tanh %503 : vector<2x128xf32>
    %cst_101 = arith.constant 1.000000e+00 : f32
    %505 = vector.broadcast %cst_101 : f32 to vector<2x128xf32>
    %506 = arith.subf %505, %499 : vector<2x128xf32>
    %507 = arith.mulf %506, %504 : vector<2x128xf32>
    %508 = arith.mulf %499, %478 : vector<2x128xf32>
    %509 = arith.addf %507, %508 : vector<2x128xf32>
    %c30 = arith.constant 30 : index
    %c0_102 = arith.constant 0 : index
    %510 = vector.load %arg13[%c30, %c0_102] : memref<32x384xf32, #tpu.memory_space<vmem>>, vector<2x384xf32>
    %511 = arith.truncf %509 : vector<2x128xf32> to vector<2x128xbf16>
    %cst_103 = arith.constant dense<0.000000e+00> : vector<2x384xf32>
    %512 = tpu.matmul %511, %42, %cst_103 {dimension_numbers = #tpu.dot_dimension_numbers<[1], [0], [0], [1], [0, 0, 1, 1], [], []>} : vector<2x128xbf16>, vector<128x384xbf16>, vector<2x384xf32> -> vector<2x384xf32>
    %513 = vector.broadcast %43 : vector<1x384xf32> to vector<2x384xf32>
    %514 = arith.addf %512, %513 : vector<2x384xf32>
    %515 = vector.extract_strided_slice %510 {offsets = [0, 0], sizes = [2, 128], strides = [1, 1]} : vector<2x384xf32> to vector<2x128xf32>
    %516 = vector.extract_strided_slice %514 {offsets = [0, 0], sizes = [2, 128], strides = [1, 1]} : vector<2x384xf32> to vector<2x128xf32>
    %517 = arith.addf %515, %516 : vector<2x128xf32>
    %518 = arith.negf %517 : vector<2x128xf32>
    %519 = math.exp %518 : vector<2x128xf32>
    %cst_104 = arith.constant 1.000000e+00 : f32
    %520 = vector.broadcast %cst_104 : f32 to vector<2x128xf32>
    %521 = arith.addf %520, %519 : vector<2x128xf32>
    %522 = arith.divf %520, %521 : vector<2x128xf32>
    %523 = vector.extract_strided_slice %510 {offsets = [0, 128], sizes = [2, 128], strides = [1, 1]} : vector<2x384xf32> to vector<2x128xf32>
    %524 = vector.extract_strided_slice %514 {offsets = [0, 128], sizes = [2, 128], strides = [1, 1]} : vector<2x384xf32> to vector<2x128xf32>
    %525 = arith.addf %523, %524 : vector<2x128xf32>
    %526 = arith.negf %525 : vector<2x128xf32>
    %527 = math.exp %526 : vector<2x128xf32>
    %cst_105 = arith.constant 1.000000e+00 : f32
    %528 = vector.broadcast %cst_105 : f32 to vector<2x128xf32>
    %529 = arith.addf %528, %527 : vector<2x128xf32>
    %530 = arith.divf %528, %529 : vector<2x128xf32>
    %531 = vector.extract_strided_slice %510 {offsets = [0, 256], sizes = [2, 128], strides = [1, 1]} : vector<2x384xf32> to vector<2x128xf32>
    %532 = vector.extract_strided_slice %514 {offsets = [0, 256], sizes = [2, 128], strides = [1, 1]} : vector<2x384xf32> to vector<2x128xf32>
    %533 = arith.mulf %522, %532 : vector<2x128xf32>
    %534 = arith.addf %531, %533 : vector<2x128xf32>
    %535 = math.tanh %534 : vector<2x128xf32>
    %cst_106 = arith.constant 1.000000e+00 : f32
    %536 = vector.broadcast %cst_106 : f32 to vector<2x128xf32>
    %537 = arith.subf %536, %530 : vector<2x128xf32>
    %538 = arith.mulf %537, %535 : vector<2x128xf32>
    %539 = arith.mulf %530, %509 : vector<2x128xf32>
    %540 = arith.addf %538, %539 : vector<2x128xf32>
    %541 = arith.truncf %540 : vector<2x128xf32> to vector<2x128xbf16>
    %c0_107 = arith.constant 0 : index
    %c0_108 = arith.constant 0 : index
    %542 = vector.load %arg10[%c0_107, %c0_108] : memref<128x128xbf16, #tpu.memory_space<vmem>>, vector<128x128xbf16>
    %cst_109 = arith.constant dense<0.000000e+00> : vector<2x128xf32>
    %543 = tpu.matmul %541, %542, %cst_109 {dimension_numbers = #tpu.dot_dimension_numbers<[1], [0], [0], [1], [0, 0, 1, 1], [], []>} : vector<2x128xbf16>, vector<128x128xbf16>, vector<2x128xf32> -> vector<2x128xf32>
    %c0_110 = arith.constant 0 : index
    %c0_111 = arith.constant 0 : index
    %544 = vector.load %arg11[%c0_110, %c0_111] : memref<1x128xf32, #tpu.memory_space<vmem>>, vector<1x128xf32>
    %545 = vector.broadcast %544 : vector<1x128xf32> to vector<2x128xf32>
    %546 = arith.addf %543, %545 : vector<2x128xf32>
    %c0_112 = arith.constant 0 : index
    %c0_113 = arith.constant 0 : index
    %547 = vector.load %arg12[%c0_112, %c0_113] : memref<2x128xf32, #tpu.memory_space<vmem>>, vector<2x128xf32>
    tpu.vector_store %arg12[%c0_112, %c0_113], %546 {strides = array<i32>} : memref<2x128xf32, #tpu.memory_space<vmem>>, vector<2x128xf32>,
    return
  }
  func.func @transform_0(%arg0: i32) -> (i32, i32) {
    %c0_i32 = arith.constant 0 : i32
    %c0_i32_0 = arith.constant 0 : i32
    %c0_i32_1 = arith.constant 0 : i32
    return %c0_i32, %c0_i32_0 : i32, i32
  }
  func.func @transform_1(%arg0: i32) -> (i32, i32) {
    %c0_i32 = arith.constant 0 : i32
    %c0_i32_0 = arith.constant 0 : i32
    %c0_i32_1 = arith.constant 0 : i32
    return %c0_i32, %c0_i32_0 : i32, i32
  }
  func.func @transform_2(%arg0: i32) -> (i32, i32) {
    %c0_i32 = arith.constant 0 : i32
    %c0_i32_0 = arith.constant 0 : i32
    %c0_i32_1 = arith.constant 0 : i32
    return %c0_i32, %c0_i32_0 : i32, i32
  }
  func.func @transform_3(%arg0: i32) -> (i32, i32) {
    %c0_i32 = arith.constant 0 : i32
    %c0_i32_0 = arith.constant 0 : i32
    %c0_i32_1 = arith.constant 0 : i32
    return %c0_i32, %c0_i32_0 : i32, i32
  }
  func.func @transform_4(%arg0: i32) -> (i32, i32) {
    %c0_i32 = arith.constant 0 : i32
    %c0_i32_0 = arith.constant 0 : i32
    %c0_i32_1 = arith.constant 0 : i32
    return %c0_i32, %c0_i32_0 : i32, i32
  }
  func.func @transform_5(%arg0: i32) -> (i32, i32) {
    %c0_i32 = arith.constant 0 : i32
    %c0_i32_0 = arith.constant 0 : i32
    %c0_i32_1 = arith.constant 0 : i32
    return %c0_i32, %c0_i32_0 : i32, i32
  }
  func.func @transform_6(%arg0: i32) -> (i32, i32) {
    %c0_i32 = arith.constant 0 : i32
    %c0_i32_0 = arith.constant 0 : i32
    %c0_i32_1 = arith.constant 0 : i32
    return %c0_i32, %c0_i32_0 : i32, i32
  }
  func.func @transform_7(%arg0: i32) -> (i32, i32) {
    %c0_i32 = arith.constant 0 : i32
    %c0_i32_0 = arith.constant 0 : i32
    %c0_i32_1 = arith.constant 0 : i32
    return %c0_i32, %c0_i32_0 : i32, i32
  }
  func.func @transform_8(%arg0: i32) -> (i32, i32) {
    %c0_i32 = arith.constant 0 : i32
    %c0_i32_0 = arith.constant 0 : i32
    %c0_i32_1 = arith.constant 0 : i32
    return %c0_i32, %c0_i32_0 : i32, i32
  }
  func.func @transform_9(%arg0: i32) -> (i32, i32) {
    %c0_i32 = arith.constant 0 : i32
    %c0_i32_0 = arith.constant 0 : i32
    %c0_i32_1 = arith.constant 0 : i32
    return %c0_i32, %c0_i32_0 : i32, i32
  }
  func.func @transform_10(%arg0: i32) -> (i32, i32) {
    %c0_i32 = arith.constant 0 : i32
    %c0_i32_0 = arith.constant 0 : i32
    %c0_i32_1 = arith.constant 0 : i32
    return %c0_i32, %c0_i32_0 : i32, i32
  }
  func.func @transform_11(%arg0: i32) -> (i32, i32) {
    %c0_i32 = arith.constant 0 : i32
    %c0_i32_0 = arith.constant 0 : i32
    %c0_i32_1 = arith.constant 0 : i32
    return %c0_i32, %c0_i32_0 : i32, i32
  }
}

</mosaic_0001>

<llo_original>
// kernel: tpu_custom_call.1
$region0: #{tpu_custom_call.1}
  #allocation0 [shape = 'u32[]', space=smem, size = 0x4, offset = 0x4, fixed_abs, tag = 'smem constant byte address 0x4 - core index']
  #allocation1 [shape = 'u32[144,128]{1,0:T(1,128)}', space=vmem, size = 0x12000, scoped, tag = 'internal scratch']
  #allocation2 [shape = 'f32[32,384]{1,0:T(8,128)}', space=vmem, size = 0xc000, scoped, tag = 'scratch operand']
  %s0 = inlined_call_operand.vmem [shape: s32[32,1], index: 0, kind: input, shape index: {}]
  %s1 = inlined_call_operand.hbm [shape: bf16[128,128], index: 1, kind: input, shape index: {}]
  %s2 = inlined_call_operand.hbm [shape: f32[32,128], index: 2, kind: input, shape index: {}]
  %s3 = inlined_call_operand.hbm [shape: f32[1,128], index: 3, kind: input, shape index: {}]
  %s4 = inlined_call_operand.hbm [shape: f32[1,128], index: 4, kind: input, shape index: {}]
  %s5 = inlined_call_operand.hbm [shape: bf16[128,384], index: 5, kind: input, shape index: {}]
  %s6 = inlined_call_operand.vmem [shape: f32[1,384], index: 6, kind: input, shape index: {}]
  %s7 = inlined_call_operand.hbm [shape: bf16[128,384], index: 7, kind: input, shape index: {}]
  %s8 = inlined_call_operand.hbm [shape: f32[1,384], index: 8, kind: input, shape index: {}]
  %s9 = inlined_call_operand.vmem [shape: bf16[128,128], index: 9, kind: input, shape index: {}]
  %s10 = inlined_call_operand.vmem [shape: f32[1,128], index: 10, kind: input, shape index: {}]
  %s11 = inlined_call_operand.hbm [shape: f32[2,128], index: 11, kind: output, shape index: {}]
  %s12 = sld [smem:[#allocation0]]
  $region82: #{tpu_custom_call.1} parent=0
    _
  %s14 = ssub.s32 1, %s12
  %s15 = scalar_select 0, %s14, %s12
  $region1: #{tpu_custom_call.1} parent=0
    #allocation3 [shape = 'u8[32768]{0}', space=vmem, size = 0x8000, scoped, tag = 'input window, operand 1, single buffered']
    #allocation4 [shape = 's32[1]{0}', space=sflag, size = 0x4, scoped, tag = 'scoped memory for tpu_custom_call.1']
    #allocation5 [shape = 's32[1]{0}', space=sflag, size = 0x4, scoped, tag = 'scoped memory for tpu_custom_call.1']
    #allocation6 [shape = 'u8[16384]{0}', space=vmem, size = 0x4000, scoped, tag = 'input window, operand 2, single buffered']
    #allocation7 [shape = 's32[1]{0}', space=sflag, size = 0x4, scoped, tag = 'scoped memory for tpu_custom_call.1']
    #allocation8 [shape = 'u8[512]{0}', space=vmem, size = 0x400, scoped, tag = 'input window, operand 3, single buffered']
    #allocation9 [shape = 'u8[512]{0}', space=vmem, size = 0x400, scoped, tag = 'input window, operand 4, single buffered']
    #allocation10 [shape = 's32[1]{0}', space=sflag, size = 0x4, scoped, tag = 'scoped memory for tpu_custom_call.1']
    #allocation11 [shape = 'u8[98304]{0}', space=vmem, size = 0x18000, scoped, tag = 'input window, operand 5, single buffered']
    #allocation12 [shape = 'u8[98304]{0}', space=vmem, size = 0x18000, scoped, tag = 'input window, operand 7, single buffered']
    #allocation13 [shape = 's32[1]{0}', space=sflag, size = 0x4, scoped, tag = 'scoped memory for tpu_custom_call.1']
    #allocation14 [shape = 'u8[1536]{0}', space=vmem, size = 0x800, scoped, tag = 'input window, operand 8, single buffered']
    #allocation15 [shape = 'u8[1024]{0}', space=vmem, size = 0x400, scoped, tag = 'output window, operand 0, single buffered']
    %16 = vsyncpa [#allocation4], 0
    %17 = vsyncpa [#allocation7], 0
    %18 = vsyncpa [#allocation10], 0
    %19 = vsyncpa [#allocation13], 0
    %20 = vsyncpa [#allocation5], 0
    // Predicated region
    $region2: #{tpu_custom_call.1} parent=1 // pred_check
      _
    $region3: #{tpu_custom_call.1} parent=1 // pred_check_branch
      %22 = sbr.rel (0) target = $region5
    $region4: #{tpu_custom_call.1} parent=1 // pred_region
      _
    $region5: #{tpu_custom_call.1} parent=1 // pred_fallthru
      _
    // Predicated region
    $region6: #{tpu_custom_call.1} parent=1 // pred_check
      _
    $region7: #{tpu_custom_call.1} parent=1 // pred_check_branch
      %24 = sbr.rel (0) target = $region9
    $region8: #{tpu_custom_call.1} parent=1 // pred_region
      %s26 = ssub.s32 1024, 1024
      %27 = vsyncadd [#allocation4], %s26
      %s28 = sshll.u32 [#allocation3], 4
      %s29 = int_to_ptr.vmem [resolvable:$true] %s28
      %34 = dma.hbm_to_vmem [thread:$0]  %s1, 1024, %s29, [#allocation4], 64, 64, 4
    $region9: #{tpu_custom_call.1} parent=1 // pred_fallthru
      _
    // Predicated region
    $region10: #{tpu_custom_call.1} parent=1 // pred_check
      _
    $region11: #{tpu_custom_call.1} parent=1 // pred_check_branch
      %36 = sbr.rel (0) target = $region13
    $region12: #{tpu_custom_call.1} parent=1 // pred_region
      %s38 = ssub.s32 512, 512
      %39 = vsyncadd [#allocation7], %s38
      %s40 = sshll.u32 [#allocation6], 4
      %s41 = int_to_ptr.vmem [resolvable:$true] %s40
      %46 = dma.hbm_to_vmem [thread:$0]  %s2, 512, %s41, [#allocation7], 128, 128, 8
    $region13: #{tpu_custom_call.1} parent=1 // pred_fallthru
      _
    // Predicated region
    $region14: #{tpu_custom_call.1} parent=1 // pred_check
      _
    $region15: #{tpu_custom_call.1} parent=1 // pred_check_branch
      %48 = sbr.rel (0) target = $region17
    $region16: #{tpu_custom_call.1} parent=1 // pred_region
      %s50 = ssub.s32 16, 16
      %51 = vsyncadd [#allocation7], %s50
      %s53 = sshll.u32 [#allocation8], 4
      %s54 = int_to_ptr.vmem [resolvable:$true] %s53
      %56 = dma.hbm_to_vmem [thread:$0]  %s3, 16, %s54, [#allocation7]
    $region17: #{tpu_custom_call.1} parent=1 // pred_fallthru
      _
    // Predicated region
    $region18: #{tpu_custom_call.1} parent=1 // pred_check
      _
    $region19: #{tpu_custom_call.1} parent=1 // pred_check_branch
      %58 = sbr.rel (0) target = $region21
    $region20: #{tpu_custom_call.1} parent=1 // pred_region
      %s60 = ssub.s32 16, 16
      %61 = vsyncadd [#allocation10], %s60
      %s63 = sshll.u32 [#allocation9], 4
      %s64 = int_to_ptr.vmem [resolvable:$true] %s63
      %66 = dma.hbm_to_vmem [thread:$0]  %s4, 16, %s64, [#allocation10]
    $region21: #{tpu_custom_call.1} parent=1 // pred_fallthru
      _
    // Predicated region
    $region22: #{tpu_custom_call.1} parent=1 // pred_check
      _
    $region23: #{tpu_custom_call.1} parent=1 // pred_check_branch
      %68 = sbr.rel (0) target = $region25
    $region24: #{tpu_custom_call.1} parent=1 // pred_region
      %s70 = ssub.s32 3072, 3072
      %71 = vsyncadd [#allocation10], %s70
      %s72 = sshll.u32 [#allocation11], 4
      %s73 = int_to_ptr.vmem [resolvable:$true] %s72
      %78 = dma.hbm_to_vmem [thread:$0]  %s5, 3072, %s73, [#allocation10], 192, 192, 12
    $region25: #{tpu_custom_call.1} parent=1 // pred_fallthru
      _
    // Predicated region
    $region26: #{tpu_custom_call.1} parent=1 // pred_check
      _
    $region27: #{tpu_custom_call.1} parent=1 // pred_check_branch
      %80 = sbr.rel (0) target = $region29
    $region28: #{tpu_custom_call.1} parent=1 // pred_region
      _
    $region29: #{tpu_custom_call.1} parent=1 // pred_fallthru
      _
    // Predicated region
    $region30: #{tpu_custom_call.1} parent=1 // pred_check
      _
    $region31: #{tpu_custom_call.1} parent=1 // pred_check_branch
      %82 = sbr.rel (0) target = $region33
    $region32: #{tpu_custom_call.1} parent=1 // pred_region
      %s84 = ssub.s32 3072, 3072
      %85 = vsyncadd [#allocation13], %s84
      %s86 = sshll.u32 [#allocation12], 4
      %s87 = int_to_ptr.vmem [resolvable:$true] %s86
      %92 = dma.hbm_to_vmem [thread:$0]  %s7, 3072, %s87, [#allocation13], 192, 192, 12
    $region33: #{tpu_custom_call.1} parent=1 // pred_fallthru
      _
    // Predicated region
    $region34: #{tpu_custom_call.1} parent=1 // pred_check
      _
    $region35: #{tpu_custom_call.1} parent=1 // pred_check_branch
      %94 = sbr.rel (0) target = $region37
    $region36: #{tpu_custom_call.1} parent=1 // pred_region
      %s96 = ssub.s32 48, 48
      %97 = vsyncadd [#allocation13], %s96
      %s99 = sshll.u32 [#allocation14], 4
      %s100 = int_to_ptr.vmem [resolvable:$true] %s99
      %102 = dma.hbm_to_vmem [thread:$0]  %s8, 48, %s100, [#allocation13]
    $region37: #{tpu_custom_call.1} parent=1 // pred_fallthru
      _
    // Predicated region
    $region38: #{tpu_custom_call.1} parent=1 // pred_check
      _
    $region39: #{tpu_custom_call.1} parent=1 // pred_check_branch
      %104 = sbr.rel (0) target = $region41
    $region40: #{tpu_custom_call.1} parent=1 // pred_region
      _
    $region41: #{tpu_custom_call.1} parent=1 // pred_fallthru
      _
    // Predicated region
    $region42: #{tpu_custom_call.1} parent=1 // pred_check
      _
    $region43: #{tpu_custom_call.1} parent=1 // pred_check_branch
      %106 = sbr.rel (0) target = $region45
    $region44: #{tpu_custom_call.1} parent=1 // pred_region
      _
    $region45: #{tpu_custom_call.1} parent=1 // pred_fallthru
      _
    // Predicated region
    $region46: #{tpu_custom_call.1} parent=1 // pred_check
      _
    $region47: #{tpu_custom_call.1} parent=1 // pred_check_branch
      %108 = sbr.rel (0) target = $region49
    $region48: #{tpu_custom_call.1} parent=1 // pred_region
      %109 = dma.done [#allocation4], 1024
    $region49: #{tpu_custom_call.1} parent=1 // pred_fallthru
      _
    // Predicated region
    $region50: #{tpu_custom_call.1} parent=1 // pred_check
      _
    $region51: #{tpu_custom_call.1} parent=1 // pred_check_branch
      %111 = sbr.rel (0) target = $region53
    $region52: #{tpu_custom_call.1} parent=1 // pred_region
      %112 = dma.done [#allocation7], 512
    $region53: #{tpu_custom_call.1} parent=1 // pred_fallthru
      _
    // Predicated region
    $region54: #{tpu_custom_call.1} parent=1 // pred_check
      _
    $region55: #{tpu_custom_call.1} parent=1 // pred_check_branch
      %114 = sbr.rel (0) target = $region57
    $region56: #{tpu_custom_call.1} parent=1 // pred_region
      %115 = dma.done [#allocation7], 16
    $region57: #{tpu_custom_call.1} parent=1 // pred_fallthru
      _
    // Predicated region
    $region58: #{tpu_custom_call.1} parent=1 // pred_check
      _
    $region59: #{tpu_custom_call.1} parent=1 // pred_check_branch
      %117 = sbr.rel (0) target = $region61
    $region60: #{tpu_custom_call.1} parent=1 // pred_region
      %118 = dma.done [#allocation10], 16
    $region61: #{tpu_custom_call.1} parent=1 // pred_fallthru
      _
    // Predicated region
    $region62: #{tpu_custom_call.1} parent=1 // pred_check
      _
    $region63: #{tpu_custom_call.1} parent=1 // pred_check_branch
      %120 = sbr.rel (0) target = $region65
    $region64: #{tpu_custom_call.1} parent=1 // pred_region
      %121 = dma.done [#allocation10], 3072
    $region65: #{tpu_custom_call.1} parent=1 // pred_fallthru
      _
    // Predicated region
    $region66: #{tpu_custom_call.1} parent=1 // pred_check
      _
    $region67: #{tpu_custom_call.1} parent=1 // pred_check_branch
      %123 = sbr.rel (0) target = $region69
    $region68: #{tpu_custom_call.1} parent=1 // pred_region
      %124 = dma.done [#allocation13], 3072
    $region69: #{tpu_custom_call.1} parent=1 // pred_fallthru
      _
    // Predicated region
    $region70: #{tpu_custom_call.1} parent=1 // pred_check
      _
    $region71: #{tpu_custom_call.1} parent=1 // pred_check_branch
      %126 = sbr.rel (0) target = $region73
    $region72: #{tpu_custom_call.1} parent=1 // pred_region
      %127 = dma.done [#allocation13], 48
    $region73: #{tpu_custom_call.1} parent=1 // pred_fallthru
      _
    %v129 = vld [vmem:[%s0] sm:$0xff]
    %v130 = vld [vmem:[%s0 + $0x8] sm:$0xff]
    %v131 = vld [vmem:[%s0 + $0x10] sm:$0xff]
    %v132 = vld [vmem:[%s0 + $0x18] sm:$0xff]
    %v133 = vlaneseq
    %v134 = vand.u32 %v133, 127
    %135 = vset.pattern.permute.xlu0 0
    %136 = vperm.xlu0 %135, %v129
    %v137 = vpop.permute.xlu0 %136
    %138 = vset.pattern.permute.xlu0 0
    %139 = vperm.xlu0 %138, %v130
    %v140 = vpop.permute.xlu0 %139
    %141 = vset.pattern.permute.xlu0 0
    %142 = vperm.xlu0 %141, %v131
    %v143 = vpop.permute.xlu0 %142
    %144 = vset.pattern.permute.xlu0 0
    %145 = vperm.xlu0 %144, %v132
    %v146 = vpop.permute.xlu0 %145
    %vm147 = vcmp.eq.s32.totalorder %v137, %v134
    %vm148 = vcmp.eq.s32.totalorder %v140, %v134
    %vm149 = vcmp.eq.s32.totalorder %v143, %v134
    %vm150 = vcmp.eq.s32.totalorder %v146, %v134
    %v151 = vsel %vm147, 1, 0
    %v152 = vsel %vm148, 1, 0
    %v153 = vsel %vm149, 1, 0
    %v154 = vsel %vm150, 1, 0
    %v155 = vcvt.s32.f32 %v151
    %v156 = vcvt.s32.f32 %v152
    %v157 = vcvt.s32.f32 %v153
    %v158 = vcvt.s32.f32 %v154
    %v159 = vpack.c.bf16 %v156, %v155
    %v160 = vpack.c.bf16 %v158, %v157
    %v161 = vld [vmem:[#allocation3] sm:$0xf]
    %v162 = vld [vmem:[#allocation3 + $0x4] sm:$0xf]
    %v163 = vld [vmem:[#allocation3 + $0x8] sm:$0xf]
    %v164 = vld [vmem:[#allocation3 + $0xc] sm:$0xf]
    %v165 = vld [vmem:[#allocation3 + $0x10] sm:$0xf]
    %v166 = vld [vmem:[#allocation3 + $0x14] sm:$0xf]
    %v167 = vld [vmem:[#allocation3 + $0x18] sm:$0xf]
    %v168 = vld [vmem:[#allocation3 + $0x1c] sm:$0xf]
    %v169 = vld [vmem:[#allocation3 + $0x20] sm:$0xf]
    %v170 = vld [vmem:[#allocation3 + $0x24] sm:$0xf]
    %v171 = vld [vmem:[#allocation3 + $0x28] sm:$0xf]
    %v172 = vld [vmem:[#allocation3 + $0x2c] sm:$0xf]
    %v173 = vld [vmem:[#allocation3 + $0x30] sm:$0xf]
    %v174 = vld [vmem:[#allocation3 + $0x34] sm:$0xf]
    %v175 = vld [vmem:[#allocation3 + $0x38] sm:$0xf]
    %v176 = vld [vmem:[#allocation3 + $0x3c] sm:$0xf]
    %v177 = vld [vmem:[#allocation6] sm:$0xff]
    %v178 = vld [vmem:[#allocation6 + $0x8] sm:$0xff]
    %v179 = vld [vmem:[#allocation6 + $0x10] sm:$0xff]
    %v180 = vld [vmem:[#allocation6 + $0x18] sm:$0xff]
    %v197 = vunpack.c.l.b16 %v161
    %v198 = vunpack.c.l.b16 %v162
    %v199 = vunpack.c.l.b16 %v163
    %v200 = vunpack.c.l.b16 %v164
    %v201 = vunpack.c.l.b16 %v165
    %v202 = vunpack.c.l.b16 %v166
    %v203 = vunpack.c.l.b16 %v167
    %v204 = vunpack.c.l.b16 %v168
    %v205 = vunpack.c.l.b16 %v169
    %v206 = vunpack.c.l.b16 %v170
    %v207 = vunpack.c.l.b16 %v171
    %v208 = vunpack.c.l.b16 %v172
    %v209 = vunpack.c.l.b16 %v173
    %v210 = vunpack.c.l.b16 %v174
    %v211 = vunpack.c.l.b16 %v175
    %v212 = vunpack.c.l.b16 %v176
    %v213 = vpack.c.b16 %v198, %v197
    %v214 = vpack.c.b16 %v200, %v199
    %v215 = vpack.c.b16 %v202, %v201
    %v216 = vpack.c.b16 %v204, %v203
    %v217 = vpack.c.b16 %v206, %v205
    %v218 = vpack.c.b16 %v208, %v207
    %v219 = vpack.c.b16 %v210, %v209
    %v220 = vpack.c.b16 %v212, %v211
    %229 = vmatprep.subr.bf16.mxu0 0
    %230 = vmatpush1.bf16.msra.mxu0 %v213
    %231 = vmatprep.subr.bf16.mxu0 0
    %232 = vmatpush1.bf16.msra.mxu0 %v214
    %233 = vmatprep.subr.bf16.mxu0 0
    %234 = vmatpush1.bf16.msra.mxu0 %v215
    %235 = vmatprep.subr.bf16.mxu0 0
    %236 = vmatpush1.bf16.msra.mxu0 %v216
    %237 = vmatprep.subr.bf16.mxu0 0
    %238 = vmatpush1.bf16.msra.mxu0 %v217
    %239 = vmatprep.subr.bf16.mxu0 0
    %240 = vmatpush1.bf16.msra.mxu0 %v218
    %241 = vmatprep.subr.bf16.mxu0 0
    %242 = vmatpush1.bf16.msra.mxu0 %v219
    %243 = vmatprep.subr.bf16.mxu0 0
    %244 = vmatpush1.bf16.msra.mxu0 %v220
    %245 = vmatprep.subr.bf16.mxu0 0
    %246 = vmatpush1.bf16.msra.mxu0 0
    %247 = vmatprep.subr.bf16.mxu0 0
    %248 = vmatpush1.bf16.msra.mxu0 0
    %249 = vmatprep.subr.bf16.mxu0 0
    %250 = vmatpush1.bf16.msra.mxu0 0
    %251 = vmatprep.subr.bf16.mxu0 0
    %252 = vmatpush1.bf16.msra.mxu0 0
    %253 = vmatprep.subr.bf16.mxu0 0
    %254 = vmatpush1.bf16.msra.mxu0 0
    %255 = vmatprep.subr.bf16.mxu0 0
    %256 = vmatpush1.bf16.msra.mxu0 0
    %257 = vmatprep.subr.bf16.mxu0 0
    %258 = vmatpush1.bf16.msra.mxu0 0
    %259 = vmatprep.subr.bf16.mxu0 0
    %260 = vmatpush1.bf16.msra.mxu0 0
    %261 = vmatprep.mubr.bf16.mxu0 0
    %262 = vmatmul.mubr.bf16.gmra.mrb[0].mxu0 %v159
    %v263 = vpop.f32.mrb[0].mxu0
    %v264 = vadd.f32 %v177, %v263
    %v265 = vpop.f32.mrb[0].mxu0
    %v266 = vpop.f32.mrb[0].mxu0
    %v267 = vadd.f32 %v178, %v266
    %v268 = vpop.f32.mrb[0].mxu0
    %269 = vmatprep.mubr.bf16.mxu0 0
    %270 = vmatmul.mubr.bf16.gmra.mrb[0].mxu0 %v160
    %v271 = vpop.f32.mrb[0].mxu0
    %v272 = vadd.f32 %v179, %v271
    %v273 = vpop.f32.mrb[0].mxu0
    %v274 = vpop.f32.mrb[0].mxu0
    %v275 = vadd.f32 %v180, %v274
    %v276 = vpop.f32.mrb[0].mxu0
    %277 = vdwg.mxu0
    %278 = vadd.xlane.f32.xlu0 %v264
    %v279 = vpop.xlane.xlu0 %278
    %280 = vadd.xlane.f32.xlu0 %v267
    %v281 = vpop.xlane.xlu0 %280
    %282 = vadd.xlane.f32.xlu0 %v272
    %v283 = vpop.xlane.xlu0 %282
    %284 = vadd.xlane.f32.xlu0 %v275
    %v285 = vpop.xlane.xlu0 %284
    %v286 = vrcp.pop 128.0
    %v287 = vmul.f32 %v279, %v286
    %v288 = vmul.f32 %v281, %v286
    %v289 = vmul.f32 %v283, %v286
    %v290 = vmul.f32 %v285, %v286
    %v291 = vsub.f32 %v264, %v287
    %v292 = vsub.f32 %v267, %v288
    %v293 = vsub.f32 %v272, %v289
    %v294 = vsub.f32 %v275, %v290
    %v295 = vmul.f32 %v291, %v291
    %v296 = vmul.f32 %v292, %v292
    %v297 = vmul.f32 %v293, %v293
    %v298 = vmul.f32 %v294, %v294
    %299 = vadd.xlane.f32.xlu0 %v295
    %v300 = vpop.xlane.xlu0 %299
    %301 = vadd.xlane.f32.xlu0 %v296
    %v302 = vpop.xlane.xlu0 %301
    %303 = vadd.xlane.f32.xlu0 %v297
    %v304 = vpop.xlane.xlu0 %303
    %305 = vadd.xlane.f32.xlu0 %v298
    %v306 = vpop.xlane.xlu0 %305
    %v307 = vmul.f32 %v300, %v286
    %v308 = vmul.f32 %v302, %v286
    %v309 = vmul.f32 %v304, %v286
    %v310 = vmul.f32 %v306, %v286
    %v311 = vadd.f32 %v307, 1e-12
    %v312 = vadd.f32 %v308, 1e-12
    %v313 = vadd.f32 %v309, 1e-12
    %v314 = vadd.f32 %v310, 1e-12
    %v315 = vrsqrt.pop %v311
    %v316 = vrsqrt.pop %v312
    %v317 = vrsqrt.pop %v313
    %v318 = vrsqrt.pop %v314
    %v319 = vmul.f32 %v291, %v315
    %v320 = vmul.f32 %v292, %v316
    %v321 = vmul.f32 %v293, %v317
    %v322 = vmul.f32 %v294, %v318
    %v323 = vld [vmem:[#allocation8] sm:$0x1]
    %v325 = vlaneseq
    %v326 = vshrl.u32 %v325, 7
    %v327 = vsub.s32 0, %v326
    %v328 = vrot.slane %v323, %v327
    %v330 = vmul.f32 %v319, %v328
    %v331 = vmul.f32 %v320, %v328
    %v332 = vmul.f32 %v321, %v328
    %v333 = vmul.f32 %v322, %v328
    %v334 = vld [vmem:[#allocation9] sm:$0x1]
    %v336 = vlaneseq
    %v337 = vshrl.u32 %v336, 7
    %v338 = vsub.s32 0, %v337
    %v339 = vrot.slane %v334, %v338
    %v341 = vadd.f32 %v330, %v339
    %v342 = vadd.f32 %v331, %v339
    %v343 = vadd.f32 %v332, %v339
    %v344 = vadd.f32 %v333, %v339
    %v345 = vpack.c.bf16 %v342, %v341
    %v346 = vpack.c.bf16 %v344, %v343
    %v347 = vld [vmem:[#allocation11] sm:$0xff]
    %v348 = vld [vmem:[#allocation11 + $0x8] sm:$0xf]
    %v349 = vld [vmem:[#allocation11 + $0xc] sm:$0xff]
    %v350 = vld [vmem:[#allocation11 + $0x14] sm:$0xf]
    %v351 = vld [vmem:[#allocation11 + $0x18] sm:$0xff]
    %v352 = vld [vmem:[#allocation11 + $0x20] sm:$0xf]
    %v353 = vld [vmem:[#allocation11 + $0x24] sm:$0xff]
    %v354 = vld [vmem:[#allocation11 + $0x2c] sm:$0xf]
    %v355 = vld [vmem:[#allocation11 + $0x30] sm:$0xff]
    %v356 = vld [vmem:[#allocation11 + $0x38] sm:$0xf]
    %v357 = vld [vmem:[#allocation11 + $0x3c] sm:$0xff]
    %v358 = vld [vmem:[#allocation11 + $0x44] sm:$0xf]
    %v359 = vld [vmem:[#allocation11 + $0x48] sm:$0xff]
    %v360 = vld [vmem:[#allocation11 + $0x50] sm:$0xf]
    %v361 = vld [vmem:[#allocation11 + $0x54] sm:$0xff]
    %v362 = vld [vmem:[#allocation11 + $0x5c] sm:$0xf]
    %v363 = vld [vmem:[#allocation11 + $0x60] sm:$0xff]
    %v364 = vld [vmem:[#allocation11 + $0x68] sm:$0xf]
    %v365 = vld [vmem:[#allocation11 + $0x6c] sm:$0xff]
    %v366 = vld [vmem:[#allocation11 + $0x74] sm:$0xf]
    %v367 = vld [vmem:[#allocation11 + $0x78] sm:$0xff]
    %v368 = vld [vmem:[#allocation11 + $0x80] sm:$0xf]
    %v369 = vld [vmem:[#allocation11 + $0x84] sm:$0xff]
    %v370 = vld [vmem:[#allocation11 + $0x8c] sm:$0xf]
    %v371 = vld [vmem:[#allocation11 + $0x90] sm:$0xff]
    %v372 = vld [vmem:[#allocation11 + $0x98] sm:$0xf]
    %v373 = vld [vmem:[#allocation11 + $0x9c] sm:$0xff]
    %v374 = vld [vmem:[#allocation11 + $0xa4] sm:$0xf]
    %v375 = vld [vmem:[#allocation11 + $0xa8] sm:$0xff]
    %v376 = vld [vmem:[#allocation11 + $0xb0] sm:$0xf]
    %v377 = vld [vmem:[#allocation11 + $0xb4] sm:$0xff]
    %v378 = vld [vmem:[#allocation11 + $0xbc] sm:$0xf]
    %v379 = vld [vmem:[%s6] sm:$0x7]
    %v381 = vlaneseq
    %v382 = vshrl.u32 %v381, 7
    %v383 = vsub.s32 0, %v382
    %v384 = vrot.slane %v379, %v383
    %v385 = vlaneseq
    %v386 = vshrl.u32 %v385, 7
    %v387 = vsub.s32 1, %v386
    %v388 = vrot.slane %v379, %v387
    %v389 = vlaneseq
    %v390 = vshrl.u32 %v389, 7
    %v391 = vsub.s32 2, %v390
    %v392 = vrot.slane %v379, %v391
    %v428 = vunpack.c.l.b16 %v347
    %v429 = vunpack.c.h.b16 %v347
    %v430 = vunpack.c.l.b16 %v348
    %v431 = vunpack.c.l.b16 %v349
    %v432 = vunpack.c.h.b16 %v349
    %v433 = vunpack.c.l.b16 %v350
    %v434 = vunpack.c.l.b16 %v351
    %v435 = vunpack.c.h.b16 %v351
    %v436 = vunpack.c.l.b16 %v352
    %v437 = vunpack.c.l.b16 %v353
    %v438 = vunpack.c.h.b16 %v353
    %v439 = vunpack.c.l.b16 %v354
    %v440 = vunpack.c.l.b16 %v355
    %v441 = vunpack.c.h.b16 %v355
    %v442 = vunpack.c.l.b16 %v356
    %v443 = vunpack.c.l.b16 %v357
    %v444 = vunpack.c.h.b16 %v357
    %v445 = vunpack.c.l.b16 %v358
    %v446 = vunpack.c.l.b16 %v359
    %v447 = vunpack.c.h.b16 %v359
    %v448 = vunpack.c.l.b16 %v360
    %v449 = vunpack.c.l.b16 %v361
    %v450 = vunpack.c.h.b16 %v361
    %v451 = vunpack.c.l.b16 %v362
    %v452 = vunpack.c.l.b16 %v363
    %v453 = vunpack.c.h.b16 %v363
    %v454 = vunpack.c.l.b16 %v364
    %v455 = vunpack.c.l.b16 %v365
    %v456 = vunpack.c.h.b16 %v365
    %v457 = vunpack.c.l.b16 %v366
    %v458 = vunpack.c.l.b16 %v367
    %v459 = vunpack.c.h.b16 %v367
    %v460 = vunpack.c.l.b16 %v368
    %v461 = vunpack.c.l.b16 %v369
    %v462 = vunpack.c.h.b16 %v369
    %v463 = vunpack.c.l.b16 %v370
    %v464 = vunpack.c.l.b16 %v371
    %v465 = vunpack.c.h.b16 %v371
    %v466 = vunpack.c.l.b16 %v372
    %v467 = vunpack.c.l.b16 %v373
    %v468 = vunpack.c.h.b16 %v373
    %v469 = vunpack.c.l.b16 %v374
    %v470 = vunpack.c.l.b16 %v375
    %v471 = vunpack.c.h.b16 %v375
    %v472 = vunpack.c.l.b16 %v376
    %v473 = vunpack.c.l.b16 %v377
    %v474 = vunpack.c.h.b16 %v377
    %v475 = vunpack.c.l.b16 %v378
    %v476 = vpack.c.b16 %v431, %v428
    %v477 = vpack.c.b16 %v432, %v429
    %v478 = vpack.c.b16 %v433, %v430
    %v479 = vpack.c.b16 %v437, %v434
    %v480 = vpack.c.b16 %v438, %v435
    %v481 = vpack.c.b16 %v439, %v436
    %v482 = vpack.c.b16 %v443, %v440
    %v483 = vpack.c.b16 %v444, %v441
    %v484 = vpack.c.b16 %v445, %v442
    %v485 = vpack.c.b16 %v449, %v446
    %v486 = vpack.c.b16 %v450, %v447
    %v487 = vpack.c.b16 %v451, %v448
    %v488 = vpack.c.b16 %v455, %v452
    %v489 = vpack.c.b16 %v456, %v453
    %v490 = vpack.c.b16 %v457, %v454
    %v491 = vpack.c.b16 %v461, %v458
    %v492 = vpack.c.b16 %v462, %v459
    %v493 = vpack.c.b16 %v463, %v460
    %v494 = vpack.c.b16 %v467, %v464
    %v495 = vpack.c.b16 %v468, %v465
    %v496 = vpack.c.b16 %v469, %v466
    %v497 = vpack.c.b16 %v473, %v470
    %v498 = vpack.c.b16 %v474, %v471
    %v499 = vpack.c.b16 %v475, %v472
    %524 = vmatprep.subr.bf16.mxu0 %v477
    %525 = vmatpush1.bf16.msra.mxu0 %v476
    %526 = vmatprep.subr.bf16.mxu0 %v480
    %527 = vmatpush1.bf16.msra.mxu0 %v479
    %528 = vmatprep.subr.bf16.mxu0 %v483
    %529 = vmatpush1.bf16.msra.mxu0 %v482
    %530 = vmatprep.subr.bf16.mxu0 %v486
    %531 = vmatpush1.bf16.msra.mxu0 %v485
    %532 = vmatprep.subr.bf16.mxu0 %v489
    %533 = vmatpush1.bf16.msra.mxu0 %v488
    %534 = vmatprep.subr.bf16.mxu0 %v492
    %535 = vmatpush1.bf16.msra.mxu0 %v491
    %536 = vmatprep.subr.bf16.mxu0 %v495
    %537 = vmatpush1.bf16.msra.mxu0 %v494
    %538 = vmatprep.subr.bf16.mxu0 %v498
    %539 = vmatpush1.bf16.msra.mxu0 %v497
    %540 = vmatprep.subr.bf16.mxu0 0
    %541 = vmatpush1.bf16.msra.mxu0 0
    %542 = vmatprep.subr.bf16.mxu0 0
    %543 = vmatpush1.bf16.msra.mxu0 0
    %544 = vmatprep.subr.bf16.mxu0 0
    %545 = vmatpush1.bf16.msra.mxu0 0
    %546 = vmatprep.subr.bf16.mxu0 0
    %547 = vmatpush1.bf16.msra.mxu0 0
    %548 = vmatprep.subr.bf16.mxu0 0
    %549 = vmatpush1.bf16.msra.mxu0 0
    %550 = vmatprep.subr.bf16.mxu0 0
    %551 = vmatpush1.bf16.msra.mxu0 0
    %552 = vmatprep.subr.bf16.mxu0 0
    %553 = vmatpush1.bf16.msra.mxu0 0
    %554 = vmatprep.subr.bf16.mxu0 0
    %555 = vmatpush1.bf16.msra.mxu0 0
    %556 = vmatprep.mubr.bf16.mxu0 0
    %557 = vmatmul.mubr.bf16.gmra.mrb[0].mxu0 %v345
    %v558 = vpop.f32.mrb[0].mxu0
    %v559 = vadd.f32 %v384, %v558
    %v560 = vpop.f32.mrb[0].mxu0
    %v561 = vadd.f32 %v388, %v560
    %v562 = vpop.f32.mrb[0].mxu0
    %v563 = vadd.f32 %v384, %v562
    %v564 = vpop.f32.mrb[0].mxu0
    %v565 = vadd.f32 %v388, %v564
    %566 = vmatprep.mubr.bf16.mxu0 0
    %567 = vmatmul.mubr.bf16.gmra.mrb[0].mxu0 %v346
    %v568 = vpop.f32.mrb[0].mxu0
    %v569 = vadd.f32 %v384, %v568
    %v570 = vpop.f32.mrb[0].mxu0
    %v571 = vadd.f32 %v388, %v570
    %v572 = vpop.f32.mrb[0].mxu0
    %v573 = vadd.f32 %v384, %v572
    %v574 = vpop.f32.mrb[0].mxu0
    %v575 = vadd.f32 %v388, %v574
    %576 = vdwg.mxu0
    %577 = vmatprep.subr.bf16.mxu0 0
    %578 = vmatpush1.bf16.msra.mxu0 %v478
    %579 = vmatprep.subr.bf16.mxu0 0
    %580 = vmatpush1.bf16.msra.mxu0 %v481
    %581 = vmatprep.subr.bf16.mxu0 0
    %582 = vmatpush1.bf16.msra.mxu0 %v484
    %583 = vmatprep.subr.bf16.mxu0 0
    %584 = vmatpush1.bf16.msra.mxu0 %v487
    %585 = vmatprep.subr.bf16.mxu0 0
    %586 = vmatpush1.bf16.msra.mxu0 %v490
    %587 = vmatprep.subr.bf16.mxu0 0
    %588 = vmatpush1.bf16.msra.mxu0 %v493
    %589 = vmatprep.subr.bf16.mxu0 0
    %590 = vmatpush1.bf16.msra.mxu0 %v496
    %591 = vmatprep.subr.bf16.mxu0 0
    %592 = vmatpush1.bf16.msra.mxu0 %v499
    %593 = vmatprep.subr.bf16.mxu0 0
    %594 = vmatpush1.bf16.msra.mxu0 0
    %595 = vmatprep.subr.bf16.mxu0 0
    %596 = vmatpush1.bf16.msra.mxu0 0
    %597 = vmatprep.subr.bf16.mxu0 0
    %598 = vmatpush1.bf16.msra.mxu0 0
    %599 = vmatprep.subr.bf16.mxu0 0
    %600 = vmatpush1.bf16.msra.mxu0 0
    %601 = vmatprep.subr.bf16.mxu0 0
    %602 = vmatpush1.bf16.msra.mxu0 0
    %603 = vmatprep.subr.bf16.mxu0 0
    %604 = vmatpush1.bf16.msra.mxu0 0
    %605 = vmatprep.subr.bf16.mxu0 0
    %606 = vmatpush1.bf16.msra.mxu0 0
    %607 = vmatprep.subr.bf16.mxu0 0
    %608 = vmatpush1.bf16.msra.mxu0 0
    %609 = vmatprep.mubr.bf16.mxu0 0
    %610 = vmatmul.mubr.bf16.gmra.mrb[0].mxu0 %v345
    %v611 = vpop.f32.mrb[0].mxu0
    %v612 = vadd.f32 %v392, %v611
    %v613 = vpop.f32.mrb[0].mxu0
    %v614 = vpop.f32.mrb[0].mxu0
    %v615 = vadd.f32 %v392, %v614
    %v616 = vpop.f32.mrb[0].mxu0
    %617 = vmatprep.mubr.bf16.mxu0 0
    %618 = vmatmul.mubr.bf16.gmra.mrb[0].mxu0 %v346
    %v619 = vpop.f32.mrb[0].mxu0
    %v620 = vadd.f32 %v392, %v619
    %v621 = vpop.f32.mrb[0].mxu0
    %v622 = vpop.f32.mrb[0].mxu0
    %v623 = vadd.f32 %v392, %v622
    %v624 = vpop.f32.mrb[0].mxu0
    %625 = vdwg.mxu0
    %626 = vst [vmem:[#allocation2] sm:$0xff] %v559
    %627 = vst [vmem:[#allocation2 + $0x8] sm:$0xff] %v561
    %628 = vst [vmem:[#allocation2 + $0x10] sm:$0xff] %v612
    %629 = vst [vmem:[#allocation2 + $0x18] sm:$0xff] %v563
    %630 = vst [vmem:[#allocation2 + $0x20] sm:$0xff] %v565
    %631 = vst [vmem:[#allocation2 + $0x28] sm:$0xff] %v615
    %632 = vst [vmem:[#allocation2 + $0x30] sm:$0xff] %v569
    %633 = vst [vmem:[#allocation2 + $0x38] sm:$0xff] %v571
    %634 = vst [vmem:[#allocation2 + $0x40] sm:$0xff] %v620
    %635 = vst [vmem:[#allocation2 + $0x48] sm:$0xff] %v573
    %636 = vst [vmem:[#allocation2 + $0x50] sm:$0xff] %v575
    %637 = vst [vmem:[#allocation2 + $0x58] sm:$0xff] %v623
    %v638 = vld [vmem:[#allocation12] sm:$0xff]
    %v639 = vld [vmem:[#allocation12 + $0x8] sm:$0xf]
    %v640 = vld [vmem:[#allocation12 + $0xc] sm:$0xff]
    %v641 = vld [vmem:[#allocation12 + $0x14] sm:$0xf]
    %v642 = vld [vmem:[#allocation12 + $0x18] sm:$0xff]
    %v643 = vld [vmem:[#allocation12 + $0x20] sm:$0xf]
    %v644 = vld [vmem:[#allocation12 + $0x24] sm:$0xff]
    %v645 = vld [vmem:[#allocation12 + $0x2c] sm:$0xf]
    %v646 = vld [vmem:[#allocation12 + $0x30] sm:$0xff]
    %v647 = vld [vmem:[#allocation12 + $0x38] sm:$0xf]
    %v648 = vld [vmem:[#allocation12 + $0x3c] sm:$0xff]
    %v649 = vld [vmem:[#allocation12 + $0x44] sm:$0xf]
    %v650 = vld [vmem:[#allocation12 + $0x48] sm:$0xff]
    %v651 = vld [vmem:[#allocation12 + $0x50] sm:$0xf]
    %v652 = vld [vmem:[#allocation12 + $0x54] sm:$0xff]
    %v653 = vld [vmem:[#allocation12 + $0x5c] sm:$0xf]
    %v654 = vld [vmem:[#allocation12 + $0x60] sm:$0xff]
    %v655 = vld [vmem:[#allocation12 + $0x68] sm:$0xf]
    %v656 = vld [vmem:[#allocation12 + $0x6c] sm:$0xff]
    %v657 = vld [vmem:[#allocation12 + $0x74] sm:$0xf]
    %v658 = vld [vmem:[#allocation12 + $0x78] sm:$0xff]
    %v659 = vld [vmem:[#allocation12 + $0x80] sm:$0xf]
    %v660 = vld [vmem:[#allocation12 + $0x84] sm:$0xff]
    %v661 = vld [vmem:[#allocation12 + $0x8c] sm:$0xf]
    %v662 = vld [vmem:[#allocation12 + $0x90] sm:$0xff]
    %v663 = vld [vmem:[#allocation12 + $0x98] sm:$0xf]
    %v664 = vld [vmem:[#allocation12 + $0x9c] sm:$0xff]
    %v665 = vld [vmem:[#allocation12 + $0xa4] sm:$0xf]
    %v666 = vld [vmem:[#allocation12 + $0xa8] sm:$0xff]
    %v667 = vld [vmem:[#allocation12 + $0xb0] sm:$0xf]
    %v668 = vld [vmem:[#allocation12 + $0xb4] sm:$0xff]
    %v669 = vld [vmem:[#allocation12 + $0xbc] sm:$0xf]
    %v670 = vld [vmem:[#allocation14] sm:$0x7]
    %v671 = vld [vmem:[#allocation2] sm:$0x3]
    %v672 = vld [vmem:[#allocation2 + $0x8] sm:$0x3]
    %v673 = vld [vmem:[#allocation2 + $0x10] sm:$0x3]
    %v675 = vlaneseq
    %v676 = vshrl.u32 %v675, 7
    %v677 = vsub.s32 0, %v676
    %v678 = vrot.slane %v670, %v677
    %v679 = vlaneseq
    %v680 = vshrl.u32 %v679, 7
    %v681 = vsub.s32 1, %v680
    %v682 = vrot.slane %v670, %v681
    %v683 = vlaneseq
    %v684 = vshrl.u32 %v683, 7
    %v685 = vsub.s32 2, %v684
    %v686 = vrot.slane %v670, %v685
    %v722 = vunpack.c.l.b16 %v638
    %v723 = vunpack.c.h.b16 %v638
    %v724 = vunpack.c.l.b16 %v639
    %v725 = vunpack.c.l.b16 %v640
    %v726 = vunpack.c.h.b16 %v640
    %v727 = vunpack.c.l.b16 %v641
    %v728 = vunpack.c.l.b16 %v642
    %v729 = vunpack.c.h.b16 %v642
    %v730 = vunpack.c.l.b16 %v643
    %v731 = vunpack.c.l.b16 %v644
    %v732 = vunpack.c.h.b16 %v644
    %v733 = vunpack.c.l.b16 %v645
    %v734 = vunpack.c.l.b16 %v646
    %v735 = vunpack.c.h.b16 %v646
    %v736 = vunpack.c.l.b16 %v647
    %v737 = vunpack.c.l.b16 %v648
    %v738 = vunpack.c.h.b16 %v648
    %v739 = vunpack.c.l.b16 %v649
    %v740 = vunpack.c.l.b16 %v650
    %v741 = vunpack.c.h.b16 %v650
    %v742 = vunpack.c.l.b16 %v651
    %v743 = vunpack.c.l.b16 %v652
    %v744 = vunpack.c.h.b16 %v652
    %v745 = vunpack.c.l.b16 %v653
    %v746 = vunpack.c.l.b16 %v654
    %v747 = vunpack.c.h.b16 %v654
    %v748 = vunpack.c.l.b16 %v655
    %v749 = vunpack.c.l.b16 %v656
    %v750 = vunpack.c.h.b16 %v656
    %v751 = vunpack.c.l.b16 %v657
    %v752 = vunpack.c.l.b16 %v658
    %v753 = vunpack.c.h.b16 %v658
    %v754 = vunpack.c.l.b16 %v659
    %v755 = vunpack.c.l.b16 %v660
    %v756 = vunpack.c.h.b16 %v660
    %v757 = vunpack.c.l.b16 %v661
    %v758 = vunpack.c.l.b16 %v662
    %v759 = vunpack.c.h.b16 %v662
    %v760 = vunpack.c.l.b16 %v663
    %v761 = vunpack.c.l.b16 %v664
    %v762 = vunpack.c.h.b16 %v664
    %v763 = vunpack.c.l.b16 %v665
    %v764 = vunpack.c.l.b16 %v666
    %v765 = vunpack.c.h.b16 %v666
    %v766 = vunpack.c.l.b16 %v667
    %v767 = vunpack.c.l.b16 %v668
    %v768 = vunpack.c.h.b16 %v668
    %v769 = vunpack.c.l.b16 %v669
    %v770 = vpack.c.b16 %v725, %v722
    %v771 = vpack.c.b16 %v726, %v723
    %v772 = vpack.c.b16 %v727, %v724
    %v773 = vpack.c.b16 %v731, %v728
    %v774 = vpack.c.b16 %v732, %v729
    %v775 = vpack.c.b16 %v733, %v730
    %v776 = vpack.c.b16 %v737, %v734
    %v777 = vpack.c.b16 %v738, %v735
    %v778 = vpack.c.b16 %v739, %v736
    %v779 = vpack.c.b16 %v743, %v740
    %v780 = vpack.c.b16 %v744, %v741
    %v781 = vpack.c.b16 %v745, %v742
    %v782 = vpack.c.b16 %v749, %v746
    %v783 = vpack.c.b16 %v750, %v747
    %v784 = vpack.c.b16 %v751, %v748
    %v785 = vpack.c.b16 %v755, %v752
    %v786 = vpack.c.b16 %v756, %v753
    %v787 = vpack.c.b16 %v757, %v754
    %v788 = vpack.c.b16 %v761, %v758
    %v789 = vpack.c.b16 %v762, %v759
    %v790 = vpack.c.b16 %v763, %v760
    %v791 = vpack.c.b16 %v767, %v764
    %v792 = vpack.c.b16 %v768, %v765
    %v793 = vpack.c.b16 %v769, %v766
    %818 = vmatprep.subr.bf16.mxu0 %v771
    %819 = vmatpush1.bf16.msra.mxu0 %v770
    %820 = vmatprep.subr.bf16.mxu0 %v774
    %821 = vmatpush1.bf16.msra.mxu0 %v773
    %822 = vmatprep.subr.bf16.mxu0 %v777
    %823 = vmatpush1.bf16.msra.mxu0 %v776
    %824 = vmatprep.subr.bf16.mxu0 %v780
    %825 = vmatpush1.bf16.msra.mxu0 %v779
    %826 = vmatprep.subr.bf16.mxu0 %v783
    %827 = vmatpush1.bf16.msra.mxu0 %v782
    %828 = vmatprep.subr.bf16.mxu0 %v786
    %829 = vmatpush1.bf16.msra.mxu0 %v785
    %830 = vmatprep.subr.bf16.mxu0 %v789
    %831 = vmatpush1.bf16.msra.mxu0 %v788
    %832 = vmatprep.subr.bf16.mxu0 %v792
    %833 = vmatpush1.bf16.msra.mxu0 %v791
    %834 = vmatprep.subr.bf16.mxu0 0
    %835 = vmatpush1.bf16.msra.mxu0 0
    %836 = vmatprep.subr.bf16.mxu0 0
    %837 = vmatpush1.bf16.msra.mxu0 0
    %838 = vmatprep.subr.bf16.mxu0 0
    %839 = vmatpush1.bf16.msra.mxu0 0
    %840 = vmatprep.subr.bf16.mxu0 0
    %841 = vmatpush1.bf16.msra.mxu0 0
    %842 = vmatprep.subr.bf16.mxu0 0
    %843 = vmatpush1.bf16.msra.mxu0 0
    %844 = vmatprep.subr.bf16.mxu0 0
    %845 = vmatpush1.bf16.msra.mxu0 0
    %846 = vmatprep.subr.bf16.mxu0 0
    %847 = vmatpush1.bf16.msra.mxu0 0
    %848 = vmatprep.subr.bf16.mxu0 0
    %849 = vmatpush1.bf16.msra.mxu0 0
    %850 = vmatprep.mubr.bf16.mxu0 0
    %851 = vmatmul.mubr.bf16.gmra.mrb[0].mxu0 0
    %v852 = vpop.f32.mrb[0].mxu0
    %v853 = vadd.f32 %v678, %v852
    %v854 = vpop.f32.mrb[0].mxu0
    %v855 = vadd.f32 %v682, %v854
    %v856 = vpop.f32.mrb[0].mxu0
    %v857 = vpop.f32.mrb[0].mxu0
    %858 = vdwg.mxu0
    %859 = vmatprep.subr.bf16.mxu0 0
    %860 = vmatpush1.bf16.msra.mxu0 %v772
    %861 = vmatprep.subr.bf16.mxu0 0
    %862 = vmatpush1.bf16.msra.mxu0 %v775
    %863 = vmatprep.subr.bf16.mxu0 0
    %864 = vmatpush1.bf16.msra.mxu0 %v778
    %865 = vmatprep.subr.bf16.mxu0 0
    %866 = vmatpush1.bf16.msra.mxu0 %v781
    %867 = vmatprep.subr.bf16.mxu0 0
    %868 = vmatpush1.bf16.msra.mxu0 %v784
    %869 = vmatprep.subr.bf16.mxu0 0
    %870 = vmatpush1.bf16.msra.mxu0 %v787
    %871 = vmatprep.subr.bf16.mxu0 0
    %872 = vmatpush1.bf16.msra.mxu0 %v790
    %873 = vmatprep.subr.bf16.mxu0 0
    %874 = vmatpush1.bf16.msra.mxu0 %v793
    %875 = vmatprep.subr.bf16.mxu0 0
    %876 = vmatpush1.bf16.msra.mxu0 0
    %877 = vmatprep.subr.bf16.mxu0 0
    %878 = vmatpush1.bf16.msra.mxu0 0
    %879 = vmatprep.subr.bf16.mxu0 0
    %880 = vmatpush1.bf16.msra.mxu0 0
    %881 = vmatprep.subr.bf16.mxu0 0
    %882 = vmatpush1.bf16.msra.mxu0 0
    %883 = vmatprep.subr.bf16.mxu0 0
    %884 = vmatpush1.bf16.msra.mxu0 0
    %885 = vmatprep.subr.bf16.mxu0 0
    %886 = vmatpush1.bf16.msra.mxu0 0
    %887 = vmatprep.subr.bf16.mxu0 0
    %888 = vmatpush1.bf16.msra.mxu0 0
    %889 = vmatprep.subr.bf16.mxu0 0
    %890 = vmatpush1.bf16.msra.mxu0 0
    %891 = vmatprep.mubr.bf16.mxu0 0
    %892 = vmatmul.mubr.bf16.gmra.mrb[0].mxu0 0
    %v893 = vpop.f32.mrb[0].mxu0
    %v894 = vadd.f32 %v686, %v893
    %v895 = vpop.f32.mrb[0].mxu0
    %v896 = vpop.f32.mrb[0].mxu0
    %v897 = vpop.f32.mrb[0].mxu0
    %898 = vdwg.mxu0
    %v899 = vadd.f32 %v671, %v853
    %v900 = vxor.u32 %v899, 2147483648
    %v901 = vmul.f32 %v900, 1.442695
    %v902 = vpow.pop %v901
    %v903 = vadd.f32 %v902, 1.0
    %v904 = vrcp.pop %v903
    %v905 = vmul.f32 1.0, %v904
    %v906 = vadd.f32 %v672, %v855
    %v907 = vxor.u32 %v906, 2147483648
    %v908 = vmul.f32 %v907, 1.442695
    %v909 = vpow.pop %v908
    %v910 = vadd.f32 %v909, 1.0
    %v911 = vrcp.pop %v910
    %v912 = vmul.f32 1.0, %v911
    %v913 = vmul.f32 %v905, %v894
    %v914 = vadd.f32 %v673, %v913
    %v915 = vtanh.pop %v914
    %v916 = vsub.f32 1.0, %v912
    %v917 = vmul.f32 %v916, %v915
    %v918 = vmul.f32 %v912, 0.0
    %v919 = vadd.f32 %v917, %v918
    %v920 = vld [vmem:[#allocation2] sm:$0xc]
    %v921 = vld [vmem:[#allocation2 + $0x8] sm:$0xc]
    %v922 = vld [vmem:[#allocation2 + $0x10] sm:$0xc]
    %v923 = vpack.c.bf16 %v919, %v919
    %924 = vmatprep.subr.bf16.mxu0 %v771
    %925 = vmatpush1.bf16.msra.mxu0 %v770
    %926 = vmatprep.subr.bf16.mxu0 %v774
    %927 = vmatpush1.bf16.msra.mxu0 %v773
    %928 = vmatprep.subr.bf16.mxu0 %v777
    %929 = vmatpush1.bf16.msra.mxu0 %v776
    %930 = vmatprep.subr.bf16.mxu0 %v780
    %931 = vmatpush1.bf16.msra.mxu0 %v779
    %932 = vmatprep.subr.bf16.mxu0 %v783
    %933 = vmatpush1.bf16.msra.mxu0 %v782
    %934 = vmatprep.subr.bf16.mxu0 %v786
    %935 = vmatpush1.bf16.msra.mxu0 %v785
    %936 = vmatprep.subr.bf16.mxu0 %v789
    %937 = vmatpush1.bf16.msra.mxu0 %v788
    %938 = vmatprep.subr.bf16.mxu0 %v792
    %939 = vmatpush1.bf16.msra.mxu0 %v791
    %940 = vmatprep.subr.bf16.mxu0 0
    %941 = vmatpush1.bf16.msra.mxu0 0
    %942 = vmatprep.subr.bf16.mxu0 0
    %943 = vmatpush1.bf16.msra.mxu0 0
    %944 = vmatprep.subr.bf16.mxu0 0
    %945 = vmatpush1.bf16.msra.mxu0 0
    %946 = vmatprep.subr.bf16.mxu0 0
    %947 = vmatpush1.bf16.msra.mxu0 0
    %948 = vmatprep.subr.bf16.mxu0 0
    %949 = vmatpush1.bf16.msra.mxu0 0
    %950 = vmatprep.subr.bf16.mxu0 0
    %951 = vmatpush1.bf16.msra.mxu0 0
    %952 = vmatprep.subr.bf16.mxu0 0
    %953 = vmatpush1.bf16.msra.mxu0 0
    %954 = vmatprep.subr.bf16.mxu0 0
    %955 = vmatpush1.bf16.msra.mxu0 0
    %956 = vmatprep.mubr.bf16.mxu0 0
    %957 = vmatmul.mubr.bf16.gmra.mrb[0].mxu0 %v923
    %v958 = vpop.f32.mrb[0].mxu0
    %v959 = vadd.f32 %v678, %v958
    %v960 = vpop.f32.mrb[0].mxu0
    %v961 = vadd.f32 %v682, %v960
    %v962 = vpop.f32.mrb[0].mxu0
    %v963 = vpop.f32.mrb[0].mxu0
    %964 = vdwg.mxu0
    %965 = vmatprep.subr.bf16.mxu0 0
    %966 = vmatpush1.bf16.msra.mxu0 %v772
    %967 = vmatprep.subr.bf16.mxu0 0
    %968 = vmatpush1.bf16.msra.mxu0 %v775
    %969 = vmatprep.subr.bf16.mxu0 0
    %970 = vmatpush1.bf16.msra.mxu0 %v778
    %971 = vmatprep.subr.bf16.mxu0 0
    %972 = vmatpush1.bf16.msra.mxu0 %v781
    %973 = vmatprep.subr.bf16.mxu0 0
    %974 = vmatpush1.bf16.msra.mxu0 %v784
    %975 = vmatprep.subr.bf16.mxu0 0
    %976 = vmatpush1.bf16.msra.mxu0 %v787
    %977 = vmatprep.subr.bf16.mxu0 0
    %978 = vmatpush1.bf16.msra.mxu0 %v790
    %979 = vmatprep.subr.bf16.mxu0 0
    %980 = vmatpush1.bf16.msra.mxu0 %v793
    %981 = vmatprep.subr.bf16.mxu0 0
    %982 = vmatpush1.bf16.msra.mxu0 0
    %983 = vmatprep.subr.bf16.mxu0 0
    %984 = vmatpush1.bf16.msra.mxu0 0
    %985 = vmatprep.subr.bf16.mxu0 0
    %986 = vmatpush1.bf16.msra.mxu0 0
    %987 = vmatprep.subr.bf16.mxu0 0
    %988 = vmatpush1.bf16.msra.mxu0 0
    %989 = vmatprep.subr.bf16.mxu0 0
    %990 = vmatpush1.bf16.msra.mxu0 0
    %991 = vmatprep.subr.bf16.mxu0 0
    %992 = vmatpush1.bf16.msra.mxu0 0
    %993 = vmatprep.subr.bf16.mxu0 0
    %994 = vmatpush1.bf16.msra.mxu0 0
    %995 = vmatprep.subr.bf16.mxu0 0
    %996 = vmatpush1.bf16.msra.mxu0 0
    %997 = vmatprep.mubr.bf16.mxu0 0
    %998 = vmatmul.mubr.bf16.gmra.mrb[0].mxu0 %v923
    %v999 = vpop.f32.mrb[0].mxu0
    %v1000 = vadd.f32 %v686, %v999
    %v1001 = vpop.f32.mrb[0].mxu0
    %v1002 = vpop.f32.mrb[0].mxu0
    %v1003 = vpop.f32.mrb[0].mxu0
    %1004 = vdwg.mxu0
    %v1006 = vrot.slane %v959, 6
    %v1008 = vadd.f32 %v920, %v1006
    %v1009 = vxor.u32 %v1008, 2147483648
    %v1010 = vmul.f32 %v1009, 1.442695
    %v1011 = vpow.pop %v1010
    %v1012 = vadd.f32 %v1011, 1.0
    %v1013 = vrcp.pop %v1012
    %v1014 = vmul.f32 1.0, %v1013
    %v1016 = vrot.slane %v961, 6
    %v1018 = vadd.f32 %v921, %v1016
    %v1019 = vxor.u32 %v1018, 2147483648
    %v1020 = vmul.f32 %v1019, 1.442695
    %v1021 = vpow.pop %v1020
    %v1022 = vadd.f32 %v1021, 1.0
    %v1023 = vrcp.pop %v1022
    %v1024 = vmul.f32 1.0, %v1023
    %v1026 = vrot.slane %v1000, 6
    %v1028 = vmul.f32 %v1014, %v1026
    %v1029 = vadd.f32 %v922, %v1028
    %v1030 = vtanh.pop %v1029
    %v1031 = vsub.f32 1.0, %v1024
    %v1032 = vmul.f32 %v1031, %v1030
    %v1034 = vrot.slane %v919, 6
    %v1036 = vmul.f32 %v1024, %v1034
    %v1037 = vadd.f32 %v1032, %v1036
    %v1038 = vld [vmem:[#allocation2] sm:$0x30]
    %v1039 = vld [vmem:[#allocation2 + $0x8] sm:$0x30]
    %v1040 = vld [vmem:[#allocation2 + $0x10] sm:$0x30]
    %v1041 = vpack.c.bf16 %v1037, %v1037
    %v1043 = vrot.slane %v1041, 1
    %1045 = vmatprep.subr.bf16.mxu0 %v771
    %1046 = vmatpush1.bf16.msra.mxu0 %v770
    %1047 = vmatprep.subr.bf16.mxu0 %v774
    %1048 = vmatpush1.bf16.msra.mxu0 %v773
    %1049 = vmatprep.subr.bf16.mxu0 %v777
    %1050 = vmatpush1.bf16.msra.mxu0 %v776
    %1051 = vmatprep.subr.bf16.mxu0 %v780
    %1052 = vmatpush1.bf16.msra.mxu0 %v779
    %1053 = vmatprep.subr.bf16.mxu0 %v783
    %1054 = vmatpush1.bf16.msra.mxu0 %v782
    %1055 = vmatprep.subr.bf16.mxu0 %v786
    %1056 = vmatpush1.bf16.msra.mxu0 %v785
    %1057 = vmatprep.subr.bf16.mxu0 %v789
    %1058 = vmatpush1.bf16.msra.mxu0 %v788
    %1059 = vmatprep.subr.bf16.mxu0 %v792
    %1060 = vmatpush1.bf16.msra.mxu0 %v791
    %1061 = vmatprep.subr.bf16.mxu0 0
    %1062 = vmatpush1.bf16.msra.mxu0 0
    %1063 = vmatprep.subr.bf16.mxu0 0
    %1064 = vmatpush1.bf16.msra.mxu0 0
    %1065 = vmatprep.subr.bf16.mxu0 0
    %1066 = vmatpush1.bf16.msra.mxu0 0
    %1067 = vmatprep.subr.bf16.mxu0 0
    %1068 = vmatpush1.bf16.msra.mxu0 0
    %1069 = vmatprep.subr.bf16.mxu0 0
    %1070 = vmatpush1.bf16.msra.mxu0 0
    %1071 = vmatprep.subr.bf16.mxu0 0
    %1072 = vmatpush1.bf16.msra.mxu0 0
    %1073 = vmatprep.subr.bf16.mxu0 0
    %1074 = vmatpush1.bf16.msra.mxu0 0
    %1075 = vmatprep.subr.bf16.mxu0 0
    %1076 = vmatpush1.bf16.msra.mxu0 0
    %1077 = vmatprep.mubr.bf16.mxu0 0
    %1078 = vmatmul.mubr.bf16.gmra.mrb[0].mxu0 %v1043
    %v1079 = vpop.f32.mrb[0].mxu0
    %v1080 = vadd.f32 %v678, %v1079
    %v1081 = vpop.f32.mrb[0].mxu0
    %v1082 = vadd.f32 %v682, %v1081
    %v1083 = vpop.f32.mrb[0].mxu0
    %v1084 = vpop.f32.mrb[0].mxu0
    %1085 = vdwg.mxu0
    %1086 = vmatprep.subr.bf16.mxu0 0
    %1087 = vmatpush1.bf16.msra.mxu0 %v772
    %1088 = vmatprep.subr.bf16.mxu0 0
    %1089 = vmatpush1.bf16.msra.mxu0 %v775
    %1090 = vmatprep.subr.bf16.mxu0 0
    %1091 = vmatpush1.bf16.msra.mxu0 %v778
    %1092 = vmatprep.subr.bf16.mxu0 0
    %1093 = vmatpush1.bf16.msra.mxu0 %v781
    %1094 = vmatprep.subr.bf16.mxu0 0
    %1095 = vmatpush1.bf16.msra.mxu0 %v784
    %1096 = vmatprep.subr.bf16.mxu0 0
    %1097 = vmatpush1.bf16.msra.mxu0 %v787
    %1098 = vmatprep.subr.bf16.mxu0 0
    %1099 = vmatpush1.bf16.msra.mxu0 %v790
    %1100 = vmatprep.subr.bf16.mxu0 0
    %1101 = vmatpush1.bf16.msra.mxu0 %v793
    %1102 = vmatprep.subr.bf16.mxu0 0
    %1103 = vmatpush1.bf16.msra.mxu0 0
    %1104 = vmatprep.subr.bf16.mxu0 0
    %1105 = vmatpush1.bf16.msra.mxu0 0
    %1106 = vmatprep.subr.bf16.mxu0 0
    %1107 = vmatpush1.bf16.msra.mxu0 0
    %1108 = vmatprep.subr.bf16.mxu0 0
    %1109 = vmatpush1.bf16.msra.mxu0 0
    %1110 = vmatprep.subr.bf16.mxu0 0
    %1111 = vmatpush1.bf16.msra.mxu0 0
    %1112 = vmatprep.subr.bf16.mxu0 0
    %1113 = vmatpush1.bf16.msra.mxu0 0
    %1114 = vmatprep.subr.bf16.mxu0 0
    %1115 = vmatpush1.bf16.msra.mxu0 0
    %1116 = vmatprep.subr.bf16.mxu0 0
    %1117 = vmatpush1.bf16.msra.mxu0 0
    %1118 = vmatprep.mubr.bf16.mxu0 0
    %1119 = vmatmul.mubr.bf16.gmra.mrb[0].mxu0 %v1043
    %v1120 = vpop.f32.mrb[0].mxu0
    %v1121 = vadd.f32 %v686, %v1120
    %v1122 = vpop.f32.mrb[0].mxu0
    %v1123 = vpop.f32.mrb[0].mxu0
    %v1124 = vpop.f32.mrb[0].mxu0
    %1125 = vdwg.mxu0
    %v1127 = vrot.slane %v1080, 4
    %v1129 = vadd.f32 %v1038, %v1127
    %v1130 = vxor.u32 %v1129, 2147483648
    %v1131 = vmul.f32 %v1130, 1.442695
    %v1132 = vpow.pop %v1131
    %v1133 = vadd.f32 %v1132, 1.0
    %v1134 = vrcp.pop %v1133
    %v1135 = vmul.f32 1.0, %v1134
    %v1137 = vrot.slane %v1082, 4
    %v1139 = vadd.f32 %v1039, %v1137
    %v1140 = vxor.u32 %v1139, 2147483648
    %v1141 = vmul.f32 %v1140, 1.442695
    %v1142 = vpow.pop %v1141
    %v1143 = vadd.f32 %v1142, 1.0
    %v1144 = vrcp.pop %v1143
    %v1145 = vmul.f32 1.0, %v1144
    %v1147 = vrot.slane %v1121, 4
    %v1149 = vmul.f32 %v1135, %v1147
    %v1150 = vadd.f32 %v1040, %v1149
    %v1151 = vtanh.pop %v1150
    %v1152 = vsub.f32 1.0, %v1145
    %v1153 = vmul.f32 %v1152, %v1151
    %v1155 = vrot.slane %v1037, 6
    %v1157 = vmul.f32 %v1145, %v1155
    %v1158 = vadd.f32 %v1153, %v1157
    %v1159 = vld [vmem:[#allocation2] sm:$0xc0]
    %v1160 = vld [vmem:[#allocation2 + $0x8] sm:$0xc0]
    %v1161 = vld [vmem:[#allocation2 + $0x10] sm:$0xc0]
    %v1162 = vpack.c.bf16 %v1158, %v1158
    %v1164 = vrot.slane %v1162, 2
    %1166 = vmatprep.subr.bf16.mxu0 %v771
    %1167 = vmatpush1.bf16.msra.mxu0 %v770
    %1168 = vmatprep.subr.bf16.mxu0 %v774
    %1169 = vmatpush1.bf16.msra.mxu0 %v773
    %1170 = vmatprep.subr.bf16.mxu0 %v777
    %1171 = vmatpush1.bf16.msra.mxu0 %v776
    %1172 = vmatprep.subr.bf16.mxu0 %v780
    %1173 = vmatpush1.bf16.msra.mxu0 %v779
    %1174 = vmatprep.subr.bf16.mxu0 %v783
    %1175 = vmatpush1.bf16.msra.mxu0 %v782
    %1176 = vmatprep.subr.bf16.mxu0 %v786
    %1177 = vmatpush1.bf16.msra.mxu0 %v785
    %1178 = vmatprep.subr.bf16.mxu0 %v789
    %1179 = vmatpush1.bf16.msra.mxu0 %v788
    %1180 = vmatprep.subr.bf16.mxu0 %v792
    %1181 = vmatpush1.bf16.msra.mxu0 %v791
    %1182 = vmatprep.subr.bf16.mxu0 0
    %1183 = vmatpush1.bf16.msra.mxu0 0
    %1184 = vmatprep.subr.bf16.mxu0 0
    %1185 = vmatpush1.bf16.msra.mxu0 0
    %1186 = vmatprep.subr.bf16.mxu0 0
    %1187 = vmatpush1.bf16.msra.mxu0 0
    %1188 = vmatprep.subr.bf16.mxu0 0
    %1189 = vmatpush1.bf16.msra.mxu0 0
    %1190 = vmatprep.subr.bf16.mxu0 0
    %1191 = vmatpush1.bf16.msra.mxu0 0
    %1192 = vmatprep.subr.bf16.mxu0 0
    %1193 = vmatpush1.bf16.msra.mxu0 0
    %1194 = vmatprep.subr.bf16.mxu0 0
    %1195 = vmatpush1.bf16.msra.mxu0 0
    %1196 = vmatprep.subr.bf16.mxu0 0
    %1197 = vmatpush1.bf16.msra.mxu0 0
    %1198 = vmatprep.mubr.bf16.mxu0 0
    %1199 = vmatmul.mubr.bf16.gmra.mrb[0].mxu0 %v1164
    %v1200 = vpop.f32.mrb[0].mxu0
    %v1201 = vadd.f32 %v678, %v1200
    %v1202 = vpop.f32.mrb[0].mxu0
    %v1203 = vadd.f32 %v682, %v1202
    %v1204 = vpop.f32.mrb[0].mxu0
    %v1205 = vpop.f32.mrb[0].mxu0
    %1206 = vdwg.mxu0
    %1207 = vmatprep.subr.bf16.mxu0 0
    %1208 = vmatpush1.bf16.msra.mxu0 %v772
    %1209 = vmatprep.subr.bf16.mxu0 0
    %1210 = vmatpush1.bf16.msra.mxu0 %v775
    %1211 = vmatprep.subr.bf16.mxu0 0
    %1212 = vmatpush1.bf16.msra.mxu0 %v778
    %1213 = vmatprep.subr.bf16.mxu0 0
    %1214 = vmatpush1.bf16.msra.mxu0 %v781
    %1215 = vmatprep.subr.bf16.mxu0 0
    %1216 = vmatpush1.bf16.msra.mxu0 %v784
    %1217 = vmatprep.subr.bf16.mxu0 0
    %1218 = vmatpush1.bf16.msra.mxu0 %v787
    %1219 = vmatprep.subr.bf16.mxu0 0
    %1220 = vmatpush1.bf16.msra.mxu0 %v790
    %1221 = vmatprep.subr.bf16.mxu0 0
    %1222 = vmatpush1.bf16.msra.mxu0 %v793
    %1223 = vmatprep.subr.bf16.mxu0 0
    %1224 = vmatpush1.bf16.msra.mxu0 0
    %1225 = vmatprep.subr.bf16.mxu0 0
    %1226 = vmatpush1.bf16.msra.mxu0 0
    %1227 = vmatprep.subr.bf16.mxu0 0
    %1228 = vmatpush1.bf16.msra.mxu0 0
    %1229 = vmatprep.subr.bf16.mxu0 0
    %1230 = vmatpush1.bf16.msra.mxu0 0
    %1231 = vmatprep.subr.bf16.mxu0 0
    %1232 = vmatpush1.bf16.msra.mxu0 0
    %1233 = vmatprep.subr.bf16.mxu0 0
    %1234 = vmatpush1.bf16.msra.mxu0 0
    %1235 = vmatprep.subr.bf16.mxu0 0
    %1236 = vmatpush1.bf16.msra.mxu0 0
    %1237 = vmatprep.subr.bf16.mxu0 0
    %1238 = vmatpush1.bf16.msra.mxu0 0
    %1239 = vmatprep.mubr.bf16.mxu0 0
    %1240 = vmatmul.mubr.bf16.gmra.mrb[0].mxu0 %v1164
    %v1241 = vpop.f32.mrb[0].mxu0
    %v1242 = vadd.f32 %v686, %v1241
    %v1243 = vpop.f32.mrb[0].mxu0
    %v1244 = vpop.f32.mrb[0].mxu0
    %v1245 = vpop.f32.mrb[0].mxu0
    %1246 = vdwg.mxu0
    %v1248 = vrot.slane %v1201, 2
    %v1250 = vadd.f32 %v1159, %v1248
    %v1251 = vxor.u32 %v1250, 2147483648
    %v1252 = vmul.f32 %v1251, 1.442695
    %v1253 = vpow.pop %v1252
    %v1254 = vadd.f32 %v1253, 1.0
    %v1255 = vrcp.pop %v1254
    %v1256 = vmul.f32 1.0, %v1255
    %v1258 = vrot.slane %v1203, 2
    %v1260 = vadd.f32 %v1160, %v1258
    %v1261 = vxor.u32 %v1260, 2147483648
    %v1262 = vmul.f32 %v1261, 1.442695
    %v1263 = vpow.pop %v1262
    %v1264 = vadd.f32 %v1263, 1.0
    %v1265 = vrcp.pop %v1264
    %v1266 = vmul.f32 1.0, %v1265
    %v1268 = vrot.slane %v1242, 2
    %v1270 = vmul.f32 %v1256, %v1268
    %v1271 = vadd.f32 %v1161, %v1270
    %v1272 = vtanh.pop %v1271
    %v1273 = vsub.f32 1.0, %v1266
    %v1274 = vmul.f32 %v1273, %v1272
    %v1276 = vrot.slane %v1158, 6
    %v1278 = vmul.f32 %v1266, %v1276
    %v1279 = vadd.f32 %v1274, %v1278
    %v1280 = vld [vmem:[#allocation2 + $0x18] sm:$0x3]
    %v1281 = vld [vmem:[#allocation2 + $0x20] sm:$0x3]
    %v1282 = vld [vmem:[#allocation2 + $0x28] sm:$0x3]
    %v1283 = vpack.c.bf16 %v1279, %v1279
    %v1285 = vrot.slane %v1283, 3
    %1287 = vmatprep.subr.bf16.mxu0 %v771
    %1288 = vmatpush1.bf16.msra.mxu0 %v770
    %1289 = vmatprep.subr.bf16.mxu0 %v774
    %1290 = vmatpush1.bf16.msra.mxu0 %v773
    %1291 = vmatprep.subr.bf16.mxu0 %v777
    %1292 = vmatpush1.bf16.msra.mxu0 %v776
    %1293 = vmatprep.subr.bf16.mxu0 %v780
    %1294 = vmatpush1.bf16.msra.mxu0 %v779
    %1295 = vmatprep.subr.bf16.mxu0 %v783
    %1296 = vmatpush1.bf16.msra.mxu0 %v782
    %1297 = vmatprep.subr.bf16.mxu0 %v786
    %1298 = vmatpush1.bf16.msra.mxu0 %v785
    %1299 = vmatprep.subr.bf16.mxu0 %v789
    %1300 = vmatpush1.bf16.msra.mxu0 %v788
    %1301 = vmatprep.subr.bf16.mxu0 %v792
    %1302 = vmatpush1.bf16.msra.mxu0 %v791
    %1303 = vmatprep.subr.bf16.mxu0 0
    %1304 = vmatpush1.bf16.msra.mxu0 0
    %1305 = vmatprep.subr.bf16.mxu0 0
    %1306 = vmatpush1.bf16.msra.mxu0 0
    %1307 = vmatprep.subr.bf16.mxu0 0
    %1308 = vmatpush1.bf16.msra.mxu0 0
    %1309 = vmatprep.subr.bf16.mxu0 0
    %1310 = vmatpush1.bf16.msra.mxu0 0
    %1311 = vmatprep.subr.bf16.mxu0 0
    %1312 = vmatpush1.bf16.msra.mxu0 0
    %1313 = vmatprep.subr.bf16.mxu0 0
    %1314 = vmatpush1.bf16.msra.mxu0 0
    %1315 = vmatprep.subr.bf16.mxu0 0
    %1316 = vmatpush1.bf16.msra.mxu0 0
    %1317 = vmatprep.subr.bf16.mxu0 0
    %1318 = vmatpush1.bf16.msra.mxu0 0
    %1319 = vmatprep.mubr.bf16.mxu0 0
    %1320 = vmatmul.mubr.bf16.gmra.mrb[0].mxu0 %v1285
    %v1321 = vpop.f32.mrb[0].mxu0
    %v1322 = vadd.f32 %v678, %v1321
    %v1323 = vpop.f32.mrb[0].mxu0
    %v1324 = vadd.f32 %v682, %v1323
    %v1325 = vpop.f32.mrb[0].mxu0
    %v1326 = vpop.f32.mrb[0].mxu0
    %1327 = vdwg.mxu0
    %1328 = vmatprep.subr.bf16.mxu0 0
    %1329 = vmatpush1.bf16.msra.mxu0 %v772
    %1330 = vmatprep.subr.bf16.mxu0 0
    %1331 = vmatpush1.bf16.msra.mxu0 %v775
    %1332 = vmatprep.subr.bf16.mxu0 0
    %1333 = vmatpush1.bf16.msra.mxu0 %v778
    %1334 = vmatprep.subr.bf16.mxu0 0
    %1335 = vmatpush1.bf16.msra.mxu0 %v781
    %1336 = vmatprep.subr.bf16.mxu0 0
    %1337 = vmatpush1.bf16.msra.mxu0 %v784
    %1338 = vmatprep.subr.bf16.mxu0 0
    %1339 = vmatpush1.bf16.msra.mxu0 %v787
    %1340 = vmatprep.subr.bf16.mxu0 0
    %1341 = vmatpush1.bf16.msra.mxu0 %v790
    %1342 = vmatprep.subr.bf16.mxu0 0
    %1343 = vmatpush1.bf16.msra.mxu0 %v793
    %1344 = vmatprep.subr.bf16.mxu0 0
    %1345 = vmatpush1.bf16.msra.mxu0 0
    %1346 = vmatprep.subr.bf16.mxu0 0
    %1347 = vmatpush1.bf16.msra.mxu0 0
    %1348 = vmatprep.subr.bf16.mxu0 0
    %1349 = vmatpush1.bf16.msra.mxu0 0
    %1350 = vmatprep.subr.bf16.mxu0 0
    %1351 = vmatpush1.bf16.msra.mxu0 0
    %1352 = vmatprep.subr.bf16.mxu0 0
    %1353 = vmatpush1.bf16.msra.mxu0 0
    %1354 = vmatprep.subr.bf16.mxu0 0
    %1355 = vmatpush1.bf16.msra.mxu0 0
    %1356 = vmatprep.subr.bf16.mxu0 0
    %1357 = vmatpush1.bf16.msra.mxu0 0
    %1358 = vmatprep.subr.bf16.mxu0 0
    %1359 = vmatpush1.bf16.msra.mxu0 0
    %1360 = vmatprep.mubr.bf16.mxu0 0
    %1361 = vmatmul.mubr.bf16.gmra.mrb[0].mxu0 %v1285
    %v1362 = vpop.f32.mrb[0].mxu0
    %v1363 = vadd.f32 %v686, %v1362
    %v1364 = vpop.f32.mrb[0].mxu0
    %v1365 = vpop.f32.mrb[0].mxu0
    %v1366 = vpop.f32.mrb[0].mxu0
    %1367 = vdwg.mxu0
    %v1368 = vadd.f32 %v1280, %v1322
    %v1369 = vxor.u32 %v1368, 2147483648
    %v1370 = vmul.f32 %v1369, 1.442695
    %v1371 = vpow.pop %v1370
    %v1372 = vadd.f32 %v1371, 1.0
    %v1373 = vrcp.pop %v1372
    %v1374 = vmul.f32 1.0, %v1373
    %v1375 = vadd.f32 %v1281, %v1324
    %v1376 = vxor.u32 %v1375, 2147483648
    %v1377 = vmul.f32 %v1376, 1.442695
    %v1378 = vpow.pop %v1377
    %v1379 = vadd.f32 %v1378, 1.0
    %v1380 = vrcp.pop %v1379
    %v1381 = vmul.f32 1.0, %v1380
    %v1382 = vmul.f32 %v1374, %v1363
    %v1383 = vadd.f32 %v1282, %v1382
    %v1384 = vtanh.pop %v1383
    %v1385 = vsub.f32 1.0, %v1381
    %v1386 = vmul.f32 %v1385, %v1384
    %v1388 = vrot.slane %v1279, 6
    %v1390 = vmul.f32 %v1381, %v1388
    %v1391 = vadd.f32 %v1386, %v1390
    %v1392 = vld [vmem:[#allocation2 + $0x18] sm:$0xc]
    %v1393 = vld [vmem:[#allocation2 + $0x20] sm:$0xc]
    %v1394 = vld [vmem:[#allocation2 + $0x28] sm:$0xc]
    %v1395 = vpack.c.bf16 %v1391, %v1391
    %1396 = vmatprep.subr.bf16.mxu0 %v771
    %1397 = vmatpush1.bf16.msra.mxu0 %v770
    %1398 = vmatprep.subr.bf16.mxu0 %v774
    %1399 = vmatpush1.bf16.msra.mxu0 %v773
    %1400 = vmatprep.subr.bf16.mxu0 %v777
    %1401 = vmatpush1.bf16.msra.mxu0 %v776
    %1402 = vmatprep.subr.bf16.mxu0 %v780
    %1403 = vmatpush1.bf16.msra.mxu0 %v779
    %1404 = vmatprep.subr.bf16.mxu0 %v783
    %1405 = vmatpush1.bf16.msra.mxu0 %v782
    %1406 = vmatprep.subr.bf16.mxu0 %v786
    %1407 = vmatpush1.bf16.msra.mxu0 %v785
    %1408 = vmatprep.subr.bf16.mxu0 %v789
    %1409 = vmatpush1.bf16.msra.mxu0 %v788
    %1410 = vmatprep.subr.bf16.mxu0 %v792
    %1411 = vmatpush1.bf16.msra.mxu0 %v791
    %1412 = vmatprep.subr.bf16.mxu0 0
    %1413 = vmatpush1.bf16.msra.mxu0 0
    %1414 = vmatprep.subr.bf16.mxu0 0
    %1415 = vmatpush1.bf16.msra.mxu0 0
    %1416 = vmatprep.subr.bf16.mxu0 0
    %1417 = vmatpush1.bf16.msra.mxu0 0
    %1418 = vmatprep.subr.bf16.mxu0 0
    %1419 = vmatpush1.bf16.msra.mxu0 0
    %1420 = vmatprep.subr.bf16.mxu0 0
    %1421 = vmatpush1.bf16.msra.mxu0 0
    %1422 = vmatprep.subr.bf16.mxu0 0
    %1423 = vmatpush1.bf16.msra.mxu0 0
    %1424 = vmatprep.subr.bf16.mxu0 0
    %1425 = vmatpush1.bf16.msra.mxu0 0
    %1426 = vmatprep.subr.bf16.mxu0 0
    %1427 = vmatpush1.bf16.msra.mxu0 0
    %1428 = vmatprep.mubr.bf16.mxu0 0
    %1429 = vmatmul.mubr.bf16.gmra.mrb[0].mxu0 %v1395
    %v1430 = vpop.f32.mrb[0].mxu0
    %v1431 = vadd.f32 %v678, %v1430
    %v1432 = vpop.f32.mrb[0].mxu0
    %v1433 = vadd.f32 %v682, %v1432
    %v1434 = vpop.f32.mrb[0].mxu0
    %v1435 = vpop.f32.mrb[0].mxu0
    %1436 = vdwg.mxu0
    %1437 = vmatprep.subr.bf16.mxu0 0
    %1438 = vmatpush1.bf16.msra.mxu0 %v772
    %1439 = vmatprep.subr.bf16.mxu0 0
    %1440 = vmatpush1.bf16.msra.mxu0 %v775
    %1441 = vmatprep.subr.bf16.mxu0 0
    %1442 = vmatpush1.bf16.msra.mxu0 %v778
    %1443 = vmatprep.subr.bf16.mxu0 0
    %1444 = vmatpush1.bf16.msra.mxu0 %v781
    %1445 = vmatprep.subr.bf16.mxu0 0
    %1446 = vmatpush1.bf16.msra.mxu0 %v784
    %1447 = vmatprep.subr.bf16.mxu0 0
    %1448 = vmatpush1.bf16.msra.mxu0 %v787
    %1449 = vmatprep.subr.bf16.mxu0 0
    %1450 = vmatpush1.bf16.msra.mxu0 %v790
    %1451 = vmatprep.subr.bf16.mxu0 0
    %1452 = vmatpush1.bf16.msra.mxu0 %v793
    %1453 = vmatprep.subr.bf16.mxu0 0
    %1454 = vmatpush1.bf16.msra.mxu0 0
    %1455 = vmatprep.subr.bf16.mxu0 0
    %1456 = vmatpush1.bf16.msra.mxu0 0
    %1457 = vmatprep.subr.bf16.mxu0 0
    %1458 = vmatpush1.bf16.msra.mxu0 0
    %1459 = vmatprep.subr.bf16.mxu0 0
    %1460 = vmatpush1.bf16.msra.mxu0 0
    %1461 = vmatprep.subr.bf16.mxu0 0
    %1462 = vmatpush1.bf16.msra.mxu0 0
    %1463 = vmatprep.subr.bf16.mxu0 0
    %1464 = vmatpush1.bf16.msra.mxu0 0
    %1465 = vmatprep.subr.bf16.mxu0 0
    %1466 = vmatpush1.bf16.msra.mxu0 0
    %1467 = vmatprep.subr.bf16.mxu0 0
    %1468 = vmatpush1.bf16.msra.mxu0 0
    %1469 = vmatprep.mubr.bf16.mxu0 0
    %1470 = vmatmul.mubr.bf16.gmra.mrb[0].mxu0 %v1395
    %v1471 = vpop.f32.mrb[0].mxu0
    %v1472 = vadd.f32 %v686, %v1471
    %v1473 = vpop.f32.mrb[0].mxu0
    %v1474 = vpop.f32.mrb[0].mxu0
    %v1475 = vpop.f32.mrb[0].mxu0
    %1476 = vdwg.mxu0
    %v1478 = vrot.slane %v1431, 6
    %v1480 = vadd.f32 %v1392, %v1478
    %v1481 = vxor.u32 %v1480, 2147483648
    %v1482 = vmul.f32 %v1481, 1.442695
    %v1483 = vpow.pop %v1482
    %v1484 = vadd.f32 %v1483, 1.0
    %v1485 = vrcp.pop %v1484
    %v1486 = vmul.f32 1.0, %v1485
    %v1488 = vrot.slane %v1433, 6
    %v1490 = vadd.f32 %v1393, %v1488
    %v1491 = vxor.u32 %v1490, 2147483648
    %v1492 = vmul.f32 %v1491, 1.442695
    %v1493 = vpow.pop %v1492
    %v1494 = vadd.f32 %v1493, 1.0
    %v1495 = vrcp.pop %v1494
    %v1496 = vmul.f32 1.0, %v1495
    %v1498 = vrot.slane %v1472, 6
    %v1500 = vmul.f32 %v1486, %v1498
    %v1501 = vadd.f32 %v1394, %v1500
    %v1502 = vtanh.pop %v1501
    %v1503 = vsub.f32 1.0, %v1496
    %v1504 = vmul.f32 %v1503, %v1502
    %v1506 = vrot.slane %v1391, 6
    %v1508 = vmul.f32 %v1496, %v1506
    %v1509 = vadd.f32 %v1504, %v1508
    %v1510 = vld [vmem:[#allocation2 + $0x18] sm:$0x30]
    %v1511 = vld [vmem:[#allocation2 + $0x20] sm:$0x30]
    %v1512 = vld [vmem:[#allocation2 + $0x28] sm:$0x30]
    %v1513 = vpack.c.bf16 %v1509, %v1509
    %v1515 = vrot.slane %v1513, 1
    %1517 = vmatprep.subr.bf16.mxu0 %v771
    %1518 = vmatpush1.bf16.msra.mxu0 %v770
    %1519 = vmatprep.subr.bf16.mxu0 %v774
    %1520 = vmatpush1.bf16.msra.mxu0 %v773
    %1521 = vmatprep.subr.bf16.mxu0 %v777
    %1522 = vmatpush1.bf16.msra.mxu0 %v776
    %1523 = vmatprep.subr.bf16.mxu0 %v780
    %1524 = vmatpush1.bf16.msra.mxu0 %v779
    %1525 = vmatprep.subr.bf16.mxu0 %v783
    %1526 = vmatpush1.bf16.msra.mxu0 %v782
    %1527 = vmatprep.subr.bf16.mxu0 %v786
    %1528 = vmatpush1.bf16.msra.mxu0 %v785
    %1529 = vmatprep.subr.bf16.mxu0 %v789
    %1530 = vmatpush1.bf16.msra.mxu0 %v788
    %1531 = vmatprep.subr.bf16.mxu0 %v792
    %1532 = vmatpush1.bf16.msra.mxu0 %v791
    %1533 = vmatprep.subr.bf16.mxu0 0
    %1534 = vmatpush1.bf16.msra.mxu0 0
    %1535 = vmatprep.subr.bf16.mxu0 0
    %1536 = vmatpush1.bf16.msra.mxu0 0
    %1537 = vmatprep.subr.bf16.mxu0 0
    %1538 = vmatpush1.bf16.msra.mxu0 0
    %1539 = vmatprep.subr.bf16.mxu0 0
    %1540 = vmatpush1.bf16.msra.mxu0 0
    %1541 = vmatprep.subr.bf16.mxu0 0
    %1542 = vmatpush1.bf16.msra.mxu0 0
    %1543 = vmatprep.subr.bf16.mxu0 0
    %1544 = vmatpush1.bf16.msra.mxu0 0
    %1545 = vmatprep.subr.bf16.mxu0 0
    %1546 = vmatpush1.bf16.msra.mxu0 0
    %1547 = vmatprep.subr.bf16.mxu0 0
    %1548 = vmatpush1.bf16.msra.mxu0 0
    %1549 = vmatprep.mubr.bf16.mxu0 0
    %1550 = vmatmul.mubr.bf16.gmra.mrb[0].mxu0 %v1515
    %v1551 = vpop.f32.mrb[0].mxu0
    %v1552 = vadd.f32 %v678, %v1551
    %v1553 = vpop.f32.mrb[0].mxu0
    %v1554 = vadd.f32 %v682, %v1553
    %v1555 = vpop.f32.mrb[0].mxu0
    %v1556 = vpop.f32.mrb[0].mxu0
    %1557 = vdwg.mxu0
    %1558 = vmatprep.subr.bf16.mxu0 0
    %1559 = vmatpush1.bf16.msra.mxu0 %v772
    %1560 = vmatprep.subr.bf16.mxu0 0
    %1561 = vmatpush1.bf16.msra.mxu0 %v775
    %1562 = vmatprep.subr.bf16.mxu0 0
    %1563 = vmatpush1.bf16.msra.mxu0 %v778
    %1564 = vmatprep.subr.bf16.mxu0 0
    %1565 = vmatpush1.bf16.msra.mxu0 %v781
    %1566 = vmatprep.subr.bf16.mxu0 0
    %1567 = vmatpush1.bf16.msra.mxu0 %v784
    %1568 = vmatprep.subr.bf16.mxu0 0
    %1569 = vmatpush1.bf16.msra.mxu0 %v787
    %1570 = vmatprep.subr.bf16.mxu0 0
    %1571 = vmatpush1.bf16.msra.mxu0 %v790
    %1572 = vmatprep.subr.bf16.mxu0 0
    %1573 = vmatpush1.bf16.msra.mxu0 %v793
    %1574 = vmatprep.subr.bf16.mxu0 0
    %1575 = vmatpush1.bf16.msra.mxu0 0
    %1576 = vmatprep.subr.bf16.mxu0 0
    %1577 = vmatpush1.bf16.msra.mxu0 0
    %1578 = vmatprep.subr.bf16.mxu0 0
    %1579 = vmatpush1.bf16.msra.mxu0 0
    %1580 = vmatprep.subr.bf16.mxu0 0
    %1581 = vmatpush1.bf16.msra.mxu0 0
    %1582 = vmatprep.subr.bf16.mxu0 0
    %1583 = vmatpush1.bf16.msra.mxu0 0
    %1584 = vmatprep.subr.bf16.mxu0 0
    %1585 = vmatpush1.bf16.msra.mxu0 0
    %1586 = vmatprep.subr.bf16.mxu0 0
    %1587 = vmatpush1.bf16.msra.mxu0 0
    %1588 = vmatprep.subr.bf16.mxu0 0
    %1589 = vmatpush1.bf16.msra.mxu0 0
    %1590 = vmatprep.mubr.bf16.mxu0 0
    %1591 = vmatmul.mubr.bf16.gmra.mrb[0].mxu0 %v1515
    %v1592 = vpop.f32.mrb[0].mxu0
    %v1593 = vadd.f32 %v686, %v1592
    %v1594 = vpop.f32.mrb[0].mxu0
    %v1595 = vpop.f32.mrb[0].mxu0
    %v1596 = vpop.f32.mrb[0].mxu0
    %1597 = vdwg.mxu0
    %v1599 = vrot.slane %v1552, 4
    %v1601 = vadd.f32 %v1510, %v1599
    %v1602 = vxor.u32 %v1601, 2147483648
    %v1603 = vmul.f32 %v1602, 1.442695
    %v1604 = vpow.pop %v1603
    %v1605 = vadd.f32 %v1604, 1.0
    %v1606 = vrcp.pop %v1605
    %v1607 = vmul.f32 1.0, %v1606
    %v1609 = vrot.slane %v1554, 4
    %v1611 = vadd.f32 %v1511, %v1609
    %v1612 = vxor.u32 %v1611, 2147483648
    %v1613 = vmul.f32 %v1612, 1.442695
    %v1614 = vpow.pop %v1613
    %v1615 = vadd.f32 %v1614, 1.0
    %v1616 = vrcp.pop %v1615
    %v1617 = vmul.f32 1.0, %v1616
    %v1619 = vrot.slane %v1593, 4
    %v1621 = vmul.f32 %v1607, %v1619
    %v1622 = vadd.f32 %v1512, %v1621
    %v1623 = vtanh.pop %v1622
    %v1624 = vsub.f32 1.0, %v1617
    %v1625 = vmul.f32 %v1624, %v1623
    %v1627 = vrot.slane %v1509, 6
    %v1629 = vmul.f32 %v1617, %v1627
    %v1630 = vadd.f32 %v1625, %v1629
    %v1631 = vld [vmem:[#allocation2 + $0x18] sm:$0xc0]
    %v1632 = vld [vmem:[#allocation2 + $0x20] sm:$0xc0]
    %v1633 = vld [vmem:[#allocation2 + $0x28] sm:$0xc0]
    %v1634 = vpack.c.bf16 %v1630, %v1630
    %v1636 = vrot.slane %v1634, 2
    %1638 = vmatprep.subr.bf16.mxu0 %v771
    %1639 = vmatpush1.bf16.msra.mxu0 %v770
    %1640 = vmatprep.subr.bf16.mxu0 %v774
    %1641 = vmatpush1.bf16.msra.mxu0 %v773
    %1642 = vmatprep.subr.bf16.mxu0 %v777
    %1643 = vmatpush1.bf16.msra.mxu0 %v776
    %1644 = vmatprep.subr.bf16.mxu0 %v780
    %1645 = vmatpush1.bf16.msra.mxu0 %v779
    %1646 = vmatprep.subr.bf16.mxu0 %v783
    %1647 = vmatpush1.bf16.msra.mxu0 %v782
    %1648 = vmatprep.subr.bf16.mxu0 %v786
    %1649 = vmatpush1.bf16.msra.mxu0 %v785
    %1650 = vmatprep.subr.bf16.mxu0 %v789
    %1651 = vmatpush1.bf16.msra.mxu0 %v788
    %1652 = vmatprep.subr.bf16.mxu0 %v792
    %1653 = vmatpush1.bf16.msra.mxu0 %v791
    %1654 = vmatprep.subr.bf16.mxu0 0
    %1655 = vmatpush1.bf16.msra.mxu0 0
    %1656 = vmatprep.subr.bf16.mxu0 0
    %1657 = vmatpush1.bf16.msra.mxu0 0
    %1658 = vmatprep.subr.bf16.mxu0 0
    %1659 = vmatpush1.bf16.msra.mxu0 0
    %1660 = vmatprep.subr.bf16.mxu0 0
    %1661 = vmatpush1.bf16.msra.mxu0 0
    %1662 = vmatprep.subr.bf16.mxu0 0
    %1663 = vmatpush1.bf16.msra.mxu0 0
    %1664 = vmatprep.subr.bf16.mxu0 0
    %1665 = vmatpush1.bf16.msra.mxu0 0
    %1666 = vmatprep.subr.bf16.mxu0 0
    %1667 = vmatpush1.bf16.msra.mxu0 0
    %1668 = vmatprep.subr.bf16.mxu0 0
    %1669 = vmatpush1.bf16.msra.mxu0 0
    %1670 = vmatprep.mubr.bf16.mxu0 0
    %1671 = vmatmul.mubr.bf16.gmra.mrb[0].mxu0 %v1636
    %v1672 = vpop.f32.mrb[0].mxu0
    %v1673 = vadd.f32 %v678, %v1672
    %v1674 = vpop.f32.mrb[0].mxu0
    %v1675 = vadd.f32 %v682, %v1674
    %v1676 = vpop.f32.mrb[0].mxu0
    %v1677 = vpop.f32.mrb[0].mxu0
    %1678 = vdwg.mxu0
    %1679 = vmatprep.subr.bf16.mxu0 0
    %1680 = vmatpush1.bf16.msra.mxu0 %v772
    %1681 = vmatprep.subr.bf16.mxu0 0
    %1682 = vmatpush1.bf16.msra.mxu0 %v775
    %1683 = vmatprep.subr.bf16.mxu0 0
    %1684 = vmatpush1.bf16.msra.mxu0 %v778
    %1685 = vmatprep.subr.bf16.mxu0 0
    %1686 = vmatpush1.bf16.msra.mxu0 %v781
    %1687 = vmatprep.subr.bf16.mxu0 0
    %1688 = vmatpush1.bf16.msra.mxu0 %v784
    %1689 = vmatprep.subr.bf16.mxu0 0
    %1690 = vmatpush1.bf16.msra.mxu0 %v787
    %1691 = vmatprep.subr.bf16.mxu0 0
    %1692 = vmatpush1.bf16.msra.mxu0 %v790
    %1693 = vmatprep.subr.bf16.mxu0 0
    %1694 = vmatpush1.bf16.msra.mxu0 %v793
    %1695 = vmatprep.subr.bf16.mxu0 0
    %1696 = vmatpush1.bf16.msra.mxu0 0
    %1697 = vmatprep.subr.bf16.mxu0 0
    %1698 = vmatpush1.bf16.msra.mxu0 0
    %1699 = vmatprep.subr.bf16.mxu0 0
    %1700 = vmatpush1.bf16.msra.mxu0 0
    %1701 = vmatprep.subr.bf16.mxu0 0
    %1702 = vmatpush1.bf16.msra.mxu0 0
    %1703 = vmatprep.subr.bf16.mxu0 0
    %1704 = vmatpush1.bf16.msra.mxu0 0
    %1705 = vmatprep.subr.bf16.mxu0 0
    %1706 = vmatpush1.bf16.msra.mxu0 0
    %1707 = vmatprep.subr.bf16.mxu0 0
    %1708 = vmatpush1.bf16.msra.mxu0 0
    %1709 = vmatprep.subr.bf16.mxu0 0
    %1710 = vmatpush1.bf16.msra.mxu0 0
    %1711 = vmatprep.mubr.bf16.mxu0 0
    %1712 = vmatmul.mubr.bf16.gmra.mrb[0].mxu0 %v1636
    %v1713 = vpop.f32.mrb[0].mxu0
    %v1714 = vadd.f32 %v686, %v1713
    %v1715 = vpop.f32.mrb[0].mxu0
    %v1716 = vpop.f32.mrb[0].mxu0
    %v1717 = vpop.f32.mrb[0].mxu0
    %1718 = vdwg.mxu0
    %v1720 = vrot.slane %v1673, 2
    %v1722 = vadd.f32 %v1631, %v1720
    %v1723 = vxor.u32 %v1722, 2147483648
    %v1724 = vmul.f32 %v1723, 1.442695
    %v1725 = vpow.pop %v1724
    %v1726 = vadd.f32 %v1725, 1.0
    %v1727 = vrcp.pop %v1726
    %v1728 = vmul.f32 1.0, %v1727
    %v1730 = vrot.slane %v1675, 2
    %v1732 = vadd.f32 %v1632, %v1730
    %v1733 = vxor.u32 %v1732, 2147483648
    %v1734 = vmul.f32 %v1733, 1.442695
    %v1735 = vpow.pop %v1734
    %v1736 = vadd.f32 %v1735, 1.0
    %v1737 = vrcp.pop %v1736
    %v1738 = vmul.f32 1.0, %v1737
    %v1740 = vrot.slane %v1714, 2
    %v1742 = vmul.f32 %v1728, %v1740
    %v1743 = vadd.f32 %v1633, %v1742
    %v1744 = vtanh.pop %v1743
    %v1745 = vsub.f32 1.0, %v1738
    %v1746 = vmul.f32 %v1745, %v1744
    %v1748 = vrot.slane %v1630, 6
    %v1750 = vmul.f32 %v1738, %v1748
    %v1751 = vadd.f32 %v1746, %v1750
    %v1752 = vld [vmem:[#allocation2 + $0x30] sm:$0x3]
    %v1753 = vld [vmem:[#allocation2 + $0x38] sm:$0x3]
    %v1754 = vld [vmem:[#allocation2 + $0x40] sm:$0x3]
    %v1755 = vpack.c.bf16 %v1751, %v1751
    %v1757 = vrot.slane %v1755, 3
    %1759 = vmatprep.subr.bf16.mxu0 %v771
    %1760 = vmatpush1.bf16.msra.mxu0 %v770
    %1761 = vmatprep.subr.bf16.mxu0 %v774
    %1762 = vmatpush1.bf16.msra.mxu0 %v773
    %1763 = vmatprep.subr.bf16.mxu0 %v777
    %1764 = vmatpush1.bf16.msra.mxu0 %v776
    %1765 = vmatprep.subr.bf16.mxu0 %v780
    %1766 = vmatpush1.bf16.msra.mxu0 %v779
    %1767 = vmatprep.subr.bf16.mxu0 %v783
    %1768 = vmatpush1.bf16.msra.mxu0 %v782
    %1769 = vmatprep.subr.bf16.mxu0 %v786
    %1770 = vmatpush1.bf16.msra.mxu0 %v785
    %1771 = vmatprep.subr.bf16.mxu0 %v789
    %1772 = vmatpush1.bf16.msra.mxu0 %v788
    %1773 = vmatprep.subr.bf16.mxu0 %v792
    %1774 = vmatpush1.bf16.msra.mxu0 %v791
    %1775 = vmatprep.subr.bf16.mxu0 0
    %1776 = vmatpush1.bf16.msra.mxu0 0
    %1777 = vmatprep.subr.bf16.mxu0 0
    %1778 = vmatpush1.bf16.msra.mxu0 0
    %1779 = vmatprep.subr.bf16.mxu0 0
    %1780 = vmatpush1.bf16.msra.mxu0 0
    %1781 = vmatprep.subr.bf16.mxu0 0
    %1782 = vmatpush1.bf16.msra.mxu0 0
    %1783 = vmatprep.subr.bf16.mxu0 0
    %1784 = vmatpush1.bf16.msra.mxu0 0
    %1785 = vmatprep.subr.bf16.mxu0 0
    %1786 = vmatpush1.bf16.msra.mxu0 0
    %1787 = vmatprep.subr.bf16.mxu0 0
    %1788 = vmatpush1.bf16.msra.mxu0 0
    %1789 = vmatprep.subr.bf16.mxu0 0
    %1790 = vmatpush1.bf16.msra.mxu0 0
    %1791 = vmatprep.mubr.bf16.mxu0 0
    %1792 = vmatmul.mubr.bf16.gmra.mrb[0].mxu0 %v1757
    %v1793 = vpop.f32.mrb[0].mxu0
    %v1794 = vadd.f32 %v678, %v1793
    %v1795 = vpop.f32.mrb[0].mxu0
    %v1796 = vadd.f32 %v682, %v1795
    %v1797 = vpop.f32.mrb[0].mxu0
    %v1798 = vpop.f32.mrb[0].mxu0
    %1799 = vdwg.mxu0
    %1800 = vmatprep.subr.bf16.mxu0 0
    %1801 = vmatpush1.bf16.msra.mxu0 %v772
    %1802 = vmatprep.subr.bf16.mxu0 0
    %1803 = vmatpush1.bf16.msra.mxu0 %v775
    %1804 = vmatprep.subr.bf16.mxu0 0
    %1805 = vmatpush1.bf16.msra.mxu0 %v778
    %1806 = vmatprep.subr.bf16.mxu0 0
    %1807 = vmatpush1.bf16.msra.mxu0 %v781
    %1808 = vmatprep.subr.bf16.mxu0 0
    %1809 = vmatpush1.bf16.msra.mxu0 %v784
    %1810 = vmatprep.subr.bf16.mxu0 0
    %1811 = vmatpush1.bf16.msra.mxu0 %v787
    %1812 = vmatprep.subr.bf16.mxu0 0
    %1813 = vmatpush1.bf16.msra.mxu0 %v790
    %1814 = vmatprep.subr.bf16.mxu0 0
    %1815 = vmatpush1.bf16.msra.mxu0 %v793
    %1816 = vmatprep.subr.bf16.mxu0 0
    %1817 = vmatpush1.bf16.msra.mxu0 0
    %1818 = vmatprep.subr.bf16.mxu0 0
    %1819 = vmatpush1.bf16.msra.mxu0 0
    %1820 = vmatprep.subr.bf16.mxu0 0
    %1821 = vmatpush1.bf16.msra.mxu0 0
    %1822 = vmatprep.subr.bf16.mxu0 0
    %1823 = vmatpush1.bf16.msra.mxu0 0
    %1824 = vmatprep.subr.bf16.mxu0 0
    %1825 = vmatpush1.bf16.msra.mxu0 0
    %1826 = vmatprep.subr.bf16.mxu0 0
    %1827 = vmatpush1.bf16.msra.mxu0 0
    %1828 = vmatprep.subr.bf16.mxu0 0
    %1829 = vmatpush1.bf16.msra.mxu0 0
    %1830 = vmatprep.subr.bf16.mxu0 0
    %1831 = vmatpush1.bf16.msra.mxu0 0
    %1832 = vmatprep.mubr.bf16.mxu0 0
    %1833 = vmatmul.mubr.bf16.gmra.mrb[0].mxu0 %v1757
    %v1834 = vpop.f32.mrb[0].mxu0
    %v1835 = vadd.f32 %v686, %v1834
    %v1836 = vpop.f32.mrb[0].mxu0
    %v1837 = vpop.f32.mrb[0].mxu0
    %v1838 = vpop.f32.mrb[0].mxu0
    %1839 = vdwg.mxu0
    %v1840 = vadd.f32 %v1752, %v1794
    %v1841 = vxor.u32 %v1840, 2147483648
    %v1842 = vmul.f32 %v1841, 1.442695
    %v1843 = vpow.pop %v1842
    %v1844 = vadd.f32 %v1843, 1.0
    %v1845 = vrcp.pop %v1844
    %v1846 = vmul.f32 1.0, %v1845
    %v1847 = vadd.f32 %v1753, %v1796
    %v1848 = vxor.u32 %v1847, 2147483648
    %v1849 = vmul.f32 %v1848, 1.442695
    %v1850 = vpow.pop %v1849
    %v1851 = vadd.f32 %v1850, 1.0
    %v1852 = vrcp.pop %v1851
    %v1853 = vmul.f32 1.0, %v1852
    %v1854 = vmul.f32 %v1846, %v1835
    %v1855 = vadd.f32 %v1754, %v1854
    %v1856 = vtanh.pop %v1855
    %v1857 = vsub.f32 1.0, %v1853
    %v1858 = vmul.f32 %v1857, %v1856
    %v1860 = vrot.slane %v1751, 6
    %v1862 = vmul.f32 %v1853, %v1860
    %v1863 = vadd.f32 %v1858, %v1862
    %v1864 = vld [vmem:[#allocation2 + $0x30] sm:$0xc]
    %v1865 = vld [vmem:[#allocation2 + $0x38] sm:$0xc]
    %v1866 = vld [vmem:[#allocation2 + $0x40] sm:$0xc]
    %v1867 = vpack.c.bf16 %v1863, %v1863
    %1868 = vmatprep.subr.bf16.mxu0 %v771
    %1869 = vmatpush1.bf16.msra.mxu0 %v770
    %1870 = vmatprep.subr.bf16.mxu0 %v774
    %1871 = vmatpush1.bf16.msra.mxu0 %v773
    %1872 = vmatprep.subr.bf16.mxu0 %v777
    %1873 = vmatpush1.bf16.msra.mxu0 %v776
    %1874 = vmatprep.subr.bf16.mxu0 %v780
    %1875 = vmatpush1.bf16.msra.mxu0 %v779
    %1876 = vmatprep.subr.bf16.mxu0 %v783
    %1877 = vmatpush1.bf16.msra.mxu0 %v782
    %1878 = vmatprep.subr.bf16.mxu0 %v786
    %1879 = vmatpush1.bf16.msra.mxu0 %v785
    %1880 = vmatprep.subr.bf16.mxu0 %v789
    %1881 = vmatpush1.bf16.msra.mxu0 %v788
    %1882 = vmatprep.subr.bf16.mxu0 %v792
    %1883 = vmatpush1.bf16.msra.mxu0 %v791
    %1884 = vmatprep.subr.bf16.mxu0 0
    %1885 = vmatpush1.bf16.msra.mxu0 0
    %1886 = vmatprep.subr.bf16.mxu0 0
    %1887 = vmatpush1.bf16.msra.mxu0 0
    %1888 = vmatprep.subr.bf16.mxu0 0
    %1889 = vmatpush1.bf16.msra.mxu0 0
    %1890 = vmatprep.subr.bf16.mxu0 0
    %1891 = vmatpush1.bf16.msra.mxu0 0
    %1892 = vmatprep.subr.bf16.mxu0 0
    %1893 = vmatpush1.bf16.msra.mxu0 0
    %1894 = vmatprep.subr.bf16.mxu0 0
    %1895 = vmatpush1.bf16.msra.mxu0 0
    %1896 = vmatprep.subr.bf16.mxu0 0
    %1897 = vmatpush1.bf16.msra.mxu0 0
    %1898 = vmatprep.subr.bf16.mxu0 0
    %1899 = vmatpush1.bf16.msra.mxu0 0
    %1900 = vmatprep.mubr.bf16.mxu0 0
    %1901 = vmatmul.mubr.bf16.gmra.mrb[0].mxu0 %v1867
    %v1902 = vpop.f32.mrb[0].mxu0
    %v1903 = vadd.f32 %v678, %v1902
    %v1904 = vpop.f32.mrb[0].mxu0
    %v1905 = vadd.f32 %v682, %v1904
    %v1906 = vpop.f32.mrb[0].mxu0
    %v1907 = vpop.f32.mrb[0].mxu0
    %1908 = vdwg.mxu0
    %1909 = vmatprep.subr.bf16.mxu0 0
    %1910 = vmatpush1.bf16.msra.mxu0 %v772
    %1911 = vmatprep.subr.bf16.mxu0 0
    %1912 = vmatpush1.bf16.msra.mxu0 %v775
    %1913 = vmatprep.subr.bf16.mxu0 0
    %1914 = vmatpush1.bf16.msra.mxu0 %v778
    %1915 = vmatprep.subr.bf16.mxu0 0
    %1916 = vmatpush1.bf16.msra.mxu0 %v781
    %1917 = vmatprep.subr.bf16.mxu0 0
    %1918 = vmatpush1.bf16.msra.mxu0 %v784
    %1919 = vmatprep.subr.bf16.mxu0 0
    %1920 = vmatpush1.bf16.msra.mxu0 %v787
    %1921 = vmatprep.subr.bf16.mxu0 0
    %1922 = vmatpush1.bf16.msra.mxu0 %v790
    %1923 = vmatprep.subr.bf16.mxu0 0
    %1924 = vmatpush1.bf16.msra.mxu0 %v793
    %1925 = vmatprep.subr.bf16.mxu0 0
    %1926 = vmatpush1.bf16.msra.mxu0 0
    %1927 = vmatprep.subr.bf16.mxu0 0
    %1928 = vmatpush1.bf16.msra.mxu0 0
    %1929 = vmatprep.subr.bf16.mxu0 0
    %1930 = vmatpush1.bf16.msra.mxu0 0
    %1931 = vmatprep.subr.bf16.mxu0 0
    %1932 = vmatpush1.bf16.msra.mxu0 0
    %1933 = vmatprep.subr.bf16.mxu0 0
    %1934 = vmatpush1.bf16.msra.mxu0 0
    %1935 = vmatprep.subr.bf16.mxu0 0
    %1936 = vmatpush1.bf16.msra.mxu0 0
    %1937 = vmatprep.subr.bf16.mxu0 0
    %1938 = vmatpush1.bf16.msra.mxu0 0
    %1939 = vmatprep.subr.bf16.mxu0 0
    %1940 = vmatpush1.bf16.msra.mxu0 0
    %1941 = vmatprep.mubr.bf16.mxu0 0
    %1942 = vmatmul.mubr.bf16.gmra.mrb[0].mxu0 %v1867
    %v1943 = vpop.f32.mrb[0].mxu0
    %v1944 = vadd.f32 %v686, %v1943
    %v1945 = vpop.f32.mrb[0].mxu0
    %v1946 = vpop.f32.mrb[0].mxu0
    %v1947 = vpop.f32.mrb[0].mxu0
    %1948 = vdwg.mxu0
    %v1950 = vrot.slane %v1903, 6
    %v1952 = vadd.f32 %v1864, %v1950
    %v1953 = vxor.u32 %v1952, 2147483648
    %v1954 = vmul.f32 %v1953, 1.442695
    %v1955 = vpow.pop %v1954
    %v1956 = vadd.f32 %v1955, 1.0
    %v1957 = vrcp.pop %v1956
    %v1958 = vmul.f32 1.0, %v1957
    %v1960 = vrot.slane %v1905, 6
    %v1962 = vadd.f32 %v1865, %v1960
    %v1963 = vxor.u32 %v1962, 2147483648
    %v1964 = vmul.f32 %v1963, 1.442695
    %v1965 = vpow.pop %v1964
    %v1966 = vadd.f32 %v1965, 1.0
    %v1967 = vrcp.pop %v1966
    %v1968 = vmul.f32 1.0, %v1967
    %v1970 = vrot.slane %v1944, 6
    %v1972 = vmul.f32 %v1958, %v1970
    %v1973 = vadd.f32 %v1866, %v1972
    %v1974 = vtanh.pop %v1973
    %v1975 = vsub.f32 1.0, %v1968
    %v1976 = vmul.f32 %v1975, %v1974
    %v1978 = vrot.slane %v1863, 6
    %v1980 = vmul.f32 %v1968, %v1978
    %v1981 = vadd.f32 %v1976, %v1980
    %v1982 = vld [vmem:[#allocation2 + $0x30] sm:$0x30]
    %v1983 = vld [vmem:[#allocation2 + $0x38] sm:$0x30]
    %v1984 = vld [vmem:[#allocation2 + $0x40] sm:$0x30]
    %v1985 = vpack.c.bf16 %v1981, %v1981
    %v1987 = vrot.slane %v1985, 1
    %1989 = vmatprep.subr.bf16.mxu0 %v771
    %1990 = vmatpush1.bf16.msra.mxu0 %v770
    %1991 = vmatprep.subr.bf16.mxu0 %v774
    %1992 = vmatpush1.bf16.msra.mxu0 %v773
    %1993 = vmatprep.subr.bf16.mxu0 %v777
    %1994 = vmatpush1.bf16.msra.mxu0 %v776
    %1995 = vmatprep.subr.bf16.mxu0 %v780
    %1996 = vmatpush1.bf16.msra.mxu0 %v779
    %1997 = vmatprep.subr.bf16.mxu0 %v783
    %1998 = vmatpush1.bf16.msra.mxu0 %v782
    %1999 = vmatprep.subr.bf16.mxu0 %v786
    %2000 = vmatpush1.bf16.msra.mxu0 %v785
    %2001 = vmatprep.subr.bf16.mxu0 %v789
    %2002 = vmatpush1.bf16.msra.mxu0 %v788
    %2003 = vmatprep.subr.bf16.mxu0 %v792
    %2004 = vmatpush1.bf16.msra.mxu0 %v791
    %2005 = vmatprep.subr.bf16.mxu0 0
    %2006 = vmatpush1.bf16.msra.mxu0 0
    %2007 = vmatprep.subr.bf16.mxu0 0
    %2008 = vmatpush1.bf16.msra.mxu0 0
    %2009 = vmatprep.subr.bf16.mxu0 0
    %2010 = vmatpush1.bf16.msra.mxu0 0
    %2011 = vmatprep.subr.bf16.mxu0 0
    %2012 = vmatpush1.bf16.msra.mxu0 0
    %2013 = vmatprep.subr.bf16.mxu0 0
    %2014 = vmatpush1.bf16.msra.mxu0 0
    %2015 = vmatprep.subr.bf16.mxu0 0
    %2016 = vmatpush1.bf16.msra.mxu0 0
    %2017 = vmatprep.subr.bf16.mxu0 0
    %2018 = vmatpush1.bf16.msra.mxu0 0
    %2019 = vmatprep.subr.bf16.mxu0 0
    %2020 = vmatpush1.bf16.msra.mxu0 0
    %2021 = vmatprep.mubr.bf16.mxu0 0
    %2022 = vmatmul.mubr.bf16.gmra.mrb[0].mxu0 %v1987
    %v2023 = vpop.f32.mrb[0].mxu0
    %v2024 = vadd.f32 %v678, %v2023
    %v2025 = vpop.f32.mrb[0].mxu0
    %v2026 = vadd.f32 %v682, %v2025
    %v2027 = vpop.f32.mrb[0].mxu0
    %v2028 = vpop.f32.mrb[0].mxu0
    %2029 = vdwg.mxu0
    %2030 = vmatprep.subr.bf16.mxu0 0
    %2031 = vmatpush1.bf16.msra.mxu0 %v772
    %2032 = vmatprep.subr.bf16.mxu0 0
    %2033 = vmatpush1.bf16.msra.mxu0 %v775
    %2034 = vmatprep.subr.bf16.mxu0 0
    %2035 = vmatpush1.bf16.msra.mxu0 %v778
    %2036 = vmatprep.subr.bf16.mxu0 0
    %2037 = vmatpush1.bf16.msra.mxu0 %v781
    %2038 = vmatprep.subr.bf16.mxu0 0
    %2039 = vmatpush1.bf16.msra.mxu0 %v784
    %2040 = vmatprep.subr.bf16.mxu0 0
    %2041 = vmatpush1.bf16.msra.mxu0 %v787
    %2042 = vmatprep.subr.bf16.mxu0 0
    %2043 = vmatpush1.bf16.msra.mxu0 %v790
    %2044 = vmatprep.subr.bf16.mxu0 0
    %2045 = vmatpush1.bf16.msra.mxu0 %v793
    %2046 = vmatprep.subr.bf16.mxu0 0
    %2047 = vmatpush1.bf16.msra.mxu0 0
    %2048 = vmatprep.subr.bf16.mxu0 0
    %2049 = vmatpush1.bf16.msra.mxu0 0
    %2050 = vmatprep.subr.bf16.mxu0 0
    %2051 = vmatpush1.bf16.msra.mxu0 0
    %2052 = vmatprep.subr.bf16.mxu0 0
    %2053 = vmatpush1.bf16.msra.mxu0 0
    %2054 = vmatprep.subr.bf16.mxu0 0
    %2055 = vmatpush1.bf16.msra.mxu0 0
    %2056 = vmatprep.subr.bf16.mxu0 0
    %2057 = vmatpush1.bf16.msra.mxu0 0
    %2058 = vmatprep.subr.bf16.mxu0 0
    %2059 = vmatpush1.bf16.msra.mxu0 0
    %2060 = vmatprep.subr.bf16.mxu0 0
    %2061 = vmatpush1.bf16.msra.mxu0 0
    %2062 = vmatprep.mubr.bf16.mxu0 0
    %2063 = vmatmul.mubr.bf16.gmra.mrb[0].mxu0 %v1987
    %v2064 = vpop.f32.mrb[0].mxu0
    %v2065 = vadd.f32 %v686, %v2064
    %v2066 = vpop.f32.mrb[0].mxu0
    %v2067 = vpop.f32.mrb[0].mxu0
    %v2068 = vpop.f32.mrb[0].mxu0
    %2069 = vdwg.mxu0
    %v2071 = vrot.slane %v2024, 4
    %v2073 = vadd.f32 %v1982, %v2071
    %v2074 = vxor.u32 %v2073, 2147483648
    %v2075 = vmul.f32 %v2074, 1.442695
    %v2076 = vpow.pop %v2075
    %v2077 = vadd.f32 %v2076, 1.0
    %v2078 = vrcp.pop %v2077
    %v2079 = vmul.f32 1.0, %v2078
    %v2081 = vrot.slane %v2026, 4
    %v2083 = vadd.f32 %v1983, %v2081
    %v2084 = vxor.u32 %v2083, 2147483648
    %v2085 = vmul.f32 %v2084, 1.442695
    %v2086 = vpow.pop %v2085
    %v2087 = vadd.f32 %v2086, 1.0
    %v2088 = vrcp.pop %v2087
    %v2089 = vmul.f32 1.0, %v2088
    %v2091 = vrot.slane %v2065, 4
    %v2093 = vmul.f32 %v2079, %v2091
    %v2094 = vadd.f32 %v1984, %v2093
    %v2095 = vtanh.pop %v2094
    %v2096 = vsub.f32 1.0, %v2089
    %v2097 = vmul.f32 %v2096, %v2095
    %v2099 = vrot.slane %v1981, 6
    %v2101 = vmul.f32 %v2089, %v2099
    %v2102 = vadd.f32 %v2097, %v2101
    %v2103 = vld [vmem:[#allocation2 + $0x30] sm:$0xc0]
    %v2104 = vld [vmem:[#allocation2 + $0x38] sm:$0xc0]
    %v2105 = vld [vmem:[#allocation2 + $0x40] sm:$0xc0]
    %v2106 = vpack.c.bf16 %v2102, %v2102
    %v2108 = vrot.slane %v2106, 2
    %2110 = vmatprep.subr.bf16.mxu0 %v771
    %2111 = vmatpush1.bf16.msra.mxu0 %v770
    %2112 = vmatprep.subr.bf16.mxu0 %v774
    %2113 = vmatpush1.bf16.msra.mxu0 %v773
    %2114 = vmatprep.subr.bf16.mxu0 %v777
    %2115 = vmatpush1.bf16.msra.mxu0 %v776
    %2116 = vmatprep.subr.bf16.mxu0 %v780
    %2117 = vmatpush1.bf16.msra.mxu0 %v779
    %2118 = vmatprep.subr.bf16.mxu0 %v783
    %2119 = vmatpush1.bf16.msra.mxu0 %v782
    %2120 = vmatprep.subr.bf16.mxu0 %v786
    %2121 = vmatpush1.bf16.msra.mxu0 %v785
    %2122 = vmatprep.subr.bf16.mxu0 %v789
    %2123 = vmatpush1.bf16.msra.mxu0 %v788
    %2124 = vmatprep.subr.bf16.mxu0 %v792
    %2125 = vmatpush1.bf16.msra.mxu0 %v791
    %2126 = vmatprep.subr.bf16.mxu0 0
    %2127 = vmatpush1.bf16.msra.mxu0 0
    %2128 = vmatprep.subr.bf16.mxu0 0
    %2129 = vmatpush1.bf16.msra.mxu0 0
    %2130 = vmatprep.subr.bf16.mxu0 0
    %2131 = vmatpush1.bf16.msra.mxu0 0
    %2132 = vmatprep.subr.bf16.mxu0 0
    %2133 = vmatpush1.bf16.msra.mxu0 0
    %2134 = vmatprep.subr.bf16.mxu0 0
    %2135 = vmatpush1.bf16.msra.mxu0 0
    %2136 = vmatprep.subr.bf16.mxu0 0
    %2137 = vmatpush1.bf16.msra.mxu0 0
    %2138 = vmatprep.subr.bf16.mxu0 0
    %2139 = vmatpush1.bf16.msra.mxu0 0
    %2140 = vmatprep.subr.bf16.mxu0 0
    %2141 = vmatpush1.bf16.msra.mxu0 0
    %2142 = vmatprep.mubr.bf16.mxu0 0
    %2143 = vmatmul.mubr.bf16.gmra.mrb[0].mxu0 %v2108
    %v2144 = vpop.f32.mrb[0].mxu0
    %v2145 = vadd.f32 %v678, %v2144
    %v2146 = vpop.f32.mrb[0].mxu0
    %v2147 = vadd.f32 %v682, %v2146
    %v2148 = vpop.f32.mrb[0].mxu0
    %v2149 = vpop.f32.mrb[0].mxu0
    %2150 = vdwg.mxu0
    %2151 = vmatprep.subr.bf16.mxu0 0
    %2152 = vmatpush1.bf16.msra.mxu0 %v772
    %2153 = vmatprep.subr.bf16.mxu0 0
    %2154 = vmatpush1.bf16.msra.mxu0 %v775
    %2155 = vmatprep.subr.bf16.mxu0 0
    %2156 = vmatpush1.bf16.msra.mxu0 %v778
    %2157 = vmatprep.subr.bf16.mxu0 0
    %2158 = vmatpush1.bf16.msra.mxu0 %v781
    %2159 = vmatprep.subr.bf16.mxu0 0
    %2160 = vmatpush1.bf16.msra.mxu0 %v784
    %2161 = vmatprep.subr.bf16.mxu0 0
    %2162 = vmatpush1.bf16.msra.mxu0 %v787
    %2163 = vmatprep.subr.bf16.mxu0 0
    %2164 = vmatpush1.bf16.msra.mxu0 %v790
    %2165 = vmatprep.subr.bf16.mxu0 0
    %2166 = vmatpush1.bf16.msra.mxu0 %v793
    %2167 = vmatprep.subr.bf16.mxu0 0
    %2168 = vmatpush1.bf16.msra.mxu0 0
    %2169 = vmatprep.subr.bf16.mxu0 0
    %2170 = vmatpush1.bf16.msra.mxu0 0
    %2171 = vmatprep.subr.bf16.mxu0 0
    %2172 = vmatpush1.bf16.msra.mxu0 0
    %2173 = vmatprep.subr.bf16.mxu0 0
    %2174 = vmatpush1.bf16.msra.mxu0 0
    %2175 = vmatprep.subr.bf16.mxu0 0
    %2176 = vmatpush1.bf16.msra.mxu0 0
    %2177 = vmatprep.subr.bf16.mxu0 0
    %2178 = vmatpush1.bf16.msra.mxu0 0
    %2179 = vmatprep.subr.bf16.mxu0 0
    %2180 = vmatpush1.bf16.msra.mxu0 0
    %2181 = vmatprep.subr.bf16.mxu0 0
    %2182 = vmatpush1.bf16.msra.mxu0 0
    %2183 = vmatprep.mubr.bf16.mxu0 0
    %2184 = vmatmul.mubr.bf16.gmra.mrb[0].mxu0 %v2108
    %v2185 = vpop.f32.mrb[0].mxu0
    %v2186 = vadd.f32 %v686, %v2185
    %v2187 = vpop.f32.mrb[0].mxu0
    %v2188 = vpop.f32.mrb[0].mxu0
    %v2189 = vpop.f32.mrb[0].mxu0
    %2190 = vdwg.mxu0
    %v2192 = vrot.slane %v2145, 2
    %v2194 = vadd.f32 %v2103, %v2192
    %v2195 = vxor.u32 %v2194, 2147483648
    %v2196 = vmul.f32 %v2195, 1.442695
    %v2197 = vpow.pop %v2196
    %v2198 = vadd.f32 %v2197, 1.0
    %v2199 = vrcp.pop %v2198
    %v2200 = vmul.f32 1.0, %v2199
    %v2202 = vrot.slane %v2147, 2
    %v2204 = vadd.f32 %v2104, %v2202
    %v2205 = vxor.u32 %v2204, 2147483648
    %v2206 = vmul.f32 %v2205, 1.442695
    %v2207 = vpow.pop %v2206
    %v2208 = vadd.f32 %v2207, 1.0
    %v2209 = vrcp.pop %v2208
    %v2210 = vmul.f32 1.0, %v2209
    %v2212 = vrot.slane %v2186, 2
    %v2214 = vmul.f32 %v2200, %v2212
    %v2215 = vadd.f32 %v2105, %v2214
    %v2216 = vtanh.pop %v2215
    %v2217 = vsub.f32 1.0, %v2210
    %v2218 = vmul.f32 %v2217, %v2216
    %v2220 = vrot.slane %v2102, 6
    %v2222 = vmul.f32 %v2210, %v2220
    %v2223 = vadd.f32 %v2218, %v2222
    %v2224 = vld [vmem:[#allocation2 + $0x48] sm:$0x3]
    %v2225 = vld [vmem:[#allocation2 + $0x50] sm:$0x3]
    %v2226 = vld [vmem:[#allocation2 + $0x58] sm:$0x3]
    %v2227 = vpack.c.bf16 %v2223, %v2223
    %v2229 = vrot.slane %v2227, 3
    %2231 = vmatprep.subr.bf16.mxu0 %v771
    %2232 = vmatpush1.bf16.msra.mxu0 %v770
    %2233 = vmatprep.subr.bf16.mxu0 %v774
    %2234 = vmatpush1.bf16.msra.mxu0 %v773
    %2235 = vmatprep.subr.bf16.mxu0 %v777
    %2236 = vmatpush1.bf16.msra.mxu0 %v776
    %2237 = vmatprep.subr.bf16.mxu0 %v780
    %2238 = vmatpush1.bf16.msra.mxu0 %v779
    %2239 = vmatprep.subr.bf16.mxu0 %v783
    %2240 = vmatpush1.bf16.msra.mxu0 %v782
    %2241 = vmatprep.subr.bf16.mxu0 %v786
    %2242 = vmatpush1.bf16.msra.mxu0 %v785
    %2243 = vmatprep.subr.bf16.mxu0 %v789
    %2244 = vmatpush1.bf16.msra.mxu0 %v788
    %2245 = vmatprep.subr.bf16.mxu0 %v792
    %2246 = vmatpush1.bf16.msra.mxu0 %v791
    %2247 = vmatprep.subr.bf16.mxu0 0
    %2248 = vmatpush1.bf16.msra.mxu0 0
    %2249 = vmatprep.subr.bf16.mxu0 0
    %2250 = vmatpush1.bf16.msra.mxu0 0
    %2251 = vmatprep.subr.bf16.mxu0 0
    %2252 = vmatpush1.bf16.msra.mxu0 0
    %2253 = vmatprep.subr.bf16.mxu0 0
    %2254 = vmatpush1.bf16.msra.mxu0 0
    %2255 = vmatprep.subr.bf16.mxu0 0
    %2256 = vmatpush1.bf16.msra.mxu0 0
    %2257 = vmatprep.subr.bf16.mxu0 0
    %2258 = vmatpush1.bf16.msra.mxu0 0
    %2259 = vmatprep.subr.bf16.mxu0 0
    %2260 = vmatpush1.bf16.msra.mxu0 0
    %2261 = vmatprep.subr.bf16.mxu0 0
    %2262 = vmatpush1.bf16.msra.mxu0 0
    %2263 = vmatprep.mubr.bf16.mxu0 0
    %2264 = vmatmul.mubr.bf16.gmra.mrb[0].mxu0 %v2229
    %v2265 = vpop.f32.mrb[0].mxu0
    %v2266 = vadd.f32 %v678, %v2265
    %v2267 = vpop.f32.mrb[0].mxu0
    %v2268 = vadd.f32 %v682, %v2267
    %v2269 = vpop.f32.mrb[0].mxu0
    %v2270 = vpop.f32.mrb[0].mxu0
    %2271 = vdwg.mxu0
    %2272 = vmatprep.subr.bf16.mxu0 0
    %2273 = vmatpush1.bf16.msra.mxu0 %v772
    %2274 = vmatprep.subr.bf16.mxu0 0
    %2275 = vmatpush1.bf16.msra.mxu0 %v775
    %2276 = vmatprep.subr.bf16.mxu0 0
    %2277 = vmatpush1.bf16.msra.mxu0 %v778
    %2278 = vmatprep.subr.bf16.mxu0 0
    %2279 = vmatpush1.bf16.msra.mxu0 %v781
    %2280 = vmatprep.subr.bf16.mxu0 0
    %2281 = vmatpush1.bf16.msra.mxu0 %v784
    %2282 = vmatprep.subr.bf16.mxu0 0
    %2283 = vmatpush1.bf16.msra.mxu0 %v787
    %2284 = vmatprep.subr.bf16.mxu0 0
    %2285 = vmatpush1.bf16.msra.mxu0 %v790
    %2286 = vmatprep.subr.bf16.mxu0 0
    %2287 = vmatpush1.bf16.msra.mxu0 %v793
    %2288 = vmatprep.subr.bf16.mxu0 0
    %2289 = vmatpush1.bf16.msra.mxu0 0
    %2290 = vmatprep.subr.bf16.mxu0 0
    %2291 = vmatpush1.bf16.msra.mxu0 0
    %2292 = vmatprep.subr.bf16.mxu0 0
    %2293 = vmatpush1.bf16.msra.mxu0 0
    %2294 = vmatprep.subr.bf16.mxu0 0
    %2295 = vmatpush1.bf16.msra.mxu0 0
    %2296 = vmatprep.subr.bf16.mxu0 0
    %2297 = vmatpush1.bf16.msra.mxu0 0
    %2298 = vmatprep.subr.bf16.mxu0 0
    %2299 = vmatpush1.bf16.msra.mxu0 0
    %2300 = vmatprep.subr.bf16.mxu0 0
    %2301 = vmatpush1.bf16.msra.mxu0 0
    %2302 = vmatprep.subr.bf16.mxu0 0
    %2303 = vmatpush1.bf16.msra.mxu0 0
    %2304 = vmatprep.mubr.bf16.mxu0 0
    %2305 = vmatmul.mubr.bf16.gmra.mrb[0].mxu0 %v2229
    %v2306 = vpop.f32.mrb[0].mxu0
    %v2307 = vadd.f32 %v686, %v2306
    %v2308 = vpop.f32.mrb[0].mxu0
    %v2309 = vpop.f32.mrb[0].mxu0
    %v2310 = vpop.f32.mrb[0].mxu0
    %2311 = vdwg.mxu0
    %v2312 = vadd.f32 %v2224, %v2266
    %v2313 = vxor.u32 %v2312, 2147483648
    %v2314 = vmul.f32 %v2313, 1.442695
    %v2315 = vpow.pop %v2314
    %v2316 = vadd.f32 %v2315, 1.0
    %v2317 = vrcp.pop %v2316
    %v2318 = vmul.f32 1.0, %v2317
    %v2319 = vadd.f32 %v2225, %v2268
    %v2320 = vxor.u32 %v2319, 2147483648
    %v2321 = vmul.f32 %v2320, 1.442695
    %v2322 = vpow.pop %v2321
    %v2323 = vadd.f32 %v2322, 1.0
    %v2324 = vrcp.pop %v2323
    %v2325 = vmul.f32 1.0, %v2324
    %v2326 = vmul.f32 %v2318, %v2307
    %v2327 = vadd.f32 %v2226, %v2326
    %v2328 = vtanh.pop %v2327
    %v2329 = vsub.f32 1.0, %v2325
    %v2330 = vmul.f32 %v2329, %v2328
    %v2332 = vrot.slane %v2223, 6
    %v2334 = vmul.f32 %v2325, %v2332
    %v2335 = vadd.f32 %v2330, %v2334
    %v2336 = vld [vmem:[#allocation2 + $0x48] sm:$0xc]
    %v2337 = vld [vmem:[#allocation2 + $0x50] sm:$0xc]
    %v2338 = vld [vmem:[#allocation2 + $0x58] sm:$0xc]
    %v2339 = vpack.c.bf16 %v2335, %v2335
    %2340 = vmatprep.subr.bf16.mxu0 %v771
    %2341 = vmatpush1.bf16.msra.mxu0 %v770
    %2342 = vmatprep.subr.bf16.mxu0 %v774
    %2343 = vmatpush1.bf16.msra.mxu0 %v773
    %2344 = vmatprep.subr.bf16.mxu0 %v777
    %2345 = vmatpush1.bf16.msra.mxu0 %v776
    %2346 = vmatprep.subr.bf16.mxu0 %v780
    %2347 = vmatpush1.bf16.msra.mxu0 %v779
    %2348 = vmatprep.subr.bf16.mxu0 %v783
    %2349 = vmatpush1.bf16.msra.mxu0 %v782
    %2350 = vmatprep.subr.bf16.mxu0 %v786
    %2351 = vmatpush1.bf16.msra.mxu0 %v785
    %2352 = vmatprep.subr.bf16.mxu0 %v789
    %2353 = vmatpush1.bf16.msra.mxu0 %v788
    %2354 = vmatprep.subr.bf16.mxu0 %v792
    %2355 = vmatpush1.bf16.msra.mxu0 %v791
    %2356 = vmatprep.subr.bf16.mxu0 0
    %2357 = vmatpush1.bf16.msra.mxu0 0
    %2358 = vmatprep.subr.bf16.mxu0 0
    %2359 = vmatpush1.bf16.msra.mxu0 0
    %2360 = vmatprep.subr.bf16.mxu0 0
    %2361 = vmatpush1.bf16.msra.mxu0 0
    %2362 = vmatprep.subr.bf16.mxu0 0
    %2363 = vmatpush1.bf16.msra.mxu0 0
    %2364 = vmatprep.subr.bf16.mxu0 0
    %2365 = vmatpush1.bf16.msra.mxu0 0
    %2366 = vmatprep.subr.bf16.mxu0 0
    %2367 = vmatpush1.bf16.msra.mxu0 0
    %2368 = vmatprep.subr.bf16.mxu0 0
    %2369 = vmatpush1.bf16.msra.mxu0 0
    %2370 = vmatprep.subr.bf16.mxu0 0
    %2371 = vmatpush1.bf16.msra.mxu0 0
    %2372 = vmatprep.mubr.bf16.mxu0 0
    %2373 = vmatmul.mubr.bf16.gmra.mrb[0].mxu0 %v2339
    %v2374 = vpop.f32.mrb[0].mxu0
    %v2375 = vadd.f32 %v678, %v2374
    %v2376 = vpop.f32.mrb[0].mxu0
    %v2377 = vadd.f32 %v682, %v2376
    %v2378 = vpop.f32.mrb[0].mxu0
    %v2379 = vpop.f32.mrb[0].mxu0
    %2380 = vdwg.mxu0
    %2381 = vmatprep.subr.bf16.mxu0 0
    %2382 = vmatpush1.bf16.msra.mxu0 %v772
    %2383 = vmatprep.subr.bf16.mxu0 0
    %2384 = vmatpush1.bf16.msra.mxu0 %v775
    %2385 = vmatprep.subr.bf16.mxu0 0
    %2386 = vmatpush1.bf16.msra.mxu0 %v778
    %2387 = vmatprep.subr.bf16.mxu0 0
    %2388 = vmatpush1.bf16.msra.mxu0 %v781
    %2389 = vmatprep.subr.bf16.mxu0 0
    %2390 = vmatpush1.bf16.msra.mxu0 %v784
    %2391 = vmatprep.subr.bf16.mxu0 0
    %2392 = vmatpush1.bf16.msra.mxu0 %v787
    %2393 = vmatprep.subr.bf16.mxu0 0
    %2394 = vmatpush1.bf16.msra.mxu0 %v790
    %2395 = vmatprep.subr.bf16.mxu0 0
    %2396 = vmatpush1.bf16.msra.mxu0 %v793
    %2397 = vmatprep.subr.bf16.mxu0 0
    %2398 = vmatpush1.bf16.msra.mxu0 0
    %2399 = vmatprep.subr.bf16.mxu0 0
    %2400 = vmatpush1.bf16.msra.mxu0 0
    %2401 = vmatprep.subr.bf16.mxu0 0
    %2402 = vmatpush1.bf16.msra.mxu0 0
    %2403 = vmatprep.subr.bf16.mxu0 0
    %2404 = vmatpush1.bf16.msra.mxu0 0
    %2405 = vmatprep.subr.bf16.mxu0 0
    %2406 = vmatpush1.bf16.msra.mxu0 0
    %2407 = vmatprep.subr.bf16.mxu0 0
    %2408 = vmatpush1.bf16.msra.mxu0 0
    %2409 = vmatprep.subr.bf16.mxu0 0
    %2410 = vmatpush1.bf16.msra.mxu0 0
    %2411 = vmatprep.subr.bf16.mxu0 0
    %2412 = vmatpush1.bf16.msra.mxu0 0
    %2413 = vmatprep.mubr.bf16.mxu0 0
    %2414 = vmatmul.mubr.bf16.gmra.mrb[0].mxu0 %v2339
    %v2415 = vpop.f32.mrb[0].mxu0
    %v2416 = vadd.f32 %v686, %v2415
    %v2417 = vpop.f32.mrb[0].mxu0
    %v2418 = vpop.f32.mrb[0].mxu0
    %v2419 = vpop.f32.mrb[0].mxu0
    %2420 = vdwg.mxu0
    %v2422 = vrot.slane %v2375, 6
    %v2424 = vadd.f32 %v2336, %v2422
    %v2425 = vxor.u32 %v2424, 2147483648
    %v2426 = vmul.f32 %v2425, 1.442695
    %v2427 = vpow.pop %v2426
    %v2428 = vadd.f32 %v2427, 1.0
    %v2429 = vrcp.pop %v2428
    %v2430 = vmul.f32 1.0, %v2429
    %v2432 = vrot.slane %v2377, 6
    %v2434 = vadd.f32 %v2337, %v2432
    %v2435 = vxor.u32 %v2434, 2147483648
    %v2436 = vmul.f32 %v2435, 1.442695
    %v2437 = vpow.pop %v2436
    %v2438 = vadd.f32 %v2437, 1.0
    %v2439 = vrcp.pop %v2438
    %v2440 = vmul.f32 1.0, %v2439
    %v2442 = vrot.slane %v2416, 6
    %v2444 = vmul.f32 %v2430, %v2442
    %v2445 = vadd.f32 %v2338, %v2444
    %v2446 = vtanh.pop %v2445
    %v2447 = vsub.f32 1.0, %v2440
    %v2448 = vmul.f32 %v2447, %v2446
    %v2450 = vrot.slane %v2335, 6
    %v2452 = vmul.f32 %v2440, %v2450
    %v2453 = vadd.f32 %v2448, %v2452
    %v2454 = vld [vmem:[#allocation2 + $0x48] sm:$0x30]
    %v2455 = vld [vmem:[#allocation2 + $0x50] sm:$0x30]
    %v2456 = vld [vmem:[#allocation2 + $0x58] sm:$0x30]
    %v2457 = vpack.c.bf16 %v2453, %v2453
    %v2459 = vrot.slane %v2457, 1
    %2461 = vmatprep.subr.bf16.mxu0 %v771
    %2462 = vmatpush1.bf16.msra.mxu0 %v770
    %2463 = vmatprep.subr.bf16.mxu0 %v774
    %2464 = vmatpush1.bf16.msra.mxu0 %v773
    %2465 = vmatprep.subr.bf16.mxu0 %v777
    %2466 = vmatpush1.bf16.msra.mxu0 %v776
    %2467 = vmatprep.subr.bf16.mxu0 %v780
    %2468 = vmatpush1.bf16.msra.mxu0 %v779
    %2469 = vmatprep.subr.bf16.mxu0 %v783
    %2470 = vmatpush1.bf16.msra.mxu0 %v782
    %2471 = vmatprep.subr.bf16.mxu0 %v786
    %2472 = vmatpush1.bf16.msra.mxu0 %v785
    %2473 = vmatprep.subr.bf16.mxu0 %v789
    %2474 = vmatpush1.bf16.msra.mxu0 %v788
    %2475 = vmatprep.subr.bf16.mxu0 %v792
    %2476 = vmatpush1.bf16.msra.mxu0 %v791
    %2477 = vmatprep.subr.bf16.mxu0 0
    %2478 = vmatpush1.bf16.msra.mxu0 0
    %2479 = vmatprep.subr.bf16.mxu0 0
    %2480 = vmatpush1.bf16.msra.mxu0 0
    %2481 = vmatprep.subr.bf16.mxu0 0
    %2482 = vmatpush1.bf16.msra.mxu0 0
    %2483 = vmatprep.subr.bf16.mxu0 0
    %2484 = vmatpush1.bf16.msra.mxu0 0
    %2485 = vmatprep.subr.bf16.mxu0 0
    %2486 = vmatpush1.bf16.msra.mxu0 0
    %2487 = vmatprep.subr.bf16.mxu0 0
    %2488 = vmatpush1.bf16.msra.mxu0 0
    %2489 = vmatprep.subr.bf16.mxu0 0
    %2490 = vmatpush1.bf16.msra.mxu0 0
    %2491 = vmatprep.subr.bf16.mxu0 0
    %2492 = vmatpush1.bf16.msra.mxu0 0
    %2493 = vmatprep.mubr.bf16.mxu0 0
    %2494 = vmatmul.mubr.bf16.gmra.mrb[0].mxu0 %v2459
    %v2495 = vpop.f32.mrb[0].mxu0
    %v2496 = vadd.f32 %v678, %v2495
    %v2497 = vpop.f32.mrb[0].mxu0
    %v2498 = vadd.f32 %v682, %v2497
    %v2499 = vpop.f32.mrb[0].mxu0
    %v2500 = vpop.f32.mrb[0].mxu0
    %2501 = vdwg.mxu0
    %2502 = vmatprep.subr.bf16.mxu0 0
    %2503 = vmatpush1.bf16.msra.mxu0 %v772
    %2504 = vmatprep.subr.bf16.mxu0 0
    %2505 = vmatpush1.bf16.msra.mxu0 %v775
    %2506 = vmatprep.subr.bf16.mxu0 0
    %2507 = vmatpush1.bf16.msra.mxu0 %v778
    %2508 = vmatprep.subr.bf16.mxu0 0
    %2509 = vmatpush1.bf16.msra.mxu0 %v781
    %2510 = vmatprep.subr.bf16.mxu0 0
    %2511 = vmatpush1.bf16.msra.mxu0 %v784
    %2512 = vmatprep.subr.bf16.mxu0 0
    %2513 = vmatpush1.bf16.msra.mxu0 %v787
    %2514 = vmatprep.subr.bf16.mxu0 0
    %2515 = vmatpush1.bf16.msra.mxu0 %v790
    %2516 = vmatprep.subr.bf16.mxu0 0
    %2517 = vmatpush1.bf16.msra.mxu0 %v793
    %2518 = vmatprep.subr.bf16.mxu0 0
    %2519 = vmatpush1.bf16.msra.mxu0 0
    %2520 = vmatprep.subr.bf16.mxu0 0
    %2521 = vmatpush1.bf16.msra.mxu0 0
    %2522 = vmatprep.subr.bf16.mxu0 0
    %2523 = vmatpush1.bf16.msra.mxu0 0
    %2524 = vmatprep.subr.bf16.mxu0 0
    %2525 = vmatpush1.bf16.msra.mxu0 0
    %2526 = vmatprep.subr.bf16.mxu0 0
    %2527 = vmatpush1.bf16.msra.mxu0 0
    %2528 = vmatprep.subr.bf16.mxu0 0
    %2529 = vmatpush1.bf16.msra.mxu0 0
    %2530 = vmatprep.subr.bf16.mxu0 0
    %2531 = vmatpush1.bf16.msra.mxu0 0
    %2532 = vmatprep.subr.bf16.mxu0 0
    %2533 = vmatpush1.bf16.msra.mxu0 0
    %2534 = vmatprep.mubr.bf16.mxu0 0
    %2535 = vmatmul.mubr.bf16.gmra.mrb[0].mxu0 %v2459
    %v2536 = vpop.f32.mrb[0].mxu0
    %v2537 = vadd.f32 %v686, %v2536
    %v2538 = vpop.f32.mrb[0].mxu0
    %v2539 = vpop.f32.mrb[0].mxu0
    %v2540 = vpop.f32.mrb[0].mxu0
    %2541 = vdwg.mxu0
    %v2543 = vrot.slane %v2496, 4
    %v2545 = vadd.f32 %v2454, %v2543
    %v2546 = vxor.u32 %v2545, 2147483648
    %v2547 = vmul.f32 %v2546, 1.442695
    %v2548 = vpow.pop %v2547
    %v2549 = vadd.f32 %v2548, 1.0
    %v2550 = vrcp.pop %v2549
    %v2551 = vmul.f32 1.0, %v2550
    %v2553 = vrot.slane %v2498, 4
    %v2555 = vadd.f32 %v2455, %v2553
    %v2556 = vxor.u32 %v2555, 2147483648
    %v2557 = vmul.f32 %v2556, 1.442695
    %v2558 = vpow.pop %v2557
    %v2559 = vadd.f32 %v2558, 1.0
    %v2560 = vrcp.pop %v2559
    %v2561 = vmul.f32 1.0, %v2560
    %v2563 = vrot.slane %v2537, 4
    %v2565 = vmul.f32 %v2551, %v2563
    %v2566 = vadd.f32 %v2456, %v2565
    %v2567 = vtanh.pop %v2566
    %v2568 = vsub.f32 1.0, %v2561
    %v2569 = vmul.f32 %v2568, %v2567
    %v2571 = vrot.slane %v2453, 6
    %v2573 = vmul.f32 %v2561, %v2571
    %v2574 = vadd.f32 %v2569, %v2573
    %v2575 = vld [vmem:[#allocation2 + $0x48] sm:$0xc0]
    %v2576 = vld [vmem:[#allocation2 + $0x50] sm:$0xc0]
    %v2577 = vld [vmem:[#allocation2 + $0x58] sm:$0xc0]
    %v2578 = vpack.c.bf16 %v2574, %v2574
    %v2580 = vrot.slane %v2578, 2
    %2582 = vmatprep.subr.bf16.mxu0 %v771
    %2583 = vmatpush1.bf16.msra.mxu0 %v770
    %2584 = vmatprep.subr.bf16.mxu0 %v774
    %2585 = vmatpush1.bf16.msra.mxu0 %v773
    %2586 = vmatprep.subr.bf16.mxu0 %v777
    %2587 = vmatpush1.bf16.msra.mxu0 %v776
    %2588 = vmatprep.subr.bf16.mxu0 %v780
    %2589 = vmatpush1.bf16.msra.mxu0 %v779
    %2590 = vmatprep.subr.bf16.mxu0 %v783
    %2591 = vmatpush1.bf16.msra.mxu0 %v782
    %2592 = vmatprep.subr.bf16.mxu0 %v786
    %2593 = vmatpush1.bf16.msra.mxu0 %v785
    %2594 = vmatprep.subr.bf16.mxu0 %v789
    %2595 = vmatpush1.bf16.msra.mxu0 %v788
    %2596 = vmatprep.subr.bf16.mxu0 %v792
    %2597 = vmatpush1.bf16.msra.mxu0 %v791
    %2598 = vmatprep.subr.bf16.mxu0 0
    %2599 = vmatpush1.bf16.msra.mxu0 0
    %2600 = vmatprep.subr.bf16.mxu0 0
    %2601 = vmatpush1.bf16.msra.mxu0 0
    %2602 = vmatprep.subr.bf16.mxu0 0
    %2603 = vmatpush1.bf16.msra.mxu0 0
    %2604 = vmatprep.subr.bf16.mxu0 0
    %2605 = vmatpush1.bf16.msra.mxu0 0
    %2606 = vmatprep.subr.bf16.mxu0 0
    %2607 = vmatpush1.bf16.msra.mxu0 0
    %2608 = vmatprep.subr.bf16.mxu0 0
    %2609 = vmatpush1.bf16.msra.mxu0 0
    %2610 = vmatprep.subr.bf16.mxu0 0
    %2611 = vmatpush1.bf16.msra.mxu0 0
    %2612 = vmatprep.subr.bf16.mxu0 0
    %2613 = vmatpush1.bf16.msra.mxu0 0
    %2614 = vmatprep.mubr.bf16.mxu0 0
    %2615 = vmatmul.mubr.bf16.gmra.mrb[0].mxu0 %v2580
    %v2616 = vpop.f32.mrb[0].mxu0
    %v2617 = vadd.f32 %v678, %v2616
    %v2618 = vpop.f32.mrb[0].mxu0
    %v2619 = vadd.f32 %v682, %v2618
    %v2620 = vpop.f32.mrb[0].mxu0
    %v2621 = vpop.f32.mrb[0].mxu0
    %2622 = vdwg.mxu0
    %2623 = vmatprep.subr.bf16.mxu0 0
    %2624 = vmatpush1.bf16.msra.mxu0 %v772
    %2625 = vmatprep.subr.bf16.mxu0 0
    %2626 = vmatpush1.bf16.msra.mxu0 %v775
    %2627 = vmatprep.subr.bf16.mxu0 0
    %2628 = vmatpush1.bf16.msra.mxu0 %v778
    %2629 = vmatprep.subr.bf16.mxu0 0
    %2630 = vmatpush1.bf16.msra.mxu0 %v781
    %2631 = vmatprep.subr.bf16.mxu0 0
    %2632 = vmatpush1.bf16.msra.mxu0 %v784
    %2633 = vmatprep.subr.bf16.mxu0 0
    %2634 = vmatpush1.bf16.msra.mxu0 %v787
    %2635 = vmatprep.subr.bf16.mxu0 0
    %2636 = vmatpush1.bf16.msra.mxu0 %v790
    %2637 = vmatprep.subr.bf16.mxu0 0
    %2638 = vmatpush1.bf16.msra.mxu0 %v793
    %2639 = vmatprep.subr.bf16.mxu0 0
    %2640 = vmatpush1.bf16.msra.mxu0 0
    %2641 = vmatprep.subr.bf16.mxu0 0
    %2642 = vmatpush1.bf16.msra.mxu0 0
    %2643 = vmatprep.subr.bf16.mxu0 0
    %2644 = vmatpush1.bf16.msra.mxu0 0
    %2645 = vmatprep.subr.bf16.mxu0 0
    %2646 = vmatpush1.bf16.msra.mxu0 0
    %2647 = vmatprep.subr.bf16.mxu0 0
    %2648 = vmatpush1.bf16.msra.mxu0 0
    %2649 = vmatprep.subr.bf16.mxu0 0
    %2650 = vmatpush1.bf16.msra.mxu0 0
    %2651 = vmatprep.subr.bf16.mxu0 0
    %2652 = vmatpush1.bf16.msra.mxu0 0
    %2653 = vmatprep.subr.bf16.mxu0 0
    %2654 = vmatpush1.bf16.msra.mxu0 0
    %2655 = vmatprep.mubr.bf16.mxu0 0
    %2656 = vmatmul.mubr.bf16.gmra.mrb[0].mxu0 %v2580
    %v2657 = vpop.f32.mrb[0].mxu0
    %v2658 = vadd.f32 %v686, %v2657
    %v2659 = vpop.f32.mrb[0].mxu0
    %v2660 = vpop.f32.mrb[0].mxu0
    %v2661 = vpop.f32.mrb[0].mxu0
    %2662 = vdwg.mxu0
    %v2664 = vrot.slane %v2617, 2
    %v2666 = vadd.f32 %v2575, %v2664
    %v2667 = vxor.u32 %v2666, 2147483648
    %v2668 = vmul.f32 %v2667, 1.442695
    %v2669 = vpow.pop %v2668
    %v2670 = vadd.f32 %v2669, 1.0
    %v2671 = vrcp.pop %v2670
    %v2672 = vmul.f32 1.0, %v2671
    %v2674 = vrot.slane %v2619, 2
    %v2676 = vadd.f32 %v2576, %v2674
    %v2677 = vxor.u32 %v2676, 2147483648
    %v2678 = vmul.f32 %v2677, 1.442695
    %v2679 = vpow.pop %v2678
    %v2680 = vadd.f32 %v2679, 1.0
    %v2681 = vrcp.pop %v2680
    %v2682 = vmul.f32 1.0, %v2681
    %v2684 = vrot.slane %v2658, 2
    %v2686 = vmul.f32 %v2672, %v2684
    %v2687 = vadd.f32 %v2577, %v2686
    %v2688 = vtanh.pop %v2687
    %v2689 = vsub.f32 1.0, %v2682
    %v2690 = vmul.f32 %v2689, %v2688
    %v2692 = vrot.slane %v2574, 6
    %v2694 = vmul.f32 %v2682, %v2692
    %v2695 = vadd.f32 %v2690, %v2694
    %v2696 = vpack.c.bf16 %v2695, %v2695
    %v2697 = vld [vmem:[%s9] sm:$0xf]
    %v2698 = vld [vmem:[%s9 + $0x4] sm:$0xf]
    %v2699 = vld [vmem:[%s9 + $0x8] sm:$0xf]
    %v2700 = vld [vmem:[%s9 + $0xc] sm:$0xf]
    %v2701 = vld [vmem:[%s9 + $0x10] sm:$0xf]
    %v2702 = vld [vmem:[%s9 + $0x14] sm:$0xf]
    %v2703 = vld [vmem:[%s9 + $0x18] sm:$0xf]
    %v2704 = vld [vmem:[%s9 + $0x1c] sm:$0xf]
    %v2705 = vld [vmem:[%s9 + $0x20] sm:$0xf]
    %v2706 = vld [vmem:[%s9 + $0x24] sm:$0xf]
    %v2707 = vld [vmem:[%s9 + $0x28] sm:$0xf]
    %v2708 = vld [vmem:[%s9 + $0x2c] sm:$0xf]
    %v2709 = vld [vmem:[%s9 + $0x30] sm:$0xf]
    %v2710 = vld [vmem:[%s9 + $0x34] sm:$0xf]
    %v2711 = vld [vmem:[%s9 + $0x38] sm:$0xf]
    %v2712 = vld [vmem:[%s9 + $0x3c] sm:$0xf]
    %v2713 = vld [vmem:[%s10] sm:$0x1]
    %v2715 = vlaneseq
    %v2716 = vshrl.u32 %v2715, 7
    %v2717 = vsub.s32 0, %v2716
    %v2718 = vrot.slane %v2713, %v2717
    %v2721 = vrot.slane %v2696, 3
    %v2739 = vunpack.c.l.b16 %v2697
    %v2740 = vunpack.c.l.b16 %v2698
    %v2741 = vunpack.c.l.b16 %v2699
    %v2742 = vunpack.c.l.b16 %v2700
    %v2743 = vunpack.c.l.b16 %v2701
    %v2744 = vunpack.c.l.b16 %v2702
    %v2745 = vunpack.c.l.b16 %v2703
    %v2746 = vunpack.c.l.b16 %v2704
    %v2747 = vunpack.c.l.b16 %v2705
    %v2748 = vunpack.c.l.b16 %v2706
    %v2749 = vunpack.c.l.b16 %v2707
    %v2750 = vunpack.c.l.b16 %v2708
    %v2751 = vunpack.c.l.b16 %v2709
    %v2752 = vunpack.c.l.b16 %v2710
    %v2753 = vunpack.c.l.b16 %v2711
    %v2754 = vunpack.c.l.b16 %v2712
    %v2755 = vpack.c.b16 %v2740, %v2739
    %v2756 = vpack.c.b16 %v2742, %v2741
    %v2757 = vpack.c.b16 %v2744, %v2743
    %v2758 = vpack.c.b16 %v2746, %v2745
    %v2759 = vpack.c.b16 %v2748, %v2747
    %v2760 = vpack.c.b16 %v2750, %v2749
    %v2761 = vpack.c.b16 %v2752, %v2751
    %v2762 = vpack.c.b16 %v2754, %v2753
    %2771 = vmatprep.subr.bf16.mxu0 0
    %2772 = vmatpush1.bf16.msra.mxu0 %v2755
    %2773 = vmatprep.subr.bf16.mxu0 0
    %2774 = vmatpush1.bf16.msra.mxu0 %v2756
    %2775 = vmatprep.subr.bf16.mxu0 0
    %2776 = vmatpush1.bf16.msra.mxu0 %v2757
    %2777 = vmatprep.subr.bf16.mxu0 0
    %2778 = vmatpush1.bf16.msra.mxu0 %v2758
    %2779 = vmatprep.subr.bf16.mxu0 0
    %2780 = vmatpush1.bf16.msra.mxu0 %v2759
    %2781 = vmatprep.subr.bf16.mxu0 0
    %2782 = vmatpush1.bf16.msra.mxu0 %v2760
    %2783 = vmatprep.subr.bf16.mxu0 0
    %2784 = vmatpush1.bf16.msra.mxu0 %v2761
    %2785 = vmatprep.subr.bf16.mxu0 0
    %2786 = vmatpush1.bf16.msra.mxu0 %v2762
    %2787 = vmatprep.subr.bf16.mxu0 0
    %2788 = vmatpush1.bf16.msra.mxu0 0
    %2789 = vmatprep.subr.bf16.mxu0 0
    %2790 = vmatpush1.bf16.msra.mxu0 0
    %2791 = vmatprep.subr.bf16.mxu0 0
    %2792 = vmatpush1.bf16.msra.mxu0 0
    %2793 = vmatprep.subr.bf16.mxu0 0
    %2794 = vmatpush1.bf16.msra.mxu0 0
    %2795 = vmatprep.subr.bf16.mxu0 0
    %2796 = vmatpush1.bf16.msra.mxu0 0
    %2797 = vmatprep.subr.bf16.mxu0 0
    %2798 = vmatpush1.bf16.msra.mxu0 0
    %2799 = vmatprep.subr.bf16.mxu0 0
    %2800 = vmatpush1.bf16.msra.mxu0 0
    %2801 = vmatprep.subr.bf16.mxu0 0
    %2802 = vmatpush1.bf16.msra.mxu0 0
    %2803 = vmatprep.mubr.bf16.mxu0 0
    %2804 = vmatmul.mubr.bf16.gmra.mrb[0].mxu0 %v2721
    %v2805 = vpop.f32.mrb[0].mxu0
    %v2806 = vadd.f32 %v2718, %v2805
    %v2807 = vpop.f32.mrb[0].mxu0
    %v2808 = vpop.f32.mrb[0].mxu0
    %v2809 = vpop.f32.mrb[0].mxu0
    %2810 = vdwg.mxu0
    %2811 = vst [vmem:[#allocation15] sm:$0x3] %v2806
    // Predicated region
    $region74: #{tpu_custom_call.1} parent=1 // pred_check
      _
    $region75: #{tpu_custom_call.1} parent=1 // pred_check_branch
      %2813 = sbr.rel (0) target = $region77
    $region76: #{tpu_custom_call.1} parent=1 // pred_region
      %s2815 = ssub.s32 32, 32
      %2816 = vsyncadd [#allocation5], %s2815
      %s2818 = sshll.u32 [#allocation15], 4
      %s2819 = int_to_ptr.vmem [resolvable:$true] %s2818
      %2821 = dma.vmem_to_hbm [thread:$0]  %s2819, 32, %s11, [#allocation5]
    $region77: #{tpu_custom_call.1} parent=1 // pred_fallthru
      _
    // Predicated region
    $region78: #{tpu_custom_call.1} parent=1 // pred_check
      _
    $region79: #{tpu_custom_call.1} parent=1 // pred_check_branch
      %2823 = sbr.rel (0) target = $region81
    $region80: #{tpu_custom_call.1} parent=1 // pred_region
      %2824 = dma.done [#allocation5], 32
    $region81: #{tpu_custom_call.1} parent=1 // pred_fallthru
      _
    %2825 = vsyncpa [#allocation4], 1
    %2826 = vsyncpa [#allocation7], 1
    %2827 = vsyncpa [#allocation10], 1
    %2828 = vsyncpa [#allocation13], 1
    %2829 = vsyncpa [#allocation5], 1

</llo_original>
